<compile_context>
chip_gen: v7x
topology: tpu7x:2x2x1
jax: 0.10.0
libtpu: 0.0.40
codegen_flags: <defaults>
</compile_context>

<pallas_src>
import functools

import jax
import jax.numpy as jnp
from jax.experimental import pallas as pl
from jax.experimental.pallas import tpu as pltpu

_LN_EPS = 1e-5
_INV_SQRT2 = 0.7071067811865476


def _round_up(a, b):
    return (a + b - 1) // b * b


def _pick_batch_block(batch, max_block, min_steps=2):
    """Largest divisor of `batch` <= max_block that still leaves >= min_steps grid steps."""
    best = 1
    for d in range(1, batch + 1):
        if batch % d == 0 and d <= max_block and batch // d >= min(min_steps, batch):
            best = d
    return best


def _layernorm_f32(x, gamma, beta, eps):
    # x: (rows, D) f32; gamma/beta: (1, D) f32
    mu = jnp.mean(x, axis=-1, keepdims=True)
    xc = x - mu
    var = jnp.mean(xc * xc, axis=-1, keepdims=True)
    return xc * jax.lax.rsqrt(var + eps) * gamma + beta


# --------------------------------------------------------------------------
# Fused kernel: LN1 + MHA + residual + LN2 + MLP + residual  (one batch block)
# --------------------------------------------------------------------------
def _transformer_block_kernel(x_ref, g1_ref, bt1_ref, wqkv_ref, wp_ref, bp_ref,
                              g2_ref, bt2_ref, w1_ref, b1_ref, w2_ref, b2_ref,
                              o_ref, *, num_heads, head_dim, head_pad, seq, bblk,
                              eps):
    D = x_ref.shape[-1]
    M = bblk * seq
    HP = num_heads * head_pad
    cdt = wqkv_ref.dtype  # MXU input dtype (bf16): f32 accumulation via preferred_element_type

    # ---- LayerNorm1 (f32) ----
    xf = x_ref[...].reshape(M, D).astype(jnp.float32)
    xn = _layernorm_f32(xf, g1_ref[...].astype(jnp.float32),
                        bt1_ref[...].astype(jnp.float32), eps).astype(cdt)

    # ---- fused, head-padded QKV projection: one (M,D) @ (D, 3*H*P) matmul ----
    qkv = jnp.dot(xn, wqkv_ref[...], preferred_element_type=jnp.float32)

    # ---- per-(batch-row, head) attention; out-proj folded into the head loop ----
    wp_all = wp_ref[...]                           # (H*P, D) in compute dtype
    scale = 1.0 / float(head_dim) ** 0.5
    y_parts = []
    for b in range(bblk):                          # small static loop
        r0 = b * seq
        yb = jnp.zeros((seq, D), jnp.float32)
        for h in range(num_heads):                 # small static loop (4 heads)
            c = h * head_pad                       # 128-lane aligned offsets
            qh = qkv[r0:r0 + seq, c:c + head_pad].astype(cdt)
            kh = qkv[r0:r0 + seq, HP + c:HP + c + head_pad].astype(cdt)
            vh = qkv[r0:r0 + seq, 2 * HP + c:2 * HP + c + head_pad].astype(cdt)
            # scores = q @ k.T / sqrt(head_dim)  (zero-padded lanes contribute 0)
            s = jax.lax.dot_general(qh, kh, (((1,), (1,)), ((), ())),
                                    preferred_element_type=jnp.float32) * scale
            s = s - jnp.max(s, axis=-1, keepdims=True)
            p = jnp.exp(s)
            denom = jnp.sum(p, axis=-1, keepdims=True)
            p = p * pl.reciprocal(denom, approx=True)   # divide on the EUP slot
            oh = jax.lax.dot_general(p.astype(cdt), vh, (((1,), (0,)), ((), ())),
                                     preferred_element_type=jnp.float32)  # (S, P)
            # accumulate the output projection per head (128-aligned sublane slice)
            yb = yb + jnp.dot(oh.astype(cdt), wp_all[c:c + head_pad, :],
                              preferred_element_type=jnp.float32)
        y_parts.append(yb)
    y = y_parts[0] if bblk == 1 else jnp.concatenate(y_parts, axis=0)
    y = y + bp_ref[...].astype(jnp.float32)
    # dropout(p=0.0) is identity  # TODO(synk): pltpu.prng_* masking for p>0 training

    xr = xf + y                                    # residual 1 (f32)

    # ---- LayerNorm2 + MLP (fc1 -> exact erf GELU -> fc2) + residual ----
    xn2 = _layernorm_f32(xr, g2_ref[...].astype(jnp.float32),
                         bt2_ref[...].astype(jnp.float32), eps).astype(cdt)
    hmid = jnp.dot(xn2, w1_ref[...], preferred_element_type=jnp.float32)
    hmid = hmid + b1_ref[...].astype(jnp.float32)
    hmid = 0.5 * hmid * (1.0 + jax.lax.erf(hmid * _INV_SQRT2))  # exact GELU (torch default)
    y2 = jnp.dot(hmid.astype(cdt), w2_ref[...], preferred_element_type=jnp.float32)
    y2 = y2 + b2_ref[...].astype(jnp.float32)

    o_ref[...] = (xr + y2).reshape(bblk, seq, D).astype(o_ref.dtype)


# --------------------------------------------------------------------------
# Wrapper
# --------------------------------------------------------------------------
def transformer_block_forward(x, params, *, num_heads,
                              compute_dtype=jnp.bfloat16,
                              max_batch_block=8,
                              vmem_limit_bytes=48 * 1024 * 1024):
    """x: (B, S, D). Returns (B, S, D) — the TransformerBlock forward pass."""
    B, S, D = x.shape
    assert D % num_heads == 0, "embed_dim must be divisible by num_heads"
    hd = D // num_heads
    P = _round_up(hd, 128)          # per-head column padding -> lane-aligned slices
    HP = num_heads * P
    Dh = params["w1"].shape[1]
    cdt = jnp.dtype(compute_dtype)
    f32 = jnp.float32

    wq, wk, wv = params["wq"], params["wk"], params["wv"]
    wp, bp = params["wp"], params["bp"]
    g1, bt1 = params["gamma1"], params["beta1"]
    g2, bt2 = params["gamma2"], params["beta2"]
    w1, b1 = params["w1"], params["b1"]
    w2, b2 = params["w2"], params["b2"]

    # Fuse Q/K/V and zero-pad every head from hd -> P output columns.
    def _pad_head_cols(w):
        w3 = w.reshape(D, num_heads, hd)
        out = jnp.zeros((D, num_heads, P), w.dtype).at[:, :, :hd].set(w3)
        return out.reshape(D, HP)

    wqkv = jnp.concatenate(
        [_pad_head_cols(wq), _pad_head_cols(wk), _pad_head_cols(wv)], axis=1
    ).astype(cdt)                                             # (D, 3*H*P)

    wp3 = wp.reshape(num_heads, hd, D)
    wp_pad = jnp.zeros((num_heads, P, D), wp.dtype).at[:, :hd, :].set(wp3)
    wp_pad = wp_pad.reshape(HP, D).astype(cdt)                # (H*P, D)

    w1c, w2c = w1.astype(cdt), w2.astype(cdt)

    g1_2d, bt1_2d = g1.reshape(1, D).astype(f32), bt1.reshape(1, D).astype(f32)
    g2_2d, bt2_2d = g2.reshape(1, D).astype(f32), bt2.reshape(1, D).astype(f32)
    bp_2d = bp.reshape(1, D).astype(f32)
    b1_2d = b1.reshape(1, Dh).astype(f32)
    b2_2d = b2.reshape(1, D).astype(f32)

    # >= 2 grid steps (feed both v7x TCs) while streaming several batch rows of
    # LHS per resident-weight load when B is large.
    bblk = _pick_batch_block(B, max_batch_block)
    grid = (B // bblk,)

    itemsize_w = jnp.dtype(cdt).itemsize
    itemsize_x = jnp.dtype(x.dtype).itemsize
    M_tot = B * S
    cost = pl.CostEstimate(
        flops=int(2 * M_tot * D * (3 * HP) + 4 * B * num_heads * S * S * P
                  + 2 * M_tot * HP * D + 4 * M_tot * D * Dh),
        transcendentals=int(B * num_heads * S * S + M_tot * Dh + 2 * M_tot),
        bytes_accessed=int(2 * M_tot * D * itemsize_x
                           + (D * 3 * HP + HP * D + 2 * D * Dh) * itemsize_w
                           + (4 * D + Dh) * 4),
    )

    lam_w = lambda i: (0, 0)
    lam_x = lambda i: (i, 0, 0)

    # NOTE(v7x, production sizes): resident weights could be single-buffered via
    # pipeline_mode=pl.Buffered(1) (or gridded over Dh) to halve their VMEM
    # footprint; at D=192 they are tiny so it is left at the default here.
    out = pl.pallas_call(
        functools.partial(_transformer_block_kernel, num_heads=num_heads,
                          head_dim=hd, head_pad=P, seq=S, bblk=bblk, eps=_LN_EPS),
        out_shape=jax.ShapeDtypeStruct((B, S, D), x.dtype),
        grid_spec=pltpu.PrefetchScalarGridSpec(
            num_scalar_prefetch=0,
            grid=grid,
            in_specs=[
                pl.BlockSpec((bblk, S, D), lam_x),   # x (batch block)
                pl.BlockSpec((1, D), lam_w),         # LN1 gamma
                pl.BlockSpec((1, D), lam_w),         # LN1 beta
                pl.BlockSpec((D, 3 * HP), lam_w),    # fused padded Wqkv (resident)
                pl.BlockSpec((HP, D), lam_w),        # padded Wproj (resident)
                pl.BlockSpec((1, D), lam_w),         # bproj
                pl.BlockSpec((1, D), lam_w),         # LN2 gamma
                pl.BlockSpec((1, D), lam_w),         # LN2 beta
                pl.BlockSpec((D, Dh), lam_w),        # fc1 weight (resident)
                pl.BlockSpec((1, Dh), lam_w),        # fc1 bias
                pl.BlockSpec((Dh, D), lam_w),        # fc2 weight (resident)
                pl.BlockSpec((1, D), lam_w),         # fc2 bias
            ],
            out_specs=pl.BlockSpec((bblk, S, D), lam_x),
        ),
        compiler_params=pltpu.CompilerParams(
            dimension_semantics=("parallel",),
            vmem_limit_bytes=vmem_limit_bytes,   # above default scoped limit, v7x-safe
        ),
        cost_estimate=cost,
    )(x, g1_2d, bt1_2d, wqkv, wp_pad, bp_2d, g2_2d, bt2_2d, w1c, b1_2d, w2c, b2_2d)
    return out


# --------------------------------------------------------------------------
# Parameter init (mimics torch defaults) and pure-JAX reference
# --------------------------------------------------------------------------
def _init_params(key, D, Dh, dtype=jnp.float32):
    ks = jax.random.split(key, 12)

    def lin_w(k, fan_in, fan_out):
        bound = 1.0 / fan_in ** 0.5
        return jax.random.uniform(k, (fan_in, fan_out), dtype, -bound, bound)

    def lin_b(k, fan_in, fan_out):
        bound = 1.0 / fan_in ** 0.5
        return jax.random.uniform(k, (fan_out,), dtype, -bound, bound)

    params = dict(
        wq=lin_w(ks[0], D, D), wk=lin_w(ks[1], D, D), wv=lin_w(ks[2], D, D),
        wp=lin_w(ks[3], D, D), bp=lin_b(ks[4], D, D),
        w1=lin_w(ks[5], D, Dh), b1=lin_b(ks[6], D, Dh),
        w2=lin_w(ks[7], Dh, D), b2=lin_b(ks[8], Dh, D),
        # torch LayerNorm init is gamma=1, beta=0; perturb to exercise the affine path
        gamma1=1.0 + 0.1 * jax.random.normal(ks[9], (D,), dtype),
        beta1=0.05 * jax.random.normal(ks[10], (D,), dtype),
        gamma2=1.0 + 0.1 * jax.random.normal(ks[11], (D,), dtype),
        beta2=0.05 * jax.random.normal(jax.random.fold_in(ks[11], 1), (D,), dtype),
    )
    return params


def transformer_block_reference(x, p, num_heads):
    HI = jax.lax.Precision.HIGHEST

    def ln(v, g, b):
        mu = v.mean(-1, keepdims=True)
        var = ((v - mu) ** 2).mean(-1, keepdims=True)
        return (v - mu) / jnp.sqrt(var + _LN_EPS) * g + b

    B, S, D = x.shape
    hd = D // num_heads
    xn = ln(x, p["gamma1"], p["beta1"])
    q = jnp.einsum("bsd,de->bse", xn, p["wq"], precision=HI)
    k = jnp.einsum("bsd,de->bse", xn, p["wk"], precision=HI)
    v = jnp.einsum("bsd,de->bse", xn, p["wv"], precision=HI)
    q = q.reshape(B, S, num_heads, hd).transpose(0, 2, 1, 3)
    k = k.reshape(B, S, num_heads, hd).transpose(0, 2, 1, 3)
    v = v.reshape(B, S, num_heads, hd).transpose(0, 2, 1, 3)
    attn = jnp.einsum("bhqd,bhkd->bhqk", q, k, precision=HI) / hd ** 0.5
    attn = jax.nn.softmax(attn, axis=-1)
    o = jnp.einsum("bhqk,bhkd->bhqd", attn, v, precision=HI)
    o = o.transpose(0, 2, 1, 3).reshape(B, S, D)
    o = jnp.einsum("bsd,de->bse", o, p["wp"], precision=HI) + p["bp"]
    x = x + o
    xn2 = ln(x, p["gamma2"], p["beta2"])
    h = jnp.einsum("bsd,dh->bsh", xn2, p["w1"], precision=HI) + p["b1"]
    h = 0.5 * h * (1.0 + jax.lax.erf(h * _INV_SQRT2))
    y = jnp.einsum("bsh,hd->bsd", h, p["w2"], precision=HI) + p["b2"]
    return x + y


if __name__ == "__main__":
    # Small ViT-ish shapes consistent with the module constants:
    # embed_dim=192, num_heads=4, mlp_dim=4*192=768; small batch/seq for the demo.
    B, S, D, H = 2, 16, 192, 4
    Dh = 4 * D

    key = jax.random.PRNGKey(0)
    kx, kp = jax.random.split(key)
    x = jax.random.normal(kx, (B, S, D), jnp.float32)
    params = _init_params(kp, D, Dh)

    fwd = jax.jit(functools.partial(transformer_block_forward, num_heads=H))
    out = fwd(x, params)
    jax.block_until_ready(out)

    ref = transformer_block_reference(x, params, H)
    assert out.shape == (B, S, D)
    max_err = float(jnp.max(jnp.abs(out - ref)))
    # Kernel feeds the MXU bf16 (f32 accumulation); compare against the
    # HIGHEST-precision f32 reference with a bf16-appropriate tolerance.
    assert jnp.allclose(out, ref, atol=2e-2, rtol=2e-2), f"max abs err {max_err}"

    print("KERNEL_OK")
</pallas_src>

<mosaic_0001>
module attributes {stable_mosaic.version = 11 : i64} {
  func.func @_transformer_block_kernel(%arg0: i32, %arg1: memref<1x16x192xf32, #tpu.memory_space<vmem>>, %arg2: memref<1x192xf32, #tpu.memory_space<vmem>>, %arg3: memref<1x192xf32, #tpu.memory_space<vmem>>, %arg4: memref<192x1536xbf16, #tpu.memory_space<vmem>>, %arg5: memref<512x192xbf16, #tpu.memory_space<vmem>>, %arg6: memref<1x192xf32, #tpu.memory_space<vmem>>, %arg7: memref<1x192xf32, #tpu.memory_space<vmem>>, %arg8: memref<1x192xf32, #tpu.memory_space<vmem>>, %arg9: memref<192x768xbf16, #tpu.memory_space<vmem>>, %arg10: memref<1x768xf32, #tpu.memory_space<vmem>>, %arg11: memref<768x192xbf16, #tpu.memory_space<vmem>>, %arg12: memref<1x192xf32, #tpu.memory_space<vmem>>, %arg13: memref<1x16x192xf32, #tpu.memory_space<vmem>>) attributes {dimension_semantics = [#tpu.dimension_semantics<parallel>], iteration_bounds = array<i64: 2>, scalar_prefetch = 0 : i64, scratch_operands = 0 : i64, tpu.core_type = #tpu.core_type<tc>, window_params = [{transform_indices = @transform_0, window_bounds = array<i64: 1, 16, 192>}, {pipeline_mode = #tpu.pipeline_mode<synchronous>, transform_indices = @transform_1, window_bounds = array<i64: 1, 192>}, {pipeline_mode = #tpu.pipeline_mode<synchronous>, transform_indices = @transform_2, window_bounds = array<i64: 1, 192>}, {pipeline_mode = #tpu.pipeline_mode<synchronous>, transform_indices = @transform_3, window_bounds = array<i64: 192, 1536>}, {pipeline_mode = #tpu.pipeline_mode<synchronous>, transform_indices = @transform_4, window_bounds = array<i64: 512, 192>}, {pipeline_mode = #tpu.pipeline_mode<synchronous>, transform_indices = @transform_5, window_bounds = array<i64: 1, 192>}, {pipeline_mode = #tpu.pipeline_mode<synchronous>, transform_indices = @transform_6, window_bounds = array<i64: 1, 192>}, {pipeline_mode = #tpu.pipeline_mode<synchronous>, transform_indices = @transform_7, window_bounds = array<i64: 1, 192>}, {pipeline_mode = #tpu.pipeline_mode<synchronous>, transform_indices = @transform_8, window_bounds = array<i64: 192, 768>}, {pipeline_mode = #tpu.pipeline_mode<synchronous>, transform_indices = @transform_9, window_bounds = array<i64: 1, 768>}, {pipeline_mode = #tpu.pipeline_mode<synchronous>, transform_indices = @transform_10, window_bounds = array<i64: 768, 192>}, {pipeline_mode = #tpu.pipeline_mode<synchronous>, transform_indices = @transform_11, window_bounds = array<i64: 1, 192>}, {transform_indices = @transform_12, window_bounds = array<i64: 1, 16, 192>}]} {
    %c0 = arith.constant 0 : index
    %c0_0 = arith.constant 0 : index
    %c0_1 = arith.constant 0 : index
    %0 = vector.load %arg1[%c0, %c0_0, %c0_1] : memref<1x16x192xf32, #tpu.memory_space<vmem>>, vector<1x16x192xf32>
    %1 = vector.shape_cast %0 : vector<1x16x192xf32> to vector<16x192xf32>
    %c0_2 = arith.constant 0 : index
    %c0_3 = arith.constant 0 : index
    %2 = vector.load %arg2[%c0_2, %c0_3] : memref<1x192xf32, #tpu.memory_space<vmem>>, vector<1x192xf32>
    %c0_4 = arith.constant 0 : index
    %c0_5 = arith.constant 0 : index
    %3 = vector.load %arg3[%c0_4, %c0_5] : memref<1x192xf32, #tpu.memory_space<vmem>>, vector<1x192xf32>
    %cst = arith.constant dense<0.000000e+00> : vector<16xf32>
    %4 = vector.multi_reduction <add>, %1, %cst [1] : vector<16x192xf32> to vector<16xf32>
    %5 = vector.shape_cast %4 : vector<16xf32> to vector<16x1xf32>
    %cst_6 = arith.constant 1.920000e+02 : f32
    %6 = vector.broadcast %cst_6 : f32 to vector<16x1xf32>
    %7 = arith.divf %5, %6 : vector<16x1xf32>
    %8 = vector.broadcast %7 : vector<16x1xf32> to vector<16x192xf32>
    %9 = arith.subf %1, %8 : vector<16x192xf32>
    %10 = arith.mulf %9, %9 : vector<16x192xf32>
    %cst_7 = arith.constant dense<0.000000e+00> : vector<16xf32>
    %11 = vector.multi_reduction <add>, %10, %cst_7 [1] : vector<16x192xf32> to vector<16xf32>
    %12 = vector.shape_cast %11 : vector<16xf32> to vector<16x1xf32>
    %cst_8 = arith.constant 1.920000e+02 : f32
    %13 = vector.broadcast %cst_8 : f32 to vector<16x1xf32>
    %14 = arith.divf %12, %13 : vector<16x1xf32>
    %cst_9 = arith.constant 9.99999974E-6 : f32
    %15 = vector.broadcast %cst_9 : f32 to vector<16x1xf32>
    %16 = arith.addf %14, %15 : vector<16x1xf32>
    %17 = math.rsqrt %16 : vector<16x1xf32>
    %18 = vector.broadcast %17 : vector<16x1xf32> to vector<16x192xf32>
    %19 = arith.mulf %9, %18 : vector<16x192xf32>
    %20 = vector.broadcast %2 : vector<1x192xf32> to vector<16x192xf32>
    %21 = arith.mulf %19, %20 : vector<16x192xf32>
    %22 = vector.broadcast %3 : vector<1x192xf32> to vector<16x192xf32>
    %23 = arith.addf %21, %22 : vector<16x192xf32>
    %24 = arith.truncf %23 : vector<16x192xf32> to vector<16x192xbf16>
    %c0_10 = arith.constant 0 : index
    %c0_11 = arith.constant 0 : index
    %25 = vector.load %arg4[%c0_10, %c0_11] : memref<192x1536xbf16, #tpu.memory_space<vmem>>, vector<192x1536xbf16>
    %cst_12 = arith.constant dense<0.000000e+00> : vector<16x1536xf32>
    %26 = tpu.matmul %24, %25, %cst_12 {dimension_numbers = #tpu.dot_dimension_numbers<[1], [0], [0], [1], [0, 0, 1, 1], [], []>} : vector<16x192xbf16>, vector<192x1536xbf16>, vector<16x1536xf32> -> vector<16x1536xf32>
    %c0_13 = arith.constant 0 : index
    %c0_14 = arith.constant 0 : index
    %27 = vector.load %arg5[%c0_13, %c0_14] : memref<512x192xbf16, #tpu.memory_space<vmem>>, vector<512x192xbf16>
    %cst_15 = arith.constant 0.000000e+00 : f32
    %28 = vector.broadcast %cst_15 : f32 to vector<16x192xf32>
    %29 = vector.extract_strided_slice %26 {offsets = [0, 0], sizes = [16, 128], strides = [1, 1]} : vector<16x1536xf32> to vector<16x128xf32>
    %30 = arith.truncf %29 : vector<16x128xf32> to vector<16x128xbf16>
    %31 = vector.extract_strided_slice %26 {offsets = [0, 512], sizes = [16, 128], strides = [1, 1]} : vector<16x1536xf32> to vector<16x128xf32>
    %32 = arith.truncf %31 : vector<16x128xf32> to vector<16x128xbf16>
    %33 = vector.extract_strided_slice %26 {offsets = [0, 1024], sizes = [16, 128], strides = [1, 1]} : vector<16x1536xf32> to vector<16x128xf32>
    %34 = arith.truncf %33 : vector<16x128xf32> to vector<16x128xbf16>
    %cst_16 = arith.constant dense<0.000000e+00> : vector<16x16xf32>
    %35 = tpu.matmul %30, %32, %cst_16 {dimension_numbers = #tpu.dot_dimension_numbers<[1], [1], [0], [0], [0, 0, 1, 0], [], []>} : vector<16x128xbf16>, vector<16x128xbf16>, vector<16x16xf32> -> vector<16x16xf32>
    %cst_17 = arith.constant 0.144337565 : f32
    %36 = vector.broadcast %cst_17 : f32 to vector<16x16xf32>
    %37 = arith.mulf %35, %36 : vector<16x16xf32>
    %cst_18 = arith.constant dense<0xFF800000> : vector<16xf32>
    %38 = vector.multi_reduction <maximumf>, %37, %cst_18 [1] : vector<16x16xf32> to vector<16xf32>
    %39 = vector.shape_cast %38 : vector<16xf32> to vector<16x1xf32>
    %40 = vector.broadcast %39 : vector<16x1xf32> to vector<16x16xf32>
    %41 = arith.subf %37, %40 : vector<16x16xf32>
    %42 = math.exp %41 : vector<16x16xf32>
    %cst_19 = arith.constant dense<0.000000e+00> : vector<16xf32>
    %43 = vector.multi_reduction <add>, %42, %cst_19 [1] : vector<16x16xf32> to vector<16xf32>
    %44 = vector.shape_cast %43 : vector<16xf32> to vector<16x1xf32>
    %45 = tpu.reciprocal %44 {approx = true} : vector<16x1xf32> -> vector<16x1xf32>
    %46 = vector.broadcast %45 : vector<16x1xf32> to vector<16x16xf32>
    %47 = arith.mulf %42, %46 : vector<16x16xf32>
    %48 = arith.truncf %47 : vector<16x16xf32> to vector<16x16xbf16>
    %cst_20 = arith.constant dense<0.000000e+00> : vector<16x128xf32>
    %49 = tpu.matmul %48, %34, %cst_20 {dimension_numbers = #tpu.dot_dimension_numbers<[1], [0], [0], [1], [0, 0, 1, 1], [], []>} : vector<16x16xbf16>, vector<16x128xbf16>, vector<16x128xf32> -> vector<16x128xf32>
    %50 = arith.truncf %49 : vector<16x128xf32> to vector<16x128xbf16>
    %51 = vector.extract_strided_slice %27 {offsets = [0, 0], sizes = [128, 192], strides = [1, 1]} : vector<512x192xbf16> to vector<128x192xbf16>
    %cst_21 = arith.constant dense<0.000000e+00> : vector<16x192xf32>
    %52 = tpu.matmul %50, %51, %cst_21 {dimension_numbers = #tpu.dot_dimension_numbers<[1], [0], [0], [1], [0, 0, 1, 1], [], []>} : vector<16x128xbf16>, vector<128x192xbf16>, vector<16x192xf32> -> vector<16x192xf32>
    %53 = arith.addf %28, %52 : vector<16x192xf32>
    %54 = vector.extract_strided_slice %26 {offsets = [0, 128], sizes = [16, 128], strides = [1, 1]} : vector<16x1536xf32> to vector<16x128xf32>
    %55 = arith.truncf %54 : vector<16x128xf32> to vector<16x128xbf16>
    %56 = vector.extract_strided_slice %26 {offsets = [0, 640], sizes = [16, 128], strides = [1, 1]} : vector<16x1536xf32> to vector<16x128xf32>
    %57 = arith.truncf %56 : vector<16x128xf32> to vector<16x128xbf16>
    %58 = vector.extract_strided_slice %26 {offsets = [0, 1152], sizes = [16, 128], strides = [1, 1]} : vector<16x1536xf32> to vector<16x128xf32>
    %59 = arith.truncf %58 : vector<16x128xf32> to vector<16x128xbf16>
    %cst_22 = arith.constant dense<0.000000e+00> : vector<16x16xf32>
    %60 = tpu.matmul %55, %57, %cst_22 {dimension_numbers = #tpu.dot_dimension_numbers<[1], [1], [0], [0], [0, 0, 1, 0], [], []>} : vector<16x128xbf16>, vector<16x128xbf16>, vector<16x16xf32> -> vector<16x16xf32>
    %cst_23 = arith.constant 0.144337565 : f32
    %61 = vector.broadcast %cst_23 : f32 to vector<16x16xf32>
    %62 = arith.mulf %60, %61 : vector<16x16xf32>
    %cst_24 = arith.constant dense<0xFF800000> : vector<16xf32>
    %63 = vector.multi_reduction <maximumf>, %62, %cst_24 [1] : vector<16x16xf32> to vector<16xf32>
    %64 = vector.shape_cast %63 : vector<16xf32> to vector<16x1xf32>
    %65 = vector.broadcast %64 : vector<16x1xf32> to vector<16x16xf32>
    %66 = arith.subf %62, %65 : vector<16x16xf32>
    %67 = math.exp %66 : vector<16x16xf32>
    %cst_25 = arith.constant dense<0.000000e+00> : vector<16xf32>
    %68 = vector.multi_reduction <add>, %67, %cst_25 [1] : vector<16x16xf32> to vector<16xf32>
    %69 = vector.shape_cast %68 : vector<16xf32> to vector<16x1xf32>
    %70 = tpu.reciprocal %69 {approx = true} : vector<16x1xf32> -> vector<16x1xf32>
    %71 = vector.broadcast %70 : vector<16x1xf32> to vector<16x16xf32>
    %72 = arith.mulf %67, %71 : vector<16x16xf32>
    %73 = arith.truncf %72 : vector<16x16xf32> to vector<16x16xbf16>
    %cst_26 = arith.constant dense<0.000000e+00> : vector<16x128xf32>
    %74 = tpu.matmul %73, %59, %cst_26 {dimension_numbers = #tpu.dot_dimension_numbers<[1], [0], [0], [1], [0, 0, 1, 1], [], []>} : vector<16x16xbf16>, vector<16x128xbf16>, vector<16x128xf32> -> vector<16x128xf32>
    %75 = arith.truncf %74 : vector<16x128xf32> to vector<16x128xbf16>
    %76 = vector.extract_strided_slice %27 {offsets = [128, 0], sizes = [128, 192], strides = [1, 1]} : vector<512x192xbf16> to vector<128x192xbf16>
    %cst_27 = arith.constant dense<0.000000e+00> : vector<16x192xf32>
    %77 = tpu.matmul %75, %76, %cst_27 {dimension_numbers = #tpu.dot_dimension_numbers<[1], [0], [0], [1], [0, 0, 1, 1], [], []>} : vector<16x128xbf16>, vector<128x192xbf16>, vector<16x192xf32> -> vector<16x192xf32>
    %78 = arith.addf %53, %77 : vector<16x192xf32>
    %79 = vector.extract_strided_slice %26 {offsets = [0, 256], sizes = [16, 128], strides = [1, 1]} : vector<16x1536xf32> to vector<16x128xf32>
    %80 = arith.truncf %79 : vector<16x128xf32> to vector<16x128xbf16>
    %81 = vector.extract_strided_slice %26 {offsets = [0, 768], sizes = [16, 128], strides = [1, 1]} : vector<16x1536xf32> to vector<16x128xf32>
    %82 = arith.truncf %81 : vector<16x128xf32> to vector<16x128xbf16>
    %83 = vector.extract_strided_slice %26 {offsets = [0, 1280], sizes = [16, 128], strides = [1, 1]} : vector<16x1536xf32> to vector<16x128xf32>
    %84 = arith.truncf %83 : vector<16x128xf32> to vector<16x128xbf16>
    %cst_28 = arith.constant dense<0.000000e+00> : vector<16x16xf32>
    %85 = tpu.matmul %80, %82, %cst_28 {dimension_numbers = #tpu.dot_dimension_numbers<[1], [1], [0], [0], [0, 0, 1, 0], [], []>} : vector<16x128xbf16>, vector<16x128xbf16>, vector<16x16xf32> -> vector<16x16xf32>
    %cst_29 = arith.constant 0.144337565 : f32
    %86 = vector.broadcast %cst_29 : f32 to vector<16x16xf32>
    %87 = arith.mulf %85, %86 : vector<16x16xf32>
    %cst_30 = arith.constant dense<0xFF800000> : vector<16xf32>
    %88 = vector.multi_reduction <maximumf>, %87, %cst_30 [1] : vector<16x16xf32> to vector<16xf32>
    %89 = vector.shape_cast %88 : vector<16xf32> to vector<16x1xf32>
    %90 = vector.broadcast %89 : vector<16x1xf32> to vector<16x16xf32>
    %91 = arith.subf %87, %90 : vector<16x16xf32>
    %92 = math.exp %91 : vector<16x16xf32>
    %cst_31 = arith.constant dense<0.000000e+00> : vector<16xf32>
    %93 = vector.multi_reduction <add>, %92, %cst_31 [1] : vector<16x16xf32> to vector<16xf32>
    %94 = vector.shape_cast %93 : vector<16xf32> to vector<16x1xf32>
    %95 = tpu.reciprocal %94 {approx = true} : vector<16x1xf32> -> vector<16x1xf32>
    %96 = vector.broadcast %95 : vector<16x1xf32> to vector<16x16xf32>
    %97 = arith.mulf %92, %96 : vector<16x16xf32>
    %98 = arith.truncf %97 : vector<16x16xf32> to vector<16x16xbf16>
    %cst_32 = arith.constant dense<0.000000e+00> : vector<16x128xf32>
    %99 = tpu.matmul %98, %84, %cst_32 {dimension_numbers = #tpu.dot_dimension_numbers<[1], [0], [0], [1], [0, 0, 1, 1], [], []>} : vector<16x16xbf16>, vector<16x128xbf16>, vector<16x128xf32> -> vector<16x128xf32>
    %100 = arith.truncf %99 : vector<16x128xf32> to vector<16x128xbf16>
    %101 = vector.extract_strided_slice %27 {offsets = [256, 0], sizes = [128, 192], strides = [1, 1]} : vector<512x192xbf16> to vector<128x192xbf16>
    %cst_33 = arith.constant dense<0.000000e+00> : vector<16x192xf32>
    %102 = tpu.matmul %100, %101, %cst_33 {dimension_numbers = #tpu.dot_dimension_numbers<[1], [0], [0], [1], [0, 0, 1, 1], [], []>} : vector<16x128xbf16>, vector<128x192xbf16>, vector<16x192xf32> -> vector<16x192xf32>
    %103 = arith.addf %78, %102 : vector<16x192xf32>
    %104 = vector.extract_strided_slice %26 {offsets = [0, 384], sizes = [16, 128], strides = [1, 1]} : vector<16x1536xf32> to vector<16x128xf32>
    %105 = arith.truncf %104 : vector<16x128xf32> to vector<16x128xbf16>
    %106 = vector.extract_strided_slice %26 {offsets = [0, 896], sizes = [16, 128], strides = [1, 1]} : vector<16x1536xf32> to vector<16x128xf32>
    %107 = arith.truncf %106 : vector<16x128xf32> to vector<16x128xbf16>
    %108 = vector.extract_strided_slice %26 {offsets = [0, 1408], sizes = [16, 128], strides = [1, 1]} : vector<16x1536xf32> to vector<16x128xf32>
    %109 = arith.truncf %108 : vector<16x128xf32> to vector<16x128xbf16>
    %cst_34 = arith.constant dense<0.000000e+00> : vector<16x16xf32>
    %110 = tpu.matmul %105, %107, %cst_34 {dimension_numbers = #tpu.dot_dimension_numbers<[1], [1], [0], [0], [0, 0, 1, 0], [], []>} : vector<16x128xbf16>, vector<16x128xbf16>, vector<16x16xf32> -> vector<16x16xf32>
    %cst_35 = arith.constant 0.144337565 : f32
    %111 = vector.broadcast %cst_35 : f32 to vector<16x16xf32>
    %112 = arith.mulf %110, %111 : vector<16x16xf32>
    %cst_36 = arith.constant dense<0xFF800000> : vector<16xf32>
    %113 = vector.multi_reduction <maximumf>, %112, %cst_36 [1] : vector<16x16xf32> to vector<16xf32>
    %114 = vector.shape_cast %113 : vector<16xf32> to vector<16x1xf32>
    %115 = vector.broadcast %114 : vector<16x1xf32> to vector<16x16xf32>
    %116 = arith.subf %112, %115 : vector<16x16xf32>
    %117 = math.exp %116 : vector<16x16xf32>
    %cst_37 = arith.constant dense<0.000000e+00> : vector<16xf32>
    %118 = vector.multi_reduction <add>, %117, %cst_37 [1] : vector<16x16xf32> to vector<16xf32>
    %119 = vector.shape_cast %118 : vector<16xf32> to vector<16x1xf32>
    %120 = tpu.reciprocal %119 {approx = true} : vector<16x1xf32> -> vector<16x1xf32>
    %121 = vector.broadcast %120 : vector<16x1xf32> to vector<16x16xf32>
    %122 = arith.mulf %117, %121 : vector<16x16xf32>
    %123 = arith.truncf %122 : vector<16x16xf32> to vector<16x16xbf16>
    %cst_38 = arith.constant dense<0.000000e+00> : vector<16x128xf32>
    %124 = tpu.matmul %123, %109, %cst_38 {dimension_numbers = #tpu.dot_dimension_numbers<[1], [0], [0], [1], [0, 0, 1, 1], [], []>} : vector<16x16xbf16>, vector<16x128xbf16>, vector<16x128xf32> -> vector<16x128xf32>
    %125 = arith.truncf %124 : vector<16x128xf32> to vector<16x128xbf16>
    %126 = vector.extract_strided_slice %27 {offsets = [384, 0], sizes = [128, 192], strides = [1, 1]} : vector<512x192xbf16> to vector<128x192xbf16>
    %cst_39 = arith.constant dense<0.000000e+00> : vector<16x192xf32>
    %127 = tpu.matmul %125, %126, %cst_39 {dimension_numbers = #tpu.dot_dimension_numbers<[1], [0], [0], [1], [0, 0, 1, 1], [], []>} : vector<16x128xbf16>, vector<128x192xbf16>, vector<16x192xf32> -> vector<16x192xf32>
    %128 = arith.addf %103, %127 : vector<16x192xf32>
    %c0_40 = arith.constant 0 : index
    %c0_41 = arith.constant 0 : index
    %129 = vector.load %arg6[%c0_40, %c0_41] : memref<1x192xf32, #tpu.memory_space<vmem>>, vector<1x192xf32>
    %130 = vector.broadcast %129 : vector<1x192xf32> to vector<16x192xf32>
    %131 = arith.addf %128, %130 : vector<16x192xf32>
    %132 = arith.addf %1, %131 : vector<16x192xf32>
    %c0_42 = arith.constant 0 : index
    %c0_43 = arith.constant 0 : index
    %133 = vector.load %arg7[%c0_42, %c0_43] : memref<1x192xf32, #tpu.memory_space<vmem>>, vector<1x192xf32>
    %c0_44 = arith.constant 0 : index
    %c0_45 = arith.constant 0 : index
    %134 = vector.load %arg8[%c0_44, %c0_45] : memref<1x192xf32, #tpu.memory_space<vmem>>, vector<1x192xf32>
    %cst_46 = arith.constant dense<0.000000e+00> : vector<16xf32>
    %135 = vector.multi_reduction <add>, %132, %cst_46 [1] : vector<16x192xf32> to vector<16xf32>
    %136 = vector.shape_cast %135 : vector<16xf32> to vector<16x1xf32>
    %cst_47 = arith.constant 1.920000e+02 : f32
    %137 = vector.broadcast %cst_47 : f32 to vector<16x1xf32>
    %138 = arith.divf %136, %137 : vector<16x1xf32>
    %139 = vector.broadcast %138 : vector<16x1xf32> to vector<16x192xf32>
    %140 = arith.subf %132, %139 : vector<16x192xf32>
    %141 = arith.mulf %140, %140 : vector<16x192xf32>
    %cst_48 = arith.constant dense<0.000000e+00> : vector<16xf32>
    %142 = vector.multi_reduction <add>, %141, %cst_48 [1] : vector<16x192xf32> to vector<16xf32>
    %143 = vector.shape_cast %142 : vector<16xf32> to vector<16x1xf32>
    %cst_49 = arith.constant 1.920000e+02 : f32
    %144 = vector.broadcast %cst_49 : f32 to vector<16x1xf32>
    %145 = arith.divf %143, %144 : vector<16x1xf32>
    %cst_50 = arith.constant 9.99999974E-6 : f32
    %146 = vector.broadcast %cst_50 : f32 to vector<16x1xf32>
    %147 = arith.addf %145, %146 : vector<16x1xf32>
    %148 = math.rsqrt %147 : vector<16x1xf32>
    %149 = vector.broadcast %148 : vector<16x1xf32> to vector<16x192xf32>
    %150 = arith.mulf %140, %149 : vector<16x192xf32>
    %151 = vector.broadcast %133 : vector<1x192xf32> to vector<16x192xf32>
    %152 = arith.mulf %150, %151 : vector<16x192xf32>
    %153 = vector.broadcast %134 : vector<1x192xf32> to vector<16x192xf32>
    %154 = arith.addf %152, %153 : vector<16x192xf32>
    %155 = arith.truncf %154 : vector<16x192xf32> to vector<16x192xbf16>
    %c0_51 = arith.constant 0 : index
    %c0_52 = arith.constant 0 : index
    %156 = vector.load %arg9[%c0_51, %c0_52] : memref<192x768xbf16, #tpu.memory_space<vmem>>, vector<192x768xbf16>
    %cst_53 = arith.constant dense<0.000000e+00> : vector<16x768xf32>
    %157 = tpu.matmul %155, %156, %cst_53 {dimension_numbers = #tpu.dot_dimension_numbers<[1], [0], [0], [1], [0, 0, 1, 1], [], []>} : vector<16x192xbf16>, vector<192x768xbf16>, vector<16x768xf32> -> vector<16x768xf32>
    %c0_54 = arith.constant 0 : index
    %c0_55 = arith.constant 0 : index
    %158 = vector.load %arg10[%c0_54, %c0_55] : memref<1x768xf32, #tpu.memory_space<vmem>>, vector<1x768xf32>
    %159 = vector.broadcast %158 : vector<1x768xf32> to vector<16x768xf32>
    %160 = arith.addf %157, %159 : vector<16x768xf32>
    %cst_56 = arith.constant 5.000000e-01 : f32
    %161 = vector.broadcast %cst_56 : f32 to vector<16x768xf32>
    %162 = arith.mulf %161, %160 : vector<16x768xf32>
    %cst_57 = arith.constant 0.707106769 : f32
    %163 = vector.broadcast %cst_57 : f32 to vector<16x768xf32>
    %164 = arith.mulf %160, %163 : vector<16x768xf32>
    %165 = math.erf %164 : vector<16x768xf32>
    %cst_58 = arith.constant 1.000000e+00 : f32
    %166 = vector.broadcast %cst_58 : f32 to vector<16x768xf32>
    %167 = arith.addf %166, %165 : vector<16x768xf32>
    %168 = arith.mulf %162, %167 : vector<16x768xf32>
    %169 = arith.truncf %168 : vector<16x768xf32> to vector<16x768xbf16>
    %c0_59 = arith.constant 0 : index
    %c0_60 = arith.constant 0 : index
    %170 = vector.load %arg11[%c0_59, %c0_60] : memref<768x192xbf16, #tpu.memory_space<vmem>>, vector<768x192xbf16>
    %cst_61 = arith.constant dense<0.000000e+00> : vector<16x192xf32>
    %171 = tpu.matmul %169, %170, %cst_61 {dimension_numbers = #tpu.dot_dimension_numbers<[1], [0], [0], [1], [0, 0, 1, 1], [], []>} : vector<16x768xbf16>, vector<768x192xbf16>, vector<16x192xf32> -> vector<16x192xf32>
    %c0_62 = arith.constant 0 : index
    %c0_63 = arith.constant 0 : index
    %172 = vector.load %arg12[%c0_62, %c0_63] : memref<1x192xf32, #tpu.memory_space<vmem>>, vector<1x192xf32>
    %173 = vector.broadcast %172 : vector<1x192xf32> to vector<16x192xf32>
    %174 = arith.addf %171, %173 : vector<16x192xf32>
    %175 = arith.addf %132, %174 : vector<16x192xf32>
    %176 = vector.shape_cast %175 : vector<16x192xf32> to vector<1x16x192xf32>
    %c0_64 = arith.constant 0 : index
    %c0_65 = arith.constant 0 : index
    %c0_66 = arith.constant 0 : index
    %177 = vector.load %arg13[%c0_64, %c0_65, %c0_66] : memref<1x16x192xf32, #tpu.memory_space<vmem>>, vector<1x16x192xf32>
    tpu.vector_store %arg13[%c0_64, %c0_65, %c0_66], %176 {strides = array<i32>} : memref<1x16x192xf32, #tpu.memory_space<vmem>>, vector<1x16x192xf32>,
    return
  }
  func.func @transform_0(%arg0: i32) -> (i32, i32, i32) {
    %c0_i32 = arith.constant 0 : i32
    %c0_i32_0 = arith.constant 0 : i32
    %c0_i32_1 = arith.constant 0 : i32
    return %arg0, %c0_i32, %c0_i32_0 : i32, i32, i32
  }
  func.func @transform_1(%arg0: i32) -> (i32, i32) {
    %c0_i32 = arith.constant 0 : i32
    %c0_i32_0 = arith.constant 0 : i32
    %c0_i32_1 = arith.constant 0 : i32
    return %c0_i32, %c0_i32_0 : i32, i32
  }
  func.func @transform_2(%arg0: i32) -> (i32, i32) {
    %c0_i32 = arith.constant 0 : i32
    %c0_i32_0 = arith.constant 0 : i32
    %c0_i32_1 = arith.constant 0 : i32
    return %c0_i32, %c0_i32_0 : i32, i32
  }
  func.func @transform_3(%arg0: i32) -> (i32, i32) {
    %c0_i32 = arith.constant 0 : i32
    %c0_i32_0 = arith.constant 0 : i32
    %c0_i32_1 = arith.constant 0 : i32
    return %c0_i32, %c0_i32_0 : i32, i32
  }
  func.func @transform_4(%arg0: i32) -> (i32, i32) {
    %c0_i32 = arith.constant 0 : i32
    %c0_i32_0 = arith.constant 0 : i32
    %c0_i32_1 = arith.constant 0 : i32
    return %c0_i32, %c0_i32_0 : i32, i32
  }
  func.func @transform_5(%arg0: i32) -> (i32, i32) {
    %c0_i32 = arith.constant 0 : i32
    %c0_i32_0 = arith.constant 0 : i32
    %c0_i32_1 = arith.constant 0 : i32
    return %c0_i32, %c0_i32_0 : i32, i32
  }
  func.func @transform_6(%arg0: i32) -> (i32, i32) {
    %c0_i32 = arith.constant 0 : i32
    %c0_i32_0 = arith.constant 0 : i32
    %c0_i32_1 = arith.constant 0 : i32
    return %c0_i32, %c0_i32_0 : i32, i32
  }
  func.func @transform_7(%arg0: i32) -> (i32, i32) {
    %c0_i32 = arith.constant 0 : i32
    %c0_i32_0 = arith.constant 0 : i32
    %c0_i32_1 = arith.constant 0 : i32
    return %c0_i32, %c0_i32_0 : i32, i32
  }
  func.func @transform_8(%arg0: i32) -> (i32, i32) {
    %c0_i32 = arith.constant 0 : i32
    %c0_i32_0 = arith.constant 0 : i32
    %c0_i32_1 = arith.constant 0 : i32
    return %c0_i32, %c0_i32_0 : i32, i32
  }
  func.func @transform_9(%arg0: i32) -> (i32, i32) {
    %c0_i32 = arith.constant 0 : i32
    %c0_i32_0 = arith.constant 0 : i32
    %c0_i32_1 = arith.constant 0 : i32
    return %c0_i32, %c0_i32_0 : i32, i32
  }
  func.func @transform_10(%arg0: i32) -> (i32, i32) {
    %c0_i32 = arith.constant 0 : i32
    %c0_i32_0 = arith.constant 0 : i32
    %c0_i32_1 = arith.constant 0 : i32
    return %c0_i32, %c0_i32_0 : i32, i32
  }
  func.func @transform_11(%arg0: i32) -> (i32, i32) {
    %c0_i32 = arith.constant 0 : i32
    %c0_i32_0 = arith.constant 0 : i32
    %c0_i32_1 = arith.constant 0 : i32
    return %c0_i32, %c0_i32_0 : i32, i32
  }
  func.func @transform_12(%arg0: i32) -> (i32, i32, i32) {
    %c0_i32 = arith.constant 0 : i32
    %c0_i32_0 = arith.constant 0 : i32
    %c0_i32_1 = arith.constant 0 : i32
    return %arg0, %c0_i32, %c0_i32_0 : i32, i32, i32
  }
}

</mosaic_0001>

<llo_original>
// kernel: transformer_block_forward.1
$region0: #{transformer_block_forward.1}
  #allocation0 [shape = 'u32[]', space=smem, size = 0x4, offset = 0x4, fixed_abs, tag = 'smem constant byte address 0x4 - core index']
  #allocation1 [shape = 'u32[144,128]{1,0:T(1,128)}', space=vmem, size = 0x12000, scoped, tag = 'internal scratch']
  %s0 = inlined_call_operand.vmem [shape: f32[2,16,192], index: 0, kind: input, shape index: {}]
  %s1 = inlined_call_operand.vmem [shape: f32[1,192], index: 1, kind: input, shape index: {}]
  %s2 = inlined_call_operand.vmem [shape: f32[1,192], index: 2, kind: input, shape index: {}]
  %s3 = inlined_call_operand.vmem [shape: bf16[192,1536], index: 3, kind: input, shape index: {}]
  %s4 = inlined_call_operand.vmem [shape: bf16[512,192], index: 4, kind: input, shape index: {}]
  %s5 = inlined_call_operand.vmem [shape: f32[1,192], index: 5, kind: input, shape index: {}]
  %s6 = inlined_call_operand.vmem [shape: f32[1,192], index: 6, kind: input, shape index: {}]
  %s7 = inlined_call_operand.vmem [shape: f32[1,192], index: 7, kind: input, shape index: {}]
  %s8 = inlined_call_operand.vmem [shape: bf16[192,768], index: 8, kind: input, shape index: {}]
  %s9 = inlined_call_operand.vmem [shape: f32[1,768], index: 9, kind: input, shape index: {}]
  %s10 = inlined_call_operand.vmem [shape: bf16[768,192], index: 10, kind: input, shape index: {}]
  %s11 = inlined_call_operand.vmem [shape: f32[1,192], index: 11, kind: input, shape index: {}]
  %s12 = inlined_call_operand.hbm [shape: f32[2,16,192], index: 12, kind: output, shape index: {}]
  %s13 = sld [smem:[#allocation0]]
  $region81: #{transformer_block_forward.1} parent=0
    _
  %s15 = ssub.s32 1, %s13
  %s16 = scalar_select 0, %s15, %s13
  $region1: #{transformer_block_forward.1} parent=0
    #allocation2 [shape = 'u8[32768]{0}', space=vmem, size = 0x8000, scoped, tag = 'output window, operand 0']
    #allocation3 [shape = 's32[2]{0}', space=sflag, size = 0x8, scoped, tag = 'scoped memory for transformer_block_forward.1']
    %17 = vsyncpa [#allocation3], 0
    %s18 = scalar_lea.sflag [#allocation3], 1
    %19 = vsyncpa %s18, 0
    loop: start=0, step=1, limit=4
    $region2: #{transformer_block_forward.1} parent=1 // loop_pre_header
      _
    $region3: #{transformer_block_forward.1} parent=1 // loop_header
      %s21 = sphi 0, %s25
      %p22 = scmp.ge.s32.totalorder %s21, 4
      %s31 = sphi 0, %s33
      %s34 = sphi 0, %s31
      %s35 = sphi 0, %s34
      %s51 = sphi 0, %s35
      %s55 = sphi 0, %s55
      %s57 = sphi 0, %s55
      %s58 = sphi 0, %s57
      %s72 = sphi 0, %s58
      %s76 = sphi 0, %s76
      %s78 = sphi 0, %s76
      %s79 = sphi 0, %s78
      %s93 = sphi 0, %s79
      %s97 = sphi 0, %s97
      %s99 = sphi 0, %s97
      %s100 = sphi 0, %s99
      %s114 = sphi 0, %s100
      %s118 = sphi 0, %s118
      %s120 = sphi 0, %s118
      %s121 = sphi 0, %s120
      %s135 = sphi 0, %s121
      %s139 = sphi 0, %s139
      %s141 = sphi 0, %s139
      %s142 = sphi 0, %s141
      %s156 = sphi 0, %s142
      %s160 = sphi 0, %s160
      %s162 = sphi 0, %s160
      %s163 = sphi 0, %s162
      %s177 = sphi 0, %s163
      %s181 = sphi 0, %s181
      %s183 = sphi 0, %s181
      %s184 = sphi 0, %s183
      %s198 = sphi 0, %s184
      %s202 = sphi 0, %s202
      %s204 = sphi 0, %s202
      %s205 = sphi 0, %s204
      %s219 = sphi 0, %s205
      %s223 = sphi 0, %s223
      %s225 = sphi 0, %s223
      %s226 = sphi 0, %s225
      %s240 = sphi 0, %s226
      %s244 = sphi 0, %s244
      %s246 = sphi 0, %s244
      %s247 = sphi 0, %s246
      %s261 = sphi 0, %s247
      %s265 = sphi 0, %s265
      %s267 = sphi 0, %s265
      %s268 = sphi 0, %s267
      %s282 = sphi 0, %s268
      %s288 = sphi 0, %s290
      %s291 = sphi 0, %s288
      %s292 = sphi 0, %s291
      %s308 = sphi 0, %s292
    $region4: #{transformer_block_forward.1} parent=1 // loop_header_branch
      %24 = sbr.rel (%p22) target = $region8
    $region5: #{transformer_block_forward.1} parent=1 // loop_body
      %s26 = ssub.s32 %s21, 1
      %s27 = ssub.s32 %s21, 2
      %s28 = sadd.s32 %s21, 1
      %s29 = ssub.s32 %s21, %s28
      %p30 = scmp.eq.s32.totalorder %s29, 0
      %s32 = sadd.s32 %s31, 1
      %s33 = scalar_select %p30, %s31, %s32
      %p36 = pneg %p30
      %p37 = scmp.eq.s32.totalorder %s21, 1
      %p38 = por %p36, %p37
      %p39 = scmp.ne.s32.totalorder %s31, %s34
      %p40 = scmp.eq.s32.totalorder %s21, 0
      %p41 = por %p39, %p40
      %p42 = scmp.ne.s32.totalorder %s31, %s34
      %p43 = scmp.eq.s32.totalorder %s26, 1
      %p44 = por %p42, %p43
      %p45 = scmp.ne.s32.totalorder %s34, %s35
      %p46 = scmp.eq.s32.totalorder %s26, 0
      %p47 = por %p45, %p46
      %p48 = scmp.ne.s32.totalorder %s34, %s35
      %p49 = scmp.eq.s32.totalorder %s27, 1
      %p50 = por %p48, %p49
      %p52 = scmp.ne.s32.totalorder %s35, %s51
      %p53 = scmp.eq.s32.totalorder %s27, 0
      %p54 = por %p52, %p53
      %s56 = sadd.s32 %s55, 1
      %p59 = scmp.eq.s32.totalorder %s21, 1
      %p60 = scmp.ne.s32.totalorder %s55, %s57
      %p61 = scmp.eq.s32.totalorder %s21, 0
      %p62 = por %p60, %p61
      %p63 = scmp.ne.s32.totalorder %s55, %s57
      %p64 = scmp.eq.s32.totalorder %s26, 1
      %p65 = por %p63, %p64
      %p66 = scmp.ne.s32.totalorder %s57, %s58
      %p67 = scmp.eq.s32.totalorder %s26, 0
      %p68 = por %p66, %p67
      %p69 = scmp.ne.s32.totalorder %s57, %s58
      %p70 = scmp.eq.s32.totalorder %s27, 1
      %p71 = por %p69, %p70
      %p73 = scmp.ne.s32.totalorder %s58, %s72
      %p74 = scmp.eq.s32.totalorder %s27, 0
      %p75 = por %p73, %p74
      %s77 = sadd.s32 %s76, 1
      %p80 = scmp.eq.s32.totalorder %s21, 1
      %p81 = scmp.ne.s32.totalorder %s76, %s78
      %p82 = scmp.eq.s32.totalorder %s21, 0
      %p83 = por %p81, %p82
      %p84 = scmp.ne.s32.totalorder %s76, %s78
      %p85 = scmp.eq.s32.totalorder %s26, 1
      %p86 = por %p84, %p85
      %p87 = scmp.ne.s32.totalorder %s78, %s79
      %p88 = scmp.eq.s32.totalorder %s26, 0
      %p89 = por %p87, %p88
      %p90 = scmp.ne.s32.totalorder %s78, %s79
      %p91 = scmp.eq.s32.totalorder %s27, 1
      %p92 = por %p90, %p91
      %p94 = scmp.ne.s32.totalorder %s79, %s93
      %p95 = scmp.eq.s32.totalorder %s27, 0
      %p96 = por %p94, %p95
      %s98 = sadd.s32 %s97, 1
      %p101 = scmp.eq.s32.totalorder %s21, 1
      %p102 = scmp.ne.s32.totalorder %s97, %s99
      %p103 = scmp.eq.s32.totalorder %s21, 0
      %p104 = por %p102, %p103
      %p105 = scmp.ne.s32.totalorder %s97, %s99
      %p106 = scmp.eq.s32.totalorder %s26, 1
      %p107 = por %p105, %p106
      %p108 = scmp.ne.s32.totalorder %s99, %s100
      %p109 = scmp.eq.s32.totalorder %s26, 0
      %p110 = por %p108, %p109
      %p111 = scmp.ne.s32.totalorder %s99, %s100
      %p112 = scmp.eq.s32.totalorder %s27, 1
      %p113 = por %p111, %p112
      %p115 = scmp.ne.s32.totalorder %s100, %s114
      %p116 = scmp.eq.s32.totalorder %s27, 0
      %p117 = por %p115, %p116
      %s119 = sadd.s32 %s118, 1
      %p122 = scmp.eq.s32.totalorder %s21, 1
      %p123 = scmp.ne.s32.totalorder %s118, %s120
      %p124 = scmp.eq.s32.totalorder %s21, 0
      %p125 = por %p123, %p124
      %p126 = scmp.ne.s32.totalorder %s118, %s120
      %p127 = scmp.eq.s32.totalorder %s26, 1
      %p128 = por %p126, %p127
      %p129 = scmp.ne.s32.totalorder %s120, %s121
      %p130 = scmp.eq.s32.totalorder %s26, 0
      %p131 = por %p129, %p130
      %p132 = scmp.ne.s32.totalorder %s120, %s121
      %p133 = scmp.eq.s32.totalorder %s27, 1
      %p134 = por %p132, %p133
      %p136 = scmp.ne.s32.totalorder %s121, %s135
      %p137 = scmp.eq.s32.totalorder %s27, 0
      %p138 = por %p136, %p137
      %s140 = sadd.s32 %s139, 1
      %p143 = scmp.eq.s32.totalorder %s21, 1
      %p144 = scmp.ne.s32.totalorder %s139, %s141
      %p145 = scmp.eq.s32.totalorder %s21, 0
      %p146 = por %p144, %p145
      %p147 = scmp.ne.s32.totalorder %s139, %s141
      %p148 = scmp.eq.s32.totalorder %s26, 1
      %p149 = por %p147, %p148
      %p150 = scmp.ne.s32.totalorder %s141, %s142
      %p151 = scmp.eq.s32.totalorder %s26, 0
      %p152 = por %p150, %p151
      %p153 = scmp.ne.s32.totalorder %s141, %s142
      %p154 = scmp.eq.s32.totalorder %s27, 1
      %p155 = por %p153, %p154
      %p157 = scmp.ne.s32.totalorder %s142, %s156
      %p158 = scmp.eq.s32.totalorder %s27, 0
      %p159 = por %p157, %p158
      %s161 = sadd.s32 %s160, 1
      %p164 = scmp.eq.s32.totalorder %s21, 1
      %p165 = scmp.ne.s32.totalorder %s160, %s162
      %p166 = scmp.eq.s32.totalorder %s21, 0
      %p167 = por %p165, %p166
      %p168 = scmp.ne.s32.totalorder %s160, %s162
      %p169 = scmp.eq.s32.totalorder %s26, 1
      %p170 = por %p168, %p169
      %p171 = scmp.ne.s32.totalorder %s162, %s163
      %p172 = scmp.eq.s32.totalorder %s26, 0
      %p173 = por %p171, %p172
      %p174 = scmp.ne.s32.totalorder %s162, %s163
      %p175 = scmp.eq.s32.totalorder %s27, 1
      %p176 = por %p174, %p175
      %p178 = scmp.ne.s32.totalorder %s163, %s177
      %p179 = scmp.eq.s32.totalorder %s27, 0
      %p180 = por %p178, %p179
      %s182 = sadd.s32 %s181, 1
      %p185 = scmp.eq.s32.totalorder %s21, 1
      %p186 = scmp.ne.s32.totalorder %s181, %s183
      %p187 = scmp.eq.s32.totalorder %s21, 0
      %p188 = por %p186, %p187
      %p189 = scmp.ne.s32.totalorder %s181, %s183
      %p190 = scmp.eq.s32.totalorder %s26, 1
      %p191 = por %p189, %p190
      %p192 = scmp.ne.s32.totalorder %s183, %s184
      %p193 = scmp.eq.s32.totalorder %s26, 0
      %p194 = por %p192, %p193
      %p195 = scmp.ne.s32.totalorder %s183, %s184
      %p196 = scmp.eq.s32.totalorder %s27, 1
      %p197 = por %p195, %p196
      %p199 = scmp.ne.s32.totalorder %s184, %s198
      %p200 = scmp.eq.s32.totalorder %s27, 0
      %p201 = por %p199, %p200
      %s203 = sadd.s32 %s202, 1
      %p206 = scmp.eq.s32.totalorder %s21, 1
      %p207 = scmp.ne.s32.totalorder %s202, %s204
      %p208 = scmp.eq.s32.totalorder %s21, 0
      %p209 = por %p207, %p208
      %p210 = scmp.ne.s32.totalorder %s202, %s204
      %p211 = scmp.eq.s32.totalorder %s26, 1
      %p212 = por %p210, %p211
      %p213 = scmp.ne.s32.totalorder %s204, %s205
      %p214 = scmp.eq.s32.totalorder %s26, 0
      %p215 = por %p213, %p214
      %p216 = scmp.ne.s32.totalorder %s204, %s205
      %p217 = scmp.eq.s32.totalorder %s27, 1
      %p218 = por %p216, %p217
      %p220 = scmp.ne.s32.totalorder %s205, %s219
      %p221 = scmp.eq.s32.totalorder %s27, 0
      %p222 = por %p220, %p221
      %s224 = sadd.s32 %s223, 1
      %p227 = scmp.eq.s32.totalorder %s21, 1
      %p228 = scmp.ne.s32.totalorder %s223, %s225
      %p229 = scmp.eq.s32.totalorder %s21, 0
      %p230 = por %p228, %p229
      %p231 = scmp.ne.s32.totalorder %s223, %s225
      %p232 = scmp.eq.s32.totalorder %s26, 1
      %p233 = por %p231, %p232
      %p234 = scmp.ne.s32.totalorder %s225, %s226
      %p235 = scmp.eq.s32.totalorder %s26, 0
      %p236 = por %p234, %p235
      %p237 = scmp.ne.s32.totalorder %s225, %s226
      %p238 = scmp.eq.s32.totalorder %s27, 1
      %p239 = por %p237, %p238
      %p241 = scmp.ne.s32.totalorder %s226, %s240
      %p242 = scmp.eq.s32.totalorder %s27, 0
      %p243 = por %p241, %p242
      %s245 = sadd.s32 %s244, 1
      %p248 = scmp.eq.s32.totalorder %s21, 1
      %p249 = scmp.ne.s32.totalorder %s244, %s246
      %p250 = scmp.eq.s32.totalorder %s21, 0
      %p251 = por %p249, %p250
      %p252 = scmp.ne.s32.totalorder %s244, %s246
      %p253 = scmp.eq.s32.totalorder %s26, 1
      %p254 = por %p252, %p253
      %p255 = scmp.ne.s32.totalorder %s246, %s247
      %p256 = scmp.eq.s32.totalorder %s26, 0
      %p257 = por %p255, %p256
      %p258 = scmp.ne.s32.totalorder %s246, %s247
      %p259 = scmp.eq.s32.totalorder %s27, 1
      %p260 = por %p258, %p259
      %p262 = scmp.ne.s32.totalorder %s247, %s261
      %p263 = scmp.eq.s32.totalorder %s27, 0
      %p264 = por %p262, %p263
      %s266 = sadd.s32 %s265, 1
      %p269 = scmp.eq.s32.totalorder %s21, 1
      %p270 = scmp.ne.s32.totalorder %s265, %s267
      %p271 = scmp.eq.s32.totalorder %s21, 0
      %p272 = por %p270, %p271
      %p273 = scmp.ne.s32.totalorder %s265, %s267
      %p274 = scmp.eq.s32.totalorder %s26, 1
      %p275 = por %p273, %p274
      %p276 = scmp.ne.s32.totalorder %s267, %s268
      %p277 = scmp.eq.s32.totalorder %s26, 0
      %p278 = por %p276, %p277
      %p279 = scmp.ne.s32.totalorder %s267, %s268
      %p280 = scmp.eq.s32.totalorder %s27, 1
      %p281 = por %p279, %p280
      %p283 = scmp.ne.s32.totalorder %s268, %s282
      %p284 = scmp.eq.s32.totalorder %s27, 0
      %p285 = por %p283, %p284
      %s286 = ssub.s32 %s21, %s28
      %p287 = scmp.eq.s32.totalorder %s286, 0
      %s289 = sadd.s32 %s288, 1
      %s290 = scalar_select %p287, %s288, %s289
      %p293 = pneg %p287
      %p294 = scmp.eq.s32.totalorder %s21, 1
      %p295 = por %p293, %p294
      %p296 = scmp.ne.s32.totalorder %s288, %s291
      %p297 = scmp.eq.s32.totalorder %s21, 0
      %p298 = por %p296, %p297
      %p299 = scmp.ne.s32.totalorder %s288, %s291
      %p300 = scmp.eq.s32.totalorder %s26, 1
      %p301 = por %p299, %p300
      %p302 = scmp.ne.s32.totalorder %s291, %s292
      %p303 = scmp.eq.s32.totalorder %s26, 0
      %p304 = por %p302, %p303
      %p305 = scmp.ne.s32.totalorder %s291, %s292
      %p306 = scmp.eq.s32.totalorder %s27, 1
      %p307 = por %p305, %p306
      %p309 = scmp.ne.s32.totalorder %s292, %s308
      %p310 = scmp.eq.s32.totalorder %s27, 0
      %p311 = por %p309, %p310
      %p312 = scmp.le.s32.totalorder 1, %s21
      %p313 = scmp.lt.s32.totalorder %s21, 3
      %p314 = pnand %p312, %p313
      %p315 = pneg %p314
      // Predicated region
      $region9: #{transformer_block_forward.1} parent=5 // pred_check
        _
      $region10: #{transformer_block_forward.1} parent=5 // pred_check_branch
        %317 = sbr.rel (%p314) target = $region12
      $region11: #{transformer_block_forward.1} parent=5 // pred_region
        %s318 = ssub.s32 %s21, 1
        // Predicated region
        $region13: #{transformer_block_forward.1} parent=11 // pred_check
          %p319 = pneg %p68
        $region14: #{transformer_block_forward.1} parent=11 // pred_check_branch
          %321 = sbr.rel (%p319) target = $region16
        $region15: #{transformer_block_forward.1} parent=11 // pred_region
          _
        $region16: #{transformer_block_forward.1} parent=11 // pred_fallthru
          _
        // Predicated region
        $region17: #{transformer_block_forward.1} parent=11 // pred_check
          %p322 = pneg %p89
        $region18: #{transformer_block_forward.1} parent=11 // pred_check_branch
          %324 = sbr.rel (%p322) target = $region20
        $region19: #{transformer_block_forward.1} parent=11 // pred_region
          _
        $region20: #{transformer_block_forward.1} parent=11 // pred_fallthru
          _
        // Predicated region
        $region21: #{transformer_block_forward.1} parent=11 // pred_check
          %p325 = pneg %p110
        $region22: #{transformer_block_forward.1} parent=11 // pred_check_branch
          %327 = sbr.rel (%p325) target = $region24
        $region23: #{transformer_block_forward.1} parent=11 // pred_region
          _
        $region24: #{transformer_block_forward.1} parent=11 // pred_fallthru
          _
        // Predicated region
        $region25: #{transformer_block_forward.1} parent=11 // pred_check
          %p328 = pneg %p131
        $region26: #{transformer_block_forward.1} parent=11 // pred_check_branch
          %330 = sbr.rel (%p328) target = $region28
        $region27: #{transformer_block_forward.1} parent=11 // pred_region
          _
        $region28: #{transformer_block_forward.1} parent=11 // pred_fallthru
          _
        // Predicated region
        $region29: #{transformer_block_forward.1} parent=11 // pred_check
          %p331 = pneg %p152
        $region30: #{transformer_block_forward.1} parent=11 // pred_check_branch
          %333 = sbr.rel (%p331) target = $region32
        $region31: #{transformer_block_forward.1} parent=11 // pred_region
          _
        $region32: #{transformer_block_forward.1} parent=11 // pred_fallthru
          _
        // Predicated region
        $region33: #{transformer_block_forward.1} parent=11 // pred_check
          %p334 = pneg %p173
        $region34: #{transformer_block_forward.1} parent=11 // pred_check_branch
          %336 = sbr.rel (%p334) target = $region36
        $region35: #{transformer_block_forward.1} parent=11 // pred_region
          _
        $region36: #{transformer_block_forward.1} parent=11 // pred_fallthru
          _
        // Predicated region
        $region37: #{transformer_block_forward.1} parent=11 // pred_check
          %p337 = pneg %p194
        $region38: #{transformer_block_forward.1} parent=11 // pred_check_branch
          %339 = sbr.rel (%p337) target = $region40
        $region39: #{transformer_block_forward.1} parent=11 // pred_region
          _
        $region40: #{transformer_block_forward.1} parent=11 // pred_fallthru
          _
        // Predicated region
        $region41: #{transformer_block_forward.1} parent=11 // pred_check
          %p340 = pneg %p215
        $region42: #{transformer_block_forward.1} parent=11 // pred_check_branch
          %342 = sbr.rel (%p340) target = $region44
        $region43: #{transformer_block_forward.1} parent=11 // pred_region
          _
        $region44: #{transformer_block_forward.1} parent=11 // pred_fallthru
          _
        // Predicated region
        $region45: #{transformer_block_forward.1} parent=11 // pred_check
          %p343 = pneg %p236
        $region46: #{transformer_block_forward.1} parent=11 // pred_check_branch
          %345 = sbr.rel (%p343) target = $region48
        $region47: #{transformer_block_forward.1} parent=11 // pred_region
          _
        $region48: #{transformer_block_forward.1} parent=11 // pred_fallthru
          _
        // Predicated region
        $region49: #{transformer_block_forward.1} parent=11 // pred_check
          %p346 = pneg %p257
        $region50: #{transformer_block_forward.1} parent=11 // pred_check_branch
          %348 = sbr.rel (%p346) target = $region52
        $region51: #{transformer_block_forward.1} parent=11 // pred_region
          _
        $region52: #{transformer_block_forward.1} parent=11 // pred_fallthru
          _
        // Predicated region
        $region53: #{transformer_block_forward.1} parent=11 // pred_check
          %p349 = pneg %p278
        $region54: #{transformer_block_forward.1} parent=11 // pred_check_branch
          %351 = sbr.rel (%p349) target = $region56
        $region55: #{transformer_block_forward.1} parent=11 // pred_region
          _
        $region56: #{transformer_block_forward.1} parent=11 // pred_fallthru
          _
      $region12: #{transformer_block_forward.1} parent=5 // pred_fallthru
        _
      %p352 = scmp.lt.s32.totalorder %s21, 2
      // Predicated region
      $region57: #{transformer_block_forward.1} parent=5 // pred_check
        %p353 = pneg %p352
      $region58: #{transformer_block_forward.1} parent=5 // pred_check_branch
        %355 = sbr.rel (%p353) target = $region60
      $region59: #{transformer_block_forward.1} parent=5 // pred_region
        // Predicated region
        $region61: #{transformer_block_forward.1} parent=59 // pred_check
          %p356 = pneg %p41
        $region62: #{transformer_block_forward.1} parent=59 // pred_check_branch
          %358 = sbr.rel (%p356) target = $region64
        $region63: #{transformer_block_forward.1} parent=59 // pred_region
          %p359 = scmp.lt.s32.totalorder %s21, 1
          %s360 = scalar_select %p359, %s21, 1
          %s361 = smul.addr %s360, 4
          %s362 = smul.addr %s361, 8
          %s363 = scalar_lea.vmem %s0, %s362
        $region64: #{transformer_block_forward.1} parent=59 // pred_fallthru
          _
      $region60: #{transformer_block_forward.1} parent=5 // pred_fallthru
        _
      %p364 = scmp.le.s32.totalorder 1, %s21
      %p365 = scmp.lt.s32.totalorder %s21, 3
      %p366 = pnand %p364, %p365
      %p367 = pneg %p366
      // Predicated region
      $region65: #{transformer_block_forward.1} parent=5 // pred_check
        _
      $region66: #{transformer_block_forward.1} parent=5 // pred_check_branch
        %369 = sbr.rel (%p366) target = $region68
      $region67: #{transformer_block_forward.1} parent=5 // pred_region
        %s370 = ssub.s32 %s21, 1
        %p371 = scmp.lt.s32.totalorder %s26, 1
        %s372 = scalar_select %p371, %s26, 1
        %s373 = smul.addr %s372, 4
        %s374 = smul.addr %s373, 8
        %s375 = scalar_lea.vmem %s0, %s374
        %p376 = pneg %p47
        %p377 = pneg %p44
        %p378 = pneg %p68
        %p379 = pneg %p65
        %p380 = pneg %p89
        %p381 = pneg %p86
        %p382 = pneg %p110
        %p383 = pneg %p107
        %p384 = pneg %p131
        %p385 = pneg %p128
        %p386 = pneg %p152
        %p387 = pneg %p149
        %p388 = pneg %p173
        %p389 = pneg %p170
        %p390 = pneg %p194
        %p391 = pneg %p191
        %p392 = pneg %p215
        %p393 = pneg %p212
        %p394 = pneg %p236
        %p395 = pneg %p233
        %p396 = pneg %p257
        %p397 = pneg %p254
        %p398 = pneg %p278
        %p399 = pneg %p275
        %p400 = pneg %p304
        %p401 = pneg %p301
        %s402 = sand.u32 %s291, 1
        %s403 = scalar_lea.sflag [#allocation3], %s402
        %s404 = sand.u32 %s291, 1
        %s405 = smul.addr %s404, 32
        %s406 = scalar_lea.vmem [#allocation2], %s405
        %p407 = scmp.lt.s32.totalorder %s26, 1
        %s408 = scalar_select %p407, %s26, 1
        %s409 = smul.addr %s408, 4
        %s410 = smul.addr %s409, 8
        %s411 = scalar_lea.vmem %s0, %s410
        %v413 = vld [vmem:[%s411] sm:$0xff]
        %v414 = vld [vmem:[%s411 + $0x8] sm:$0xff]
        %v415 = vld [vmem:[%s411 + $0x10] sm:$0xff]
        %v416 = vld [vmem:[%s411 + $0x18] sm:$0xff]
        %v417 = vld [vmem:[%s1] sm:$0x3]
        %v418 = vld [vmem:[%s2] sm:$0x3]
        %vm419 = vcmask 523264
        %v420 = vsel %vm419, %v414, 0.0
        %v421 = vadd.f32 %v413, %v420
        %422 = vadd.xlane.f32.xlu0 %v421
        %v423 = vpop.xlane.xlu0 %422
        %v424 = vsel %vm419, %v416, 0.0
        %v425 = vadd.f32 %v415, %v424
        %426 = vadd.xlane.f32.xlu0 %v425
        %v427 = vpop.xlane.xlu0 %426
        %v428 = vrcp.pop 192.0
        %v429 = vmul.f32 %v423, %v428
        %v430 = vmul.f32 %v427, %v428
        %v431 = vsub.f32 %v413, %v429
        %v432 = vsub.f32 %v414, %v429
        %v433 = vsub.f32 %v415, %v430
        %v434 = vsub.f32 %v416, %v430
        %v435 = vmul.f32 %v431, %v431
        %v436 = vmul.f32 %v432, %v432
        %v437 = vmul.f32 %v433, %v433
        %v438 = vmul.f32 %v434, %v434
        %v439 = vsel %vm419, %v436, 0.0
        %v440 = vadd.f32 %v435, %v439
        %441 = vadd.xlane.f32.xlu0 %v440
        %v442 = vpop.xlane.xlu0 %441
        %v443 = vsel %vm419, %v438, 0.0
        %v444 = vadd.f32 %v437, %v443
        %445 = vadd.xlane.f32.xlu0 %v444
        %v446 = vpop.xlane.xlu0 %445
        %v447 = vmul.f32 %v442, %v428
        %v448 = vmul.f32 %v446, %v428
        %v449 = vadd.f32 %v447, 1e-05
        %v450 = vadd.f32 %v448, 1e-05
        %v451 = vrsqrt.pop %v449
        %v452 = vrsqrt.pop %v450
        %v453 = vmul.f32 %v431, %v451
        %v454 = vmul.f32 %v432, %v451
        %v455 = vmul.f32 %v433, %v452
        %v456 = vmul.f32 %v434, %v452
        %v458 = vlaneseq
        %v459 = vshrl.u32 %v458, 7
        %v460 = vsub.s32 0, %v459
        %v461 = vrot.slane %v417, %v460
        %v462 = vlaneseq
        %v463 = vshrl.u32 %v462, 7
        %v464 = vsub.s32 1, %v463
        %v465 = vrot.slane %v417, %v464
        %v468 = vmul.f32 %v453, %v461
        %v469 = vmul.f32 %v454, %v465
        %v470 = vmul.f32 %v455, %v461
        %v471 = vmul.f32 %v456, %v465
        %v473 = vlaneseq
        %v474 = vshrl.u32 %v473, 7
        %v475 = vsub.s32 0, %v474
        %v476 = vrot.slane %v418, %v475
        %v477 = vlaneseq
        %v478 = vshrl.u32 %v477, 7
        %v479 = vsub.s32 1, %v478
        %v480 = vrot.slane %v418, %v479
        %v483 = vadd.f32 %v468, %v476
        %v484 = vadd.f32 %v469, %v480
        %v485 = vadd.f32 %v470, %v476
        %v486 = vadd.f32 %v471, %v480
        %v487 = vpack.c.bf16 %v485, %v483
        %v488 = vpack.c.bf16 %v486, %v484
        %v489 = vld [vmem:[%s3] sm:$0xff]
        %v490 = vld [vmem:[%s3 + $0x8] sm:$0xff]
        %v491 = vld [vmem:[%s3 + $0x10] sm:$0xff]
        %v492 = vld [vmem:[%s3 + $0x18] sm:$0xff]
        %v493 = vld [vmem:[%s3 + $0x20] sm:$0xff]
        %v494 = vld [vmem:[%s3 + $0x28] sm:$0xff]
        %v495 = vld [vmem:[%s3 + $0x30] sm:$0xff]
        %v496 = vld [vmem:[%s3 + $0x38] sm:$0xff]
        %v497 = vld [vmem:[%s3 + $0x40] sm:$0xff]
        %v498 = vld [vmem:[%s3 + $0x48] sm:$0xff]
        %v499 = vld [vmem:[%s3 + $0x50] sm:$0xff]
        %v500 = vld [vmem:[%s3 + $0x58] sm:$0xff]
        %v501 = vld [vmem:[%s3 + $0x60] sm:$0xff]
        %v502 = vld [vmem:[%s3 + $0x68] sm:$0xff]
        %v503 = vld [vmem:[%s3 + $0x70] sm:$0xff]
        %v504 = vld [vmem:[%s3 + $0x78] sm:$0xff]
        %v505 = vld [vmem:[%s3 + $0x80] sm:$0xff]
        %v506 = vld [vmem:[%s3 + $0x88] sm:$0xff]
        %v507 = vld [vmem:[%s3 + $0x90] sm:$0xff]
        %v508 = vld [vmem:[%s3 + $0x98] sm:$0xff]
        %v509 = vld [vmem:[%s3 + $0xa0] sm:$0xff]
        %v510 = vld [vmem:[%s3 + $0xa8] sm:$0xff]
        %v511 = vld [vmem:[%s3 + $0xb0] sm:$0xff]
        %v512 = vld [vmem:[%s3 + $0xb8] sm:$0xff]
        %v513 = vld [vmem:[%s3 + $0xc0] sm:$0xff]
        %v514 = vld [vmem:[%s3 + $0xc8] sm:$0xff]
        %v515 = vld [vmem:[%s3 + $0xd0] sm:$0xff]
        %v516 = vld [vmem:[%s3 + $0xd8] sm:$0xff]
        %v517 = vld [vmem:[%s3 + $0xe0] sm:$0xff]
        %v518 = vld [vmem:[%s3 + $0xe8] sm:$0xff]
        %v519 = vld [vmem:[%s3 + $0xf0] sm:$0xff]
        %v520 = vld [vmem:[%s3 + $0xf8] sm:$0xff]
        %v521 = vld [vmem:[%s3 + $0x100] sm:$0xff]
        %v522 = vld [vmem:[%s3 + $0x108] sm:$0xff]
        %v523 = vld [vmem:[%s3 + $0x110] sm:$0xff]
        %v524 = vld [vmem:[%s3 + $0x118] sm:$0xff]
        %v525 = vld [vmem:[%s3 + $0x120] sm:$0xff]
        %v526 = vld [vmem:[%s3 + $0x128] sm:$0xff]
        %v527 = vld [vmem:[%s3 + $0x130] sm:$0xff]
        %v528 = vld [vmem:[%s3 + $0x138] sm:$0xff]
        %v529 = vld [vmem:[%s3 + $0x140] sm:$0xff]
        %v530 = vld [vmem:[%s3 + $0x148] sm:$0xff]
        %v531 = vld [vmem:[%s3 + $0x150] sm:$0xff]
        %v532 = vld [vmem:[%s3 + $0x158] sm:$0xff]
        %v533 = vld [vmem:[%s3 + $0x160] sm:$0xff]
        %v534 = vld [vmem:[%s3 + $0x168] sm:$0xff]
        %v535 = vld [vmem:[%s3 + $0x170] sm:$0xff]
        %v536 = vld [vmem:[%s3 + $0x178] sm:$0xff]
        %v537 = vld [vmem:[%s3 + $0x180] sm:$0xff]
        %v538 = vld [vmem:[%s3 + $0x188] sm:$0xff]
        %v539 = vld [vmem:[%s3 + $0x190] sm:$0xff]
        %v540 = vld [vmem:[%s3 + $0x198] sm:$0xff]
        %v541 = vld [vmem:[%s3 + $0x1a0] sm:$0xff]
        %v542 = vld [vmem:[%s3 + $0x1a8] sm:$0xff]
        %v543 = vld [vmem:[%s3 + $0x1b0] sm:$0xff]
        %v544 = vld [vmem:[%s3 + $0x1b8] sm:$0xff]
        %v545 = vld [vmem:[%s3 + $0x1c0] sm:$0xff]
        %v546 = vld [vmem:[%s3 + $0x1c8] sm:$0xff]
        %v547 = vld [vmem:[%s3 + $0x1d0] sm:$0xff]
        %v548 = vld [vmem:[%s3 + $0x1d8] sm:$0xff]
        %v549 = vld [vmem:[%s3 + $0x1e0] sm:$0xff]
        %v550 = vld [vmem:[%s3 + $0x1e8] sm:$0xff]
        %v551 = vld [vmem:[%s3 + $0x1f0] sm:$0xff]
        %v552 = vld [vmem:[%s3 + $0x1f8] sm:$0xff]
        %v553 = vld [vmem:[%s3 + $0x200] sm:$0xff]
        %v554 = vld [vmem:[%s3 + $0x208] sm:$0xff]
        %v555 = vld [vmem:[%s3 + $0x210] sm:$0xff]
        %v556 = vld [vmem:[%s3 + $0x218] sm:$0xff]
        %v557 = vld [vmem:[%s3 + $0x220] sm:$0xff]
        %v558 = vld [vmem:[%s3 + $0x228] sm:$0xff]
        %v559 = vld [vmem:[%s3 + $0x230] sm:$0xff]
        %v560 = vld [vmem:[%s3 + $0x238] sm:$0xff]
        %v561 = vld [vmem:[%s3 + $0x240] sm:$0xff]
        %v562 = vld [vmem:[%s3 + $0x248] sm:$0xff]
        %v563 = vld [vmem:[%s3 + $0x250] sm:$0xff]
        %v564 = vld [vmem:[%s3 + $0x258] sm:$0xff]
        %v565 = vld [vmem:[%s3 + $0x260] sm:$0xff]
        %v566 = vld [vmem:[%s3 + $0x268] sm:$0xff]
        %v567 = vld [vmem:[%s3 + $0x270] sm:$0xff]
        %v568 = vld [vmem:[%s3 + $0x278] sm:$0xff]
        %v569 = vld [vmem:[%s3 + $0x280] sm:$0xff]
        %v570 = vld [vmem:[%s3 + $0x288] sm:$0xff]
        %v571 = vld [vmem:[%s3 + $0x290] sm:$0xff]
        %v572 = vld [vmem:[%s3 + $0x298] sm:$0xff]
        %v573 = vld [vmem:[%s3 + $0x2a0] sm:$0xff]
        %v574 = vld [vmem:[%s3 + $0x2a8] sm:$0xff]
        %v575 = vld [vmem:[%s3 + $0x2b0] sm:$0xff]
        %v576 = vld [vmem:[%s3 + $0x2b8] sm:$0xff]
        %v577 = vld [vmem:[%s3 + $0x2c0] sm:$0xff]
        %v578 = vld [vmem:[%s3 + $0x2c8] sm:$0xff]
        %v579 = vld [vmem:[%s3 + $0x2d0] sm:$0xff]
        %v580 = vld [vmem:[%s3 + $0x2d8] sm:$0xff]
        %v581 = vld [vmem:[%s3 + $0x2e0] sm:$0xff]
        %v582 = vld [vmem:[%s3 + $0x2e8] sm:$0xff]
        %v583 = vld [vmem:[%s3 + $0x2f0] sm:$0xff]
        %v584 = vld [vmem:[%s3 + $0x2f8] sm:$0xff]
        %v585 = vld [vmem:[%s3 + $0x300] sm:$0xff]
        %v586 = vld [vmem:[%s3 + $0x308] sm:$0xff]
        %v587 = vld [vmem:[%s3 + $0x310] sm:$0xff]
        %v588 = vld [vmem:[%s3 + $0x318] sm:$0xff]
        %v589 = vld [vmem:[%s3 + $0x320] sm:$0xff]
        %v590 = vld [vmem:[%s3 + $0x328] sm:$0xff]
        %v591 = vld [vmem:[%s3 + $0x330] sm:$0xff]
        %v592 = vld [vmem:[%s3 + $0x338] sm:$0xff]
        %v593 = vld [vmem:[%s3 + $0x340] sm:$0xff]
        %v594 = vld [vmem:[%s3 + $0x348] sm:$0xff]
        %v595 = vld [vmem:[%s3 + $0x350] sm:$0xff]
        %v596 = vld [vmem:[%s3 + $0x358] sm:$0xff]
        %v597 = vld [vmem:[%s3 + $0x360] sm:$0xff]
        %v598 = vld [vmem:[%s3 + $0x368] sm:$0xff]
        %v599 = vld [vmem:[%s3 + $0x370] sm:$0xff]
        %v600 = vld [vmem:[%s3 + $0x378] sm:$0xff]
        %v601 = vld [vmem:[%s3 + $0x380] sm:$0xff]
        %v602 = vld [vmem:[%s3 + $0x388] sm:$0xff]
        %v603 = vld [vmem:[%s3 + $0x390] sm:$0xff]
        %v604 = vld [vmem:[%s3 + $0x398] sm:$0xff]
        %v605 = vld [vmem:[%s3 + $0x3a0] sm:$0xff]
        %v606 = vld [vmem:[%s3 + $0x3a8] sm:$0xff]
        %v607 = vld [vmem:[%s3 + $0x3b0] sm:$0xff]
        %v608 = vld [vmem:[%s3 + $0x3b8] sm:$0xff]
        %v609 = vld [vmem:[%s3 + $0x3c0] sm:$0xff]
        %v610 = vld [vmem:[%s3 + $0x3c8] sm:$0xff]
        %v611 = vld [vmem:[%s3 + $0x3d0] sm:$0xff]
        %v612 = vld [vmem:[%s3 + $0x3d8] sm:$0xff]
        %v613 = vld [vmem:[%s3 + $0x3e0] sm:$0xff]
        %v614 = vld [vmem:[%s3 + $0x3e8] sm:$0xff]
        %v615 = vld [vmem:[%s3 + $0x3f0] sm:$0xff]
        %v616 = vld [vmem:[%s3 + $0x3f8] sm:$0xff]
        %v617 = vld [vmem:[%s3 + $0x400] sm:$0xff]
        %v618 = vld [vmem:[%s3 + $0x408] sm:$0xff]
        %v619 = vld [vmem:[%s3 + $0x410] sm:$0xff]
        %v620 = vld [vmem:[%s3 + $0x418] sm:$0xff]
        %v621 = vld [vmem:[%s3 + $0x420] sm:$0xff]
        %v622 = vld [vmem:[%s3 + $0x428] sm:$0xff]
        %v623 = vld [vmem:[%s3 + $0x430] sm:$0xff]
        %v624 = vld [vmem:[%s3 + $0x438] sm:$0xff]
        %v625 = vld [vmem:[%s3 + $0x440] sm:$0xff]
        %v626 = vld [vmem:[%s3 + $0x448] sm:$0xff]
        %v627 = vld [vmem:[%s3 + $0x450] sm:$0xff]
        %v628 = vld [vmem:[%s3 + $0x458] sm:$0xff]
        %v629 = vld [vmem:[%s3 + $0x460] sm:$0xff]
        %v630 = vld [vmem:[%s3 + $0x468] sm:$0xff]
        %v631 = vld [vmem:[%s3 + $0x470] sm:$0xff]
        %v632 = vld [vmem:[%s3 + $0x478] sm:$0xff]
        %v777 = vunpack.c.l.b16 %v489
        %v778 = vunpack.c.h.b16 %v489
        %v779 = vunpack.c.l.b16 %v490
        %v780 = vunpack.c.h.b16 %v490
        %v781 = vunpack.c.l.b16 %v491
        %v782 = vunpack.c.h.b16 %v491
        %v783 = vunpack.c.l.b16 %v492
        %v784 = vunpack.c.h.b16 %v492
        %v785 = vunpack.c.l.b16 %v493
        %v786 = vunpack.c.h.b16 %v493
        %v787 = vunpack.c.l.b16 %v494
        %v788 = vunpack.c.h.b16 %v494
        %v789 = vunpack.c.l.b16 %v495
        %v790 = vunpack.c.h.b16 %v495
        %v791 = vunpack.c.l.b16 %v496
        %v792 = vunpack.c.h.b16 %v496
        %v793 = vunpack.c.l.b16 %v497
        %v794 = vunpack.c.h.b16 %v497
        %v795 = vunpack.c.l.b16 %v498
        %v796 = vunpack.c.h.b16 %v498
        %v797 = vunpack.c.l.b16 %v499
        %v798 = vunpack.c.h.b16 %v499
        %v799 = vunpack.c.l.b16 %v500
        %v800 = vunpack.c.h.b16 %v500
        %v801 = vunpack.c.l.b16 %v501
        %v802 = vunpack.c.h.b16 %v501
        %v803 = vunpack.c.l.b16 %v502
        %v804 = vunpack.c.h.b16 %v502
        %v805 = vunpack.c.l.b16 %v503
        %v806 = vunpack.c.h.b16 %v503
        %v807 = vunpack.c.l.b16 %v504
        %v808 = vunpack.c.h.b16 %v504
        %v809 = vunpack.c.l.b16 %v505
        %v810 = vunpack.c.h.b16 %v505
        %v811 = vunpack.c.l.b16 %v506
        %v812 = vunpack.c.h.b16 %v506
        %v813 = vunpack.c.l.b16 %v507
        %v814 = vunpack.c.h.b16 %v507
        %v815 = vunpack.c.l.b16 %v508
        %v816 = vunpack.c.h.b16 %v508
        %v817 = vunpack.c.l.b16 %v509
        %v818 = vunpack.c.h.b16 %v509
        %v819 = vunpack.c.l.b16 %v510
        %v820 = vunpack.c.h.b16 %v510
        %v821 = vunpack.c.l.b16 %v511
        %v822 = vunpack.c.h.b16 %v511
        %v823 = vunpack.c.l.b16 %v512
        %v824 = vunpack.c.h.b16 %v512
        %v825 = vunpack.c.l.b16 %v513
        %v826 = vunpack.c.h.b16 %v513
        %v827 = vunpack.c.l.b16 %v514
        %v828 = vunpack.c.h.b16 %v514
        %v829 = vunpack.c.l.b16 %v515
        %v830 = vunpack.c.h.b16 %v515
        %v831 = vunpack.c.l.b16 %v516
        %v832 = vunpack.c.h.b16 %v516
        %v833 = vunpack.c.l.b16 %v517
        %v834 = vunpack.c.h.b16 %v517
        %v835 = vunpack.c.l.b16 %v518
        %v836 = vunpack.c.h.b16 %v518
        %v837 = vunpack.c.l.b16 %v519
        %v838 = vunpack.c.h.b16 %v519
        %v839 = vunpack.c.l.b16 %v520
        %v840 = vunpack.c.h.b16 %v520
        %v841 = vunpack.c.l.b16 %v521
        %v842 = vunpack.c.h.b16 %v521
        %v843 = vunpack.c.l.b16 %v522
        %v844 = vunpack.c.h.b16 %v522
        %v845 = vunpack.c.l.b16 %v523
        %v846 = vunpack.c.h.b16 %v523
        %v847 = vunpack.c.l.b16 %v524
        %v848 = vunpack.c.h.b16 %v524
        %v849 = vunpack.c.l.b16 %v525
        %v850 = vunpack.c.h.b16 %v525
        %v851 = vunpack.c.l.b16 %v526
        %v852 = vunpack.c.h.b16 %v526
        %v853 = vunpack.c.l.b16 %v527
        %v854 = vunpack.c.h.b16 %v527
        %v855 = vunpack.c.l.b16 %v528
        %v856 = vunpack.c.h.b16 %v528
        %v857 = vunpack.c.l.b16 %v529
        %v858 = vunpack.c.h.b16 %v529
        %v859 = vunpack.c.l.b16 %v530
        %v860 = vunpack.c.h.b16 %v530
        %v861 = vunpack.c.l.b16 %v531
        %v862 = vunpack.c.h.b16 %v531
        %v863 = vunpack.c.l.b16 %v532
        %v864 = vunpack.c.h.b16 %v532
        %v865 = vunpack.c.l.b16 %v533
        %v866 = vunpack.c.h.b16 %v533
        %v867 = vunpack.c.l.b16 %v534
        %v868 = vunpack.c.h.b16 %v534
        %v869 = vunpack.c.l.b16 %v535
        %v870 = vunpack.c.h.b16 %v535
        %v871 = vunpack.c.l.b16 %v536
        %v872 = vunpack.c.h.b16 %v536
        %v873 = vunpack.c.l.b16 %v537
        %v874 = vunpack.c.h.b16 %v537
        %v875 = vunpack.c.l.b16 %v538
        %v876 = vunpack.c.h.b16 %v538
        %v877 = vunpack.c.l.b16 %v539
        %v878 = vunpack.c.h.b16 %v539
        %v879 = vunpack.c.l.b16 %v540
        %v880 = vunpack.c.h.b16 %v540
        %v881 = vunpack.c.l.b16 %v541
        %v882 = vunpack.c.h.b16 %v541
        %v883 = vunpack.c.l.b16 %v542
        %v884 = vunpack.c.h.b16 %v542
        %v885 = vunpack.c.l.b16 %v543
        %v886 = vunpack.c.h.b16 %v543
        %v887 = vunpack.c.l.b16 %v544
        %v888 = vunpack.c.h.b16 %v544
        %v889 = vunpack.c.l.b16 %v545
        %v890 = vunpack.c.h.b16 %v545
        %v891 = vunpack.c.l.b16 %v546
        %v892 = vunpack.c.h.b16 %v546
        %v893 = vunpack.c.l.b16 %v547
        %v894 = vunpack.c.h.b16 %v547
        %v895 = vunpack.c.l.b16 %v548
        %v896 = vunpack.c.h.b16 %v548
        %v897 = vunpack.c.l.b16 %v549
        %v898 = vunpack.c.h.b16 %v549
        %v899 = vunpack.c.l.b16 %v550
        %v900 = vunpack.c.h.b16 %v550
        %v901 = vunpack.c.l.b16 %v551
        %v902 = vunpack.c.h.b16 %v551
        %v903 = vunpack.c.l.b16 %v552
        %v904 = vunpack.c.h.b16 %v552
        %v905 = vunpack.c.l.b16 %v553
        %v906 = vunpack.c.h.b16 %v553
        %v907 = vunpack.c.l.b16 %v554
        %v908 = vunpack.c.h.b16 %v554
        %v909 = vunpack.c.l.b16 %v555
        %v910 = vunpack.c.h.b16 %v555
        %v911 = vunpack.c.l.b16 %v556
        %v912 = vunpack.c.h.b16 %v556
        %v913 = vunpack.c.l.b16 %v557
        %v914 = vunpack.c.h.b16 %v557
        %v915 = vunpack.c.l.b16 %v558
        %v916 = vunpack.c.h.b16 %v558
        %v917 = vunpack.c.l.b16 %v559
        %v918 = vunpack.c.h.b16 %v559
        %v919 = vunpack.c.l.b16 %v560
        %v920 = vunpack.c.h.b16 %v560
        %v921 = vunpack.c.l.b16 %v561
        %v922 = vunpack.c.h.b16 %v561
        %v923 = vunpack.c.l.b16 %v562
        %v924 = vunpack.c.h.b16 %v562
        %v925 = vunpack.c.l.b16 %v563
        %v926 = vunpack.c.h.b16 %v563
        %v927 = vunpack.c.l.b16 %v564
        %v928 = vunpack.c.h.b16 %v564
        %v929 = vunpack.c.l.b16 %v565
        %v930 = vunpack.c.h.b16 %v565
        %v931 = vunpack.c.l.b16 %v566
        %v932 = vunpack.c.h.b16 %v566
        %v933 = vunpack.c.l.b16 %v567
        %v934 = vunpack.c.h.b16 %v567
        %v935 = vunpack.c.l.b16 %v568
        %v936 = vunpack.c.h.b16 %v568
        %v937 = vunpack.c.l.b16 %v569
        %v938 = vunpack.c.h.b16 %v569
        %v939 = vunpack.c.l.b16 %v570
        %v940 = vunpack.c.h.b16 %v570
        %v941 = vunpack.c.l.b16 %v571
        %v942 = vunpack.c.h.b16 %v571
        %v943 = vunpack.c.l.b16 %v572
        %v944 = vunpack.c.h.b16 %v572
        %v945 = vunpack.c.l.b16 %v573
        %v946 = vunpack.c.h.b16 %v573
        %v947 = vunpack.c.l.b16 %v574
        %v948 = vunpack.c.h.b16 %v574
        %v949 = vunpack.c.l.b16 %v575
        %v950 = vunpack.c.h.b16 %v575
        %v951 = vunpack.c.l.b16 %v576
        %v952 = vunpack.c.h.b16 %v576
        %v953 = vunpack.c.l.b16 %v577
        %v954 = vunpack.c.h.b16 %v577
        %v955 = vunpack.c.l.b16 %v578
        %v956 = vunpack.c.h.b16 %v578
        %v957 = vunpack.c.l.b16 %v579
        %v958 = vunpack.c.h.b16 %v579
        %v959 = vunpack.c.l.b16 %v580
        %v960 = vunpack.c.h.b16 %v580
        %v961 = vunpack.c.l.b16 %v581
        %v962 = vunpack.c.h.b16 %v581
        %v963 = vunpack.c.l.b16 %v582
        %v964 = vunpack.c.h.b16 %v582
        %v965 = vunpack.c.l.b16 %v583
        %v966 = vunpack.c.h.b16 %v583
        %v967 = vunpack.c.l.b16 %v584
        %v968 = vunpack.c.h.b16 %v584
        %v969 = vunpack.c.l.b16 %v585
        %v970 = vunpack.c.h.b16 %v585
        %v971 = vunpack.c.l.b16 %v586
        %v972 = vunpack.c.h.b16 %v586
        %v973 = vunpack.c.l.b16 %v587
        %v974 = vunpack.c.h.b16 %v587
        %v975 = vunpack.c.l.b16 %v588
        %v976 = vunpack.c.h.b16 %v588
        %v977 = vunpack.c.l.b16 %v589
        %v978 = vunpack.c.h.b16 %v589
        %v979 = vunpack.c.l.b16 %v590
        %v980 = vunpack.c.h.b16 %v590
        %v981 = vunpack.c.l.b16 %v591
        %v982 = vunpack.c.h.b16 %v591
        %v983 = vunpack.c.l.b16 %v592
        %v984 = vunpack.c.h.b16 %v592
        %v985 = vunpack.c.l.b16 %v593
        %v986 = vunpack.c.h.b16 %v593
        %v987 = vunpack.c.l.b16 %v594
        %v988 = vunpack.c.h.b16 %v594
        %v989 = vunpack.c.l.b16 %v595
        %v990 = vunpack.c.h.b16 %v595
        %v991 = vunpack.c.l.b16 %v596
        %v992 = vunpack.c.h.b16 %v596
        %v993 = vunpack.c.l.b16 %v597
        %v994 = vunpack.c.h.b16 %v597
        %v995 = vunpack.c.l.b16 %v598
        %v996 = vunpack.c.h.b16 %v598
        %v997 = vunpack.c.l.b16 %v599
        %v998 = vunpack.c.h.b16 %v599
        %v999 = vunpack.c.l.b16 %v600
        %v1000 = vunpack.c.h.b16 %v600
        %v1001 = vunpack.c.l.b16 %v601
        %v1002 = vunpack.c.h.b16 %v601
        %v1003 = vunpack.c.l.b16 %v602
        %v1004 = vunpack.c.h.b16 %v602
        %v1005 = vunpack.c.l.b16 %v603
        %v1006 = vunpack.c.h.b16 %v603
        %v1007 = vunpack.c.l.b16 %v604
        %v1008 = vunpack.c.h.b16 %v604
        %v1009 = vunpack.c.l.b16 %v605
        %v1010 = vunpack.c.h.b16 %v605
        %v1011 = vunpack.c.l.b16 %v606
        %v1012 = vunpack.c.h.b16 %v606
        %v1013 = vunpack.c.l.b16 %v607
        %v1014 = vunpack.c.h.b16 %v607
        %v1015 = vunpack.c.l.b16 %v608
        %v1016 = vunpack.c.h.b16 %v608
        %v1017 = vunpack.c.l.b16 %v609
        %v1018 = vunpack.c.h.b16 %v609
        %v1019 = vunpack.c.l.b16 %v610
        %v1020 = vunpack.c.h.b16 %v610
        %v1021 = vunpack.c.l.b16 %v611
        %v1022 = vunpack.c.h.b16 %v611
        %v1023 = vunpack.c.l.b16 %v612
        %v1024 = vunpack.c.h.b16 %v612
        %v1025 = vunpack.c.l.b16 %v613
        %v1026 = vunpack.c.h.b16 %v613
        %v1027 = vunpack.c.l.b16 %v614
        %v1028 = vunpack.c.h.b16 %v614
        %v1029 = vunpack.c.l.b16 %v615
        %v1030 = vunpack.c.h.b16 %v615
        %v1031 = vunpack.c.l.b16 %v616
        %v1032 = vunpack.c.h.b16 %v616
        %v1033 = vunpack.c.l.b16 %v617
        %v1034 = vunpack.c.h.b16 %v617
        %v1035 = vunpack.c.l.b16 %v618
        %v1036 = vunpack.c.h.b16 %v618
        %v1037 = vunpack.c.l.b16 %v619
        %v1038 = vunpack.c.h.b16 %v619
        %v1039 = vunpack.c.l.b16 %v620
        %v1040 = vunpack.c.h.b16 %v620
        %v1041 = vunpack.c.l.b16 %v621
        %v1042 = vunpack.c.h.b16 %v621
        %v1043 = vunpack.c.l.b16 %v622
        %v1044 = vunpack.c.h.b16 %v622
        %v1045 = vunpack.c.l.b16 %v623
        %v1046 = vunpack.c.h.b16 %v623
        %v1047 = vunpack.c.l.b16 %v624
        %v1048 = vunpack.c.h.b16 %v624
        %v1049 = vunpack.c.l.b16 %v625
        %v1050 = vunpack.c.h.b16 %v625
        %v1051 = vunpack.c.l.b16 %v626
        %v1052 = vunpack.c.h.b16 %v626
        %v1053 = vunpack.c.l.b16 %v627
        %v1054 = vunpack.c.h.b16 %v627
        %v1055 = vunpack.c.l.b16 %v628
        %v1056 = vunpack.c.h.b16 %v628
        %v1057 = vunpack.c.l.b16 %v629
        %v1058 = vunpack.c.h.b16 %v629
        %v1059 = vunpack.c.l.b16 %v630
        %v1060 = vunpack.c.h.b16 %v630
        %v1061 = vunpack.c.l.b16 %v631
        %v1062 = vunpack.c.h.b16 %v631
        %v1063 = vunpack.c.l.b16 %v632
        %v1064 = vunpack.c.h.b16 %v632
        %v1065 = vpack.c.b16 %v789, %v777
        %v1066 = vpack.c.b16 %v790, %v778
        %v1067 = vpack.c.b16 %v791, %v779
        %v1068 = vpack.c.b16 %v792, %v780
        %v1069 = vpack.c.b16 %v793, %v781
        %v1070 = vpack.c.b16 %v794, %v782
        %v1071 = vpack.c.b16 %v795, %v783
        %v1072 = vpack.c.b16 %v796, %v784
        %v1073 = vpack.c.b16 %v797, %v785
        %v1074 = vpack.c.b16 %v798, %v786
        %v1075 = vpack.c.b16 %v799, %v787
        %v1076 = vpack.c.b16 %v800, %v788
        %v1077 = vpack.c.b16 %v813, %v801
        %v1078 = vpack.c.b16 %v814, %v802
        %v1079 = vpack.c.b16 %v815, %v803
        %v1080 = vpack.c.b16 %v816, %v804
        %v1081 = vpack.c.b16 %v817, %v805
        %v1082 = vpack.c.b16 %v818, %v806
        %v1083 = vpack.c.b16 %v819, %v807
        %v1084 = vpack.c.b16 %v820, %v808
        %v1085 = vpack.c.b16 %v821, %v809
        %v1086 = vpack.c.b16 %v822, %v810
        %v1087 = vpack.c.b16 %v823, %v811
        %v1088 = vpack.c.b16 %v824, %v812
        %v1089 = vpack.c.b16 %v837, %v825
        %v1090 = vpack.c.b16 %v838, %v826
        %v1091 = vpack.c.b16 %v839, %v827
        %v1092 = vpack.c.b16 %v840, %v828
        %v1093 = vpack.c.b16 %v841, %v829
        %v1094 = vpack.c.b16 %v842, %v830
        %v1095 = vpack.c.b16 %v843, %v831
        %v1096 = vpack.c.b16 %v844, %v832
        %v1097 = vpack.c.b16 %v845, %v833
        %v1098 = vpack.c.b16 %v846, %v834
        %v1099 = vpack.c.b16 %v847, %v835
        %v1100 = vpack.c.b16 %v848, %v836
        %v1101 = vpack.c.b16 %v861, %v849
        %v1102 = vpack.c.b16 %v862, %v850
        %v1103 = vpack.c.b16 %v863, %v851
        %v1104 = vpack.c.b16 %v864, %v852
        %v1105 = vpack.c.b16 %v865, %v853
        %v1106 = vpack.c.b16 %v866, %v854
        %v1107 = vpack.c.b16 %v867, %v855
        %v1108 = vpack.c.b16 %v868, %v856
        %v1109 = vpack.c.b16 %v869, %v857
        %v1110 = vpack.c.b16 %v870, %v858
        %v1111 = vpack.c.b16 %v871, %v859
        %v1112 = vpack.c.b16 %v872, %v860
        %v1113 = vpack.c.b16 %v885, %v873
        %v1114 = vpack.c.b16 %v886, %v874
        %v1115 = vpack.c.b16 %v887, %v875
        %v1116 = vpack.c.b16 %v888, %v876
        %v1117 = vpack.c.b16 %v889, %v877
        %v1118 = vpack.c.b16 %v890, %v878
        %v1119 = vpack.c.b16 %v891, %v879
        %v1120 = vpack.c.b16 %v892, %v880
        %v1121 = vpack.c.b16 %v893, %v881
        %v1122 = vpack.c.b16 %v894, %v882
        %v1123 = vpack.c.b16 %v895, %v883
        %v1124 = vpack.c.b16 %v896, %v884
        %v1125 = vpack.c.b16 %v909, %v897
        %v1126 = vpack.c.b16 %v910, %v898
        %v1127 = vpack.c.b16 %v911, %v899
        %v1128 = vpack.c.b16 %v912, %v900
        %v1129 = vpack.c.b16 %v913, %v901
        %v1130 = vpack.c.b16 %v914, %v902
        %v1131 = vpack.c.b16 %v915, %v903
        %v1132 = vpack.c.b16 %v916, %v904
        %v1133 = vpack.c.b16 %v917, %v905
        %v1134 = vpack.c.b16 %v918, %v906
        %v1135 = vpack.c.b16 %v919, %v907
        %v1136 = vpack.c.b16 %v920, %v908
        %v1137 = vpack.c.b16 %v933, %v921
        %v1138 = vpack.c.b16 %v934, %v922
        %v1139 = vpack.c.b16 %v935, %v923
        %v1140 = vpack.c.b16 %v936, %v924
        %v1141 = vpack.c.b16 %v937, %v925
        %v1142 = vpack.c.b16 %v938, %v926
        %v1143 = vpack.c.b16 %v939, %v927
        %v1144 = vpack.c.b16 %v940, %v928
        %v1145 = vpack.c.b16 %v941, %v929
        %v1146 = vpack.c.b16 %v942, %v930
        %v1147 = vpack.c.b16 %v943, %v931
        %v1148 = vpack.c.b16 %v944, %v932
        %v1149 = vpack.c.b16 %v957, %v945
        %v1150 = vpack.c.b16 %v958, %v946
        %v1151 = vpack.c.b16 %v959, %v947
        %v1152 = vpack.c.b16 %v960, %v948
        %v1153 = vpack.c.b16 %v961, %v949
        %v1154 = vpack.c.b16 %v962, %v950
        %v1155 = vpack.c.b16 %v963, %v951
        %v1156 = vpack.c.b16 %v964, %v952
        %v1157 = vpack.c.b16 %v965, %v953
        %v1158 = vpack.c.b16 %v966, %v954
        %v1159 = vpack.c.b16 %v967, %v955
        %v1160 = vpack.c.b16 %v968, %v956
        %v1161 = vpack.c.b16 %v981, %v969
        %v1162 = vpack.c.b16 %v982, %v970
        %v1163 = vpack.c.b16 %v983, %v971
        %v1164 = vpack.c.b16 %v984, %v972
        %v1165 = vpack.c.b16 %v985, %v973
        %v1166 = vpack.c.b16 %v986, %v974
        %v1167 = vpack.c.b16 %v987, %v975
        %v1168 = vpack.c.b16 %v988, %v976
        %v1169 = vpack.c.b16 %v989, %v977
        %v1170 = vpack.c.b16 %v990, %v978
        %v1171 = vpack.c.b16 %v991, %v979
        %v1172 = vpack.c.b16 %v992, %v980
        %v1173 = vpack.c.b16 %v1005, %v993
        %v1174 = vpack.c.b16 %v1006, %v994
        %v1175 = vpack.c.b16 %v1007, %v995
        %v1176 = vpack.c.b16 %v1008, %v996
        %v1177 = vpack.c.b16 %v1009, %v997
        %v1178 = vpack.c.b16 %v1010, %v998
        %v1179 = vpack.c.b16 %v1011, %v999
        %v1180 = vpack.c.b16 %v1012, %v1000
        %v1181 = vpack.c.b16 %v1013, %v1001
        %v1182 = vpack.c.b16 %v1014, %v1002
        %v1183 = vpack.c.b16 %v1015, %v1003
        %v1184 = vpack.c.b16 %v1016, %v1004
        %v1185 = vpack.c.b16 %v1029, %v1017
        %v1186 = vpack.c.b16 %v1030, %v1018
        %v1187 = vpack.c.b16 %v1031, %v1019
        %v1188 = vpack.c.b16 %v1032, %v1020
        %v1189 = vpack.c.b16 %v1033, %v1021
        %v1190 = vpack.c.b16 %v1034, %v1022
        %v1191 = vpack.c.b16 %v1035, %v1023
        %v1192 = vpack.c.b16 %v1036, %v1024
        %v1193 = vpack.c.b16 %v1037, %v1025
        %v1194 = vpack.c.b16 %v1038, %v1026
        %v1195 = vpack.c.b16 %v1039, %v1027
        %v1196 = vpack.c.b16 %v1040, %v1028
        %v1197 = vpack.c.b16 %v1053, %v1041
        %v1198 = vpack.c.b16 %v1054, %v1042
        %v1199 = vpack.c.b16 %v1055, %v1043
        %v1200 = vpack.c.b16 %v1056, %v1044
        %v1201 = vpack.c.b16 %v1057, %v1045
        %v1202 = vpack.c.b16 %v1058, %v1046
        %v1203 = vpack.c.b16 %v1059, %v1047
        %v1204 = vpack.c.b16 %v1060, %v1048
        %v1205 = vpack.c.b16 %v1061, %v1049
        %v1206 = vpack.c.b16 %v1062, %v1050
        %v1207 = vpack.c.b16 %v1063, %v1051
        %v1208 = vpack.c.b16 %v1064, %v1052
        %v1354 = vsel %vm419, %v488, 0
        %1356 = vmatprep.subr.bf16.mxu0 %v1066
        %1357 = vmatpush1.bf16.msra.mxu0 %v1065
        %1358 = vmatprep.subr.bf16.mxu0 %v1078
        %1359 = vmatpush1.bf16.msra.mxu0 %v1077
        %1360 = vmatprep.subr.bf16.mxu0 %v1090
        %1361 = vmatpush1.bf16.msra.mxu0 %v1089
        %1362 = vmatprep.subr.bf16.mxu0 %v1102
        %1363 = vmatpush1.bf16.msra.mxu0 %v1101
        %1364 = vmatprep.subr.bf16.mxu0 %v1114
        %1365 = vmatpush1.bf16.msra.mxu0 %v1113
        %1366 = vmatprep.subr.bf16.mxu0 %v1126
        %1367 = vmatpush1.bf16.msra.mxu0 %v1125
        %1368 = vmatprep.subr.bf16.mxu0 %v1138
        %1369 = vmatpush1.bf16.msra.mxu0 %v1137
        %1370 = vmatprep.subr.bf16.mxu0 %v1150
        %1371 = vmatpush1.bf16.msra.mxu0 %v1149
        %1372 = vmatprep.subr.bf16.mxu0 %v1162
        %1373 = vmatpush1.bf16.msra.mxu0 %v1161
        %1374 = vmatprep.subr.bf16.mxu0 %v1174
        %1375 = vmatpush1.bf16.msra.mxu0 %v1173
        %1376 = vmatprep.subr.bf16.mxu0 %v1186
        %1377 = vmatpush1.bf16.msra.mxu0 %v1185
        %1378 = vmatprep.subr.bf16.mxu0 %v1198
        %1379 = vmatpush1.bf16.msra.mxu0 %v1197
        %1380 = vmatprep.subr.bf16.mxu0 0
        %1381 = vmatpush1.bf16.msra.mxu0 0
        %1382 = vmatprep.subr.bf16.mxu0 0
        %1383 = vmatpush1.bf16.msra.mxu0 0
        %1384 = vmatprep.subr.bf16.mxu0 0
        %1385 = vmatpush1.bf16.msra.mxu0 0
        %1386 = vmatprep.subr.bf16.mxu0 0
        %1387 = vmatpush1.bf16.msra.mxu0 0
        %1388 = vmatprep.mubr.bf16.mxu0 %v1354
        %1389 = vmatmul.mubr.bf16.gmra.mrb[0].mxu0 %v487
        %v1390 = vpop.f32.mrb[0].mxu0
        %v1391 = vadd.f32 0.0, %v1390
        %v1392 = vpop.f32.mrb[0].mxu0
        %v1393 = vadd.f32 0.0, %v1392
        %v1394 = vpop.f32.mrb[0].mxu0
        %v1395 = vadd.f32 0.0, %v1394
        %v1396 = vpop.f32.mrb[0].mxu0
        %v1397 = vadd.f32 0.0, %v1396
        %1398 = vdwg.mxu0
        %1399 = vmatprep.subr.bf16.mxu0 %v1068
        %1400 = vmatpush1.bf16.msra.mxu0 %v1067
        %1401 = vmatprep.subr.bf16.mxu0 %v1080
        %1402 = vmatpush1.bf16.msra.mxu0 %v1079
        %1403 = vmatprep.subr.bf16.mxu0 %v1092
        %1404 = vmatpush1.bf16.msra.mxu0 %v1091
        %1405 = vmatprep.subr.bf16.mxu0 %v1104
        %1406 = vmatpush1.bf16.msra.mxu0 %v1103
        %1407 = vmatprep.subr.bf16.mxu0 %v1116
        %1408 = vmatpush1.bf16.msra.mxu0 %v1115
        %1409 = vmatprep.subr.bf16.mxu0 %v1128
        %1410 = vmatpush1.bf16.msra.mxu0 %v1127
        %1411 = vmatprep.subr.bf16.mxu0 %v1140
        %1412 = vmatpush1.bf16.msra.mxu0 %v1139
        %1413 = vmatprep.subr.bf16.mxu0 %v1152
        %1414 = vmatpush1.bf16.msra.mxu0 %v1151
        %1415 = vmatprep.subr.bf16.mxu0 %v1164
        %1416 = vmatpush1.bf16.msra.mxu0 %v1163
        %1417 = vmatprep.subr.bf16.mxu0 %v1176
        %1418 = vmatpush1.bf16.msra.mxu0 %v1175
        %1419 = vmatprep.subr.bf16.mxu0 %v1188
        %1420 = vmatpush1.bf16.msra.mxu0 %v1187
        %1421 = vmatprep.subr.bf16.mxu0 %v1200
        %1422 = vmatpush1.bf16.msra.mxu0 %v1199
        %1423 = vmatprep.subr.bf16.mxu0 0
        %1424 = vmatpush1.bf16.msra.mxu0 0
        %1425 = vmatprep.subr.bf16.mxu0 0
        %1426 = vmatpush1.bf16.msra.mxu0 0
        %1427 = vmatprep.subr.bf16.mxu0 0
        %1428 = vmatpush1.bf16.msra.mxu0 0
        %1429 = vmatprep.subr.bf16.mxu0 0
        %1430 = vmatpush1.bf16.msra.mxu0 0
        %1431 = vmatprep.mubr.bf16.mxu0 %v1354
        %1432 = vmatmul.mubr.bf16.gmra.mrb[0].mxu0 %v487
        %v1433 = vpop.f32.mrb[0].mxu0
        %v1434 = vadd.f32 0.0, %v1433
        %v1435 = vpop.f32.mrb[0].mxu0
        %v1436 = vadd.f32 0.0, %v1435
        %v1437 = vpop.f32.mrb[0].mxu0
        %v1438 = vadd.f32 0.0, %v1437
        %v1439 = vpop.f32.mrb[0].mxu0
        %v1440 = vadd.f32 0.0, %v1439
        %1441 = vdwg.mxu0
        %1442 = vmatprep.subr.bf16.mxu0 %v1070
        %1443 = vmatpush1.bf16.msra.mxu0 %v1069
        %1444 = vmatprep.subr.bf16.mxu0 %v1082
        %1445 = vmatpush1.bf16.msra.mxu0 %v1081
        %1446 = vmatprep.subr.bf16.mxu0 %v1094
        %1447 = vmatpush1.bf16.msra.mxu0 %v1093
        %1448 = vmatprep.subr.bf16.mxu0 %v1106
        %1449 = vmatpush1.bf16.msra.mxu0 %v1105
        %1450 = vmatprep.subr.bf16.mxu0 %v1118
        %1451 = vmatpush1.bf16.msra.mxu0 %v1117
        %1452 = vmatprep.subr.bf16.mxu0 %v1130
        %1453 = vmatpush1.bf16.msra.mxu0 %v1129
        %1454 = vmatprep.subr.bf16.mxu0 %v1142
        %1455 = vmatpush1.bf16.msra.mxu0 %v1141
        %1456 = vmatprep.subr.bf16.mxu0 %v1154
        %1457 = vmatpush1.bf16.msra.mxu0 %v1153
        %1458 = vmatprep.subr.bf16.mxu0 %v1166
        %1459 = vmatpush1.bf16.msra.mxu0 %v1165
        %1460 = vmatprep.subr.bf16.mxu0 %v1178
        %1461 = vmatpush1.bf16.msra.mxu0 %v1177
        %1462 = vmatprep.subr.bf16.mxu0 %v1190
        %1463 = vmatpush1.bf16.msra.mxu0 %v1189
        %1464 = vmatprep.subr.bf16.mxu0 %v1202
        %1465 = vmatpush1.bf16.msra.mxu0 %v1201
        %1466 = vmatprep.subr.bf16.mxu0 0
        %1467 = vmatpush1.bf16.msra.mxu0 0
        %1468 = vmatprep.subr.bf16.mxu0 0
        %1469 = vmatpush1.bf16.msra.mxu0 0
        %1470 = vmatprep.subr.bf16.mxu0 0
        %1471 = vmatpush1.bf16.msra.mxu0 0
        %1472 = vmatprep.subr.bf16.mxu0 0
        %1473 = vmatpush1.bf16.msra.mxu0 0
        %1474 = vmatprep.mubr.bf16.mxu0 %v1354
        %1475 = vmatmul.mubr.bf16.gmra.mrb[0].mxu0 %v487
        %v1476 = vpop.f32.mrb[0].mxu0
        %v1477 = vadd.f32 0.0, %v1476
        %v1478 = vpop.f32.mrb[0].mxu0
        %v1479 = vadd.f32 0.0, %v1478
        %v1480 = vpop.f32.mrb[0].mxu0
        %v1481 = vadd.f32 0.0, %v1480
        %v1482 = vpop.f32.mrb[0].mxu0
        %v1483 = vadd.f32 0.0, %v1482
        %1484 = vdwg.mxu0
        %1485 = vmatprep.subr.bf16.mxu0 %v1072
        %1486 = vmatpush1.bf16.msra.mxu0 %v1071
        %1487 = vmatprep.subr.bf16.mxu0 %v1084
        %1488 = vmatpush1.bf16.msra.mxu0 %v1083
        %1489 = vmatprep.subr.bf16.mxu0 %v1096
        %1490 = vmatpush1.bf16.msra.mxu0 %v1095
        %1491 = vmatprep.subr.bf16.mxu0 %v1108
        %1492 = vmatpush1.bf16.msra.mxu0 %v1107
        %1493 = vmatprep.subr.bf16.mxu0 %v1120
        %1494 = vmatpush1.bf16.msra.mxu0 %v1119
        %1495 = vmatprep.subr.bf16.mxu0 %v1132
        %1496 = vmatpush1.bf16.msra.mxu0 %v1131
        %1497 = vmatprep.subr.bf16.mxu0 %v1144
        %1498 = vmatpush1.bf16.msra.mxu0 %v1143
        %1499 = vmatprep.subr.bf16.mxu0 %v1156
        %1500 = vmatpush1.bf16.msra.mxu0 %v1155
        %1501 = vmatprep.subr.bf16.mxu0 %v1168
        %1502 = vmatpush1.bf16.msra.mxu0 %v1167
        %1503 = vmatprep.subr.bf16.mxu0 %v1180
        %1504 = vmatpush1.bf16.msra.mxu0 %v1179
        %1505 = vmatprep.subr.bf16.mxu0 %v1192
        %1506 = vmatpush1.bf16.msra.mxu0 %v1191
        %1507 = vmatprep.subr.bf16.mxu0 %v1204
        %1508 = vmatpush1.bf16.msra.mxu0 %v1203
        %1509 = vmatprep.subr.bf16.mxu0 0
        %1510 = vmatpush1.bf16.msra.mxu0 0
        %1511 = vmatprep.subr.bf16.mxu0 0
        %1512 = vmatpush1.bf16.msra.mxu0 0
        %1513 = vmatprep.subr.bf16.mxu0 0
        %1514 = vmatpush1.bf16.msra.mxu0 0
        %1515 = vmatprep.subr.bf16.mxu0 0
        %1516 = vmatpush1.bf16.msra.mxu0 0
        %1517 = vmatprep.mubr.bf16.mxu0 %v1354
        %1518 = vmatmul.mubr.bf16.gmra.mrb[0].mxu0 %v487
        %v1519 = vpop.f32.mrb[0].mxu0
        %v1520 = vadd.f32 0.0, %v1519
        %v1521 = vpop.f32.mrb[0].mxu0
        %v1522 = vadd.f32 0.0, %v1521
        %v1523 = vpop.f32.mrb[0].mxu0
        %v1524 = vadd.f32 0.0, %v1523
        %v1525 = vpop.f32.mrb[0].mxu0
        %v1526 = vadd.f32 0.0, %v1525
        %1527 = vdwg.mxu0
        %1528 = vmatprep.subr.bf16.mxu0 %v1074
        %1529 = vmatpush1.bf16.msra.mxu0 %v1073
        %1530 = vmatprep.subr.bf16.mxu0 %v1086
        %1531 = vmatpush1.bf16.msra.mxu0 %v1085
        %1532 = vmatprep.subr.bf16.mxu0 %v1098
        %1533 = vmatpush1.bf16.msra.mxu0 %v1097
        %1534 = vmatprep.subr.bf16.mxu0 %v1110
        %1535 = vmatpush1.bf16.msra.mxu0 %v1109
        %1536 = vmatprep.subr.bf16.mxu0 %v1122
        %1537 = vmatpush1.bf16.msra.mxu0 %v1121
        %1538 = vmatprep.subr.bf16.mxu0 %v1134
        %1539 = vmatpush1.bf16.msra.mxu0 %v1133
        %1540 = vmatprep.subr.bf16.mxu0 %v1146
        %1541 = vmatpush1.bf16.msra.mxu0 %v1145
        %1542 = vmatprep.subr.bf16.mxu0 %v1158
        %1543 = vmatpush1.bf16.msra.mxu0 %v1157
        %1544 = vmatprep.subr.bf16.mxu0 %v1170
        %1545 = vmatpush1.bf16.msra.mxu0 %v1169
        %1546 = vmatprep.subr.bf16.mxu0 %v1182
        %1547 = vmatpush1.bf16.msra.mxu0 %v1181
        %1548 = vmatprep.subr.bf16.mxu0 %v1194
        %1549 = vmatpush1.bf16.msra.mxu0 %v1193
        %1550 = vmatprep.subr.bf16.mxu0 %v1206
        %1551 = vmatpush1.bf16.msra.mxu0 %v1205
        %1552 = vmatprep.subr.bf16.mxu0 0
        %1553 = vmatpush1.bf16.msra.mxu0 0
        %1554 = vmatprep.subr.bf16.mxu0 0
        %1555 = vmatpush1.bf16.msra.mxu0 0
        %1556 = vmatprep.subr.bf16.mxu0 0
        %1557 = vmatpush1.bf16.msra.mxu0 0
        %1558 = vmatprep.subr.bf16.mxu0 0
        %1559 = vmatpush1.bf16.msra.mxu0 0
        %1560 = vmatprep.mubr.bf16.mxu0 %v1354
        %1561 = vmatmul.mubr.bf16.gmra.mrb[0].mxu0 %v487
        %v1562 = vpop.f32.mrb[0].mxu0
        %v1563 = vadd.f32 0.0, %v1562
        %v1564 = vpop.f32.mrb[0].mxu0
        %v1565 = vadd.f32 0.0, %v1564
        %v1566 = vpop.f32.mrb[0].mxu0
        %v1567 = vadd.f32 0.0, %v1566
        %v1568 = vpop.f32.mrb[0].mxu0
        %v1569 = vadd.f32 0.0, %v1568
        %1570 = vdwg.mxu0
        %1571 = vmatprep.subr.bf16.mxu0 %v1076
        %1572 = vmatpush1.bf16.msra.mxu0 %v1075
        %1573 = vmatprep.subr.bf16.mxu0 %v1088
        %1574 = vmatpush1.bf16.msra.mxu0 %v1087
        %1575 = vmatprep.subr.bf16.mxu0 %v1100
        %1576 = vmatpush1.bf16.msra.mxu0 %v1099
        %1577 = vmatprep.subr.bf16.mxu0 %v1112
        %1578 = vmatpush1.bf16.msra.mxu0 %v1111
        %1579 = vmatprep.subr.bf16.mxu0 %v1124
        %1580 = vmatpush1.bf16.msra.mxu0 %v1123
        %1581 = vmatprep.subr.bf16.mxu0 %v1136
        %1582 = vmatpush1.bf16.msra.mxu0 %v1135
        %1583 = vmatprep.subr.bf16.mxu0 %v1148
        %1584 = vmatpush1.bf16.msra.mxu0 %v1147
        %1585 = vmatprep.subr.bf16.mxu0 %v1160
        %1586 = vmatpush1.bf16.msra.mxu0 %v1159
        %1587 = vmatprep.subr.bf16.mxu0 %v1172
        %1588 = vmatpush1.bf16.msra.mxu0 %v1171
        %1589 = vmatprep.subr.bf16.mxu0 %v1184
        %1590 = vmatpush1.bf16.msra.mxu0 %v1183
        %1591 = vmatprep.subr.bf16.mxu0 %v1196
        %1592 = vmatpush1.bf16.msra.mxu0 %v1195
        %1593 = vmatprep.subr.bf16.mxu0 %v1208
        %1594 = vmatpush1.bf16.msra.mxu0 %v1207
        %1595 = vmatprep.subr.bf16.mxu0 0
        %1596 = vmatpush1.bf16.msra.mxu0 0
        %1597 = vmatprep.subr.bf16.mxu0 0
        %1598 = vmatpush1.bf16.msra.mxu0 0
        %1599 = vmatprep.subr.bf16.mxu0 0
        %1600 = vmatpush1.bf16.msra.mxu0 0
        %1601 = vmatprep.subr.bf16.mxu0 0
        %1602 = vmatpush1.bf16.msra.mxu0 0
        %1603 = vmatprep.mubr.bf16.mxu0 %v1354
        %1604 = vmatmul.mubr.bf16.gmra.mrb[0].mxu0 %v487
        %v1605 = vpop.f32.mrb[0].mxu0
        %v1606 = vadd.f32 0.0, %v1605
        %v1607 = vpop.f32.mrb[0].mxu0
        %v1608 = vadd.f32 0.0, %v1607
        %v1609 = vpop.f32.mrb[0].mxu0
        %v1610 = vadd.f32 0.0, %v1609
        %v1611 = vpop.f32.mrb[0].mxu0
        %v1612 = vadd.f32 0.0, %v1611
        %1613 = vdwg.mxu0
        %v1614 = vld [vmem:[%s4] sm:$0xff]
        %v1615 = vld [vmem:[%s4 + $0x8] sm:$0xff]
        %v1616 = vld [vmem:[%s4 + $0x10] sm:$0xff]
        %v1617 = vld [vmem:[%s4 + $0x18] sm:$0xff]
        %v1618 = vld [vmem:[%s4 + $0x20] sm:$0xff]
        %v1619 = vld [vmem:[%s4 + $0x28] sm:$0xff]
        %v1620 = vld [vmem:[%s4 + $0x30] sm:$0xff]
        %v1621 = vld [vmem:[%s4 + $0x38] sm:$0xff]
        %v1622 = vld [vmem:[%s4 + $0x40] sm:$0xff]
        %v1623 = vld [vmem:[%s4 + $0x48] sm:$0xff]
        %v1624 = vld [vmem:[%s4 + $0x50] sm:$0xff]
        %v1625 = vld [vmem:[%s4 + $0x58] sm:$0xff]
        %v1626 = vld [vmem:[%s4 + $0x60] sm:$0xff]
        %v1627 = vld [vmem:[%s4 + $0x68] sm:$0xff]
        %v1628 = vld [vmem:[%s4 + $0x70] sm:$0xff]
        %v1629 = vld [vmem:[%s4 + $0x78] sm:$0xff]
        %v1630 = vld [vmem:[%s4 + $0x80] sm:$0xff]
        %v1631 = vld [vmem:[%s4 + $0x88] sm:$0xff]
        %v1632 = vld [vmem:[%s4 + $0x90] sm:$0xff]
        %v1633 = vld [vmem:[%s4 + $0x98] sm:$0xff]
        %v1634 = vld [vmem:[%s4 + $0xa0] sm:$0xff]
        %v1635 = vld [vmem:[%s4 + $0xa8] sm:$0xff]
        %v1636 = vld [vmem:[%s4 + $0xb0] sm:$0xff]
        %v1637 = vld [vmem:[%s4 + $0xb8] sm:$0xff]
        %v1638 = vld [vmem:[%s4 + $0xc0] sm:$0xff]
        %v1639 = vld [vmem:[%s4 + $0xc8] sm:$0xff]
        %v1640 = vld [vmem:[%s4 + $0xd0] sm:$0xff]
        %v1641 = vld [vmem:[%s4 + $0xd8] sm:$0xff]
        %v1642 = vld [vmem:[%s4 + $0xe0] sm:$0xff]
        %v1643 = vld [vmem:[%s4 + $0xe8] sm:$0xff]
        %v1644 = vld [vmem:[%s4 + $0xf0] sm:$0xff]
        %v1645 = vld [vmem:[%s4 + $0xf8] sm:$0xff]
        %v1646 = vld [vmem:[%s4 + $0x100] sm:$0xff]
        %v1647 = vld [vmem:[%s4 + $0x108] sm:$0xff]
        %v1648 = vld [vmem:[%s4 + $0x110] sm:$0xff]
        %v1649 = vld [vmem:[%s4 + $0x118] sm:$0xff]
        %v1650 = vld [vmem:[%s4 + $0x120] sm:$0xff]
        %v1651 = vld [vmem:[%s4 + $0x128] sm:$0xff]
        %v1652 = vld [vmem:[%s4 + $0x130] sm:$0xff]
        %v1653 = vld [vmem:[%s4 + $0x138] sm:$0xff]
        %v1654 = vld [vmem:[%s4 + $0x140] sm:$0xff]
        %v1655 = vld [vmem:[%s4 + $0x148] sm:$0xff]
        %v1656 = vld [vmem:[%s4 + $0x150] sm:$0xff]
        %v1657 = vld [vmem:[%s4 + $0x158] sm:$0xff]
        %v1658 = vld [vmem:[%s4 + $0x160] sm:$0xff]
        %v1659 = vld [vmem:[%s4 + $0x168] sm:$0xff]
        %v1660 = vld [vmem:[%s4 + $0x170] sm:$0xff]
        %v1661 = vld [vmem:[%s4 + $0x178] sm:$0xff]
        %v1662 = vld [vmem:[%s4 + $0x180] sm:$0xff]
        %v1663 = vld [vmem:[%s4 + $0x188] sm:$0xff]
        %v1664 = vld [vmem:[%s4 + $0x190] sm:$0xff]
        %v1665 = vld [vmem:[%s4 + $0x198] sm:$0xff]
        %v1666 = vld [vmem:[%s4 + $0x1a0] sm:$0xff]
        %v1667 = vld [vmem:[%s4 + $0x1a8] sm:$0xff]
        %v1668 = vld [vmem:[%s4 + $0x1b0] sm:$0xff]
        %v1669 = vld [vmem:[%s4 + $0x1b8] sm:$0xff]
        %v1670 = vld [vmem:[%s4 + $0x1c0] sm:$0xff]
        %v1671 = vld [vmem:[%s4 + $0x1c8] sm:$0xff]
        %v1672 = vld [vmem:[%s4 + $0x1d0] sm:$0xff]
        %v1673 = vld [vmem:[%s4 + $0x1d8] sm:$0xff]
        %v1674 = vld [vmem:[%s4 + $0x1e0] sm:$0xff]
        %v1675 = vld [vmem:[%s4 + $0x1e8] sm:$0xff]
        %v1676 = vld [vmem:[%s4 + $0x1f0] sm:$0xff]
        %v1677 = vld [vmem:[%s4 + $0x1f8] sm:$0xff]
        %v1678 = vpack.c.bf16 %v1395, %v1391
        %v1679 = vpack.c.bf16 %v1481, %v1477
        %v1680 = vpack.c.bf16 %v1567, %v1563
        %1681 = vmatprep.subr.bf16.mxu0 0
        %1682 = vmatpush1.bf16.xpose.msra.mxu0 %v1679
        %1683 = vmatprep.subr.bf16.mxu0 0
        %1684 = vmatpush1.bf16.xpose.msra.mxu0 0
        %1685 = vmatprep.subr.bf16.mxu0 0
        %1686 = vmatpush1.bf16.xpose.msra.mxu0 0
        %1687 = vmatprep.subr.bf16.mxu0 0
        %1688 = vmatpush1.bf16.xpose.msra.mxu0 0
        %1689 = vmatprep.subr.bf16.mxu0 0
        %1690 = vmatpush1.bf16.xpose.msra.mxu0 0
        %1691 = vmatprep.subr.bf16.mxu0 0
        %1692 = vmatpush1.bf16.xpose.msra.mxu0 0
        %1693 = vmatprep.subr.bf16.mxu0 0
        %1694 = vmatpush1.bf16.xpose.msra.mxu0 0
        %1695 = vmatprep.subr.bf16.mxu0 0
        %1696 = vmatpush1.bf16.xpose.msra.mxu0 0
        %1697 = vmatprep.subr.bf16.mxu0 0
        %1698 = vmatpush1.bf16.xpose.msra.mxu0 0
        %1699 = vmatprep.subr.bf16.mxu0 0
        %1700 = vmatpush1.bf16.xpose.msra.mxu0 0
        %1701 = vmatprep.subr.bf16.mxu0 0
        %1702 = vmatpush1.bf16.xpose.msra.mxu0 0
        %1703 = vmatprep.subr.bf16.mxu0 0
        %1704 = vmatpush1.bf16.xpose.msra.mxu0 0
        %1705 = vmatprep.subr.bf16.mxu0 0
        %1706 = vmatpush1.bf16.xpose.msra.mxu0 0
        %1707 = vmatprep.subr.bf16.mxu0 0
        %1708 = vmatpush1.bf16.xpose.msra.mxu0 0
        %1709 = vmatprep.subr.bf16.mxu0 0
        %1710 = vmatpush1.bf16.xpose.msra.mxu0 0
        %1711 = vmatprep.subr.bf16.mxu0 0
        %1712 = vmatpush1.bf16.xpose.msra.mxu0 0
        %1713 = vmatprep.mubr.bf16.mxu0 0
        %1714 = vmatmul.mubr.bf16.gmra.mrb[0].mxu0 %v1678
        %v1715 = vpop.f32.mrb[0].mxu0
        %v1716 = vadd.f32 0.0, %v1715
        %v1717 = vpop.f32.mrb[0].mxu0
        %v1718 = vpop.f32.mrb[0].mxu0
        %v1719 = vadd.f32 0.0, %v1718
        %v1720 = vpop.f32.mrb[0].mxu0
        %1721 = vdwg.mxu0
        %v1722 = vmul.f32 %v1716, 0.14433756
        %v1723 = vmul.f32 %v1719, 0.14433756
        %vm1724 = vcmask 130048
        %v1725 = vsel %vm1724, %v1722, -inf
        %1726 = vmax.xlane.f32.xlu0 %v1725
        %v1727 = vpop.xlane.xlu0 %1726
        %v1728 = vsel %vm1724, %v1723, -inf
        %1729 = vmax.xlane.f32.xlu0 %v1728
        %v1730 = vpop.xlane.xlu0 %1729
        %v1731 = vsub.f32 %v1722, %v1727
        %v1732 = vsub.f32 %v1723, %v1730
        %v1733 = vmul.f32 %v1731, 1.442695
        %v1734 = vpow.pop %v1733
        %v1735 = vmul.f32 %v1732, 1.442695
        %v1736 = vpow.pop %v1735
        %v1737 = vsel %vm1724, %v1734, 0.0
        %1738 = vadd.xlane.f32.xlu0 %v1737
        %v1739 = vpop.xlane.xlu0 %1738
        %v1740 = vsel %vm1724, %v1736, 0.0
        %1741 = vadd.xlane.f32.xlu0 %v1740
        %v1742 = vpop.xlane.xlu0 %1741
        %v1743 = vrcp.pop %v1739
        %v1744 = vrcp.pop %v1742
        %v1745 = vmul.f32 %v1734, %v1743
        %v1746 = vmul.f32 %v1736, %v1744
        %v1747 = vpack.c.bf16 %v1746, %v1745
        %v1749 = vsel %vm1724, %v1747, 0
        %1751 = vmatprep.subr.bf16.mxu0 0
        %1752 = vmatpush1.bf16.msra.mxu0 %v1680
        %1753 = vmatprep.subr.bf16.mxu0 0
        %1754 = vmatpush1.bf16.msra.mxu0 0
        %1755 = vmatprep.subr.bf16.mxu0 0
        %1756 = vmatpush1.bf16.msra.mxu0 0
        %1757 = vmatprep.subr.bf16.mxu0 0
        %1758 = vmatpush1.bf16.msra.mxu0 0
        %1759 = vmatprep.subr.bf16.mxu0 0
        %1760 = vmatpush1.bf16.msra.mxu0 0
        %1761 = vmatprep.subr.bf16.mxu0 0
        %1762 = vmatpush1.bf16.msra.mxu0 0
        %1763 = vmatprep.subr.bf16.mxu0 0
        %1764 = vmatpush1.bf16.msra.mxu0 0
        %1765 = vmatprep.subr.bf16.mxu0 0
        %1766 = vmatpush1.bf16.msra.mxu0 0
        %1767 = vmatprep.subr.bf16.mxu0 0
        %1768 = vmatpush1.bf16.msra.mxu0 0
        %1769 = vmatprep.subr.bf16.mxu0 0
        %1770 = vmatpush1.bf16.msra.mxu0 0
        %1771 = vmatprep.subr.bf16.mxu0 0
        %1772 = vmatpush1.bf16.msra.mxu0 0
        %1773 = vmatprep.subr.bf16.mxu0 0
        %1774 = vmatpush1.bf16.msra.mxu0 0
        %1775 = vmatprep.subr.bf16.mxu0 0
        %1776 = vmatpush1.bf16.msra.mxu0 0
        %1777 = vmatprep.subr.bf16.mxu0 0
        %1778 = vmatpush1.bf16.msra.mxu0 0
        %1779 = vmatprep.subr.bf16.mxu0 0
        %1780 = vmatpush1.bf16.msra.mxu0 0
        %1781 = vmatprep.subr.bf16.mxu0 0
        %1782 = vmatpush1.bf16.msra.mxu0 0
        %1783 = vmatprep.mubr.bf16.mxu0 0
        %1784 = vmatmul.mubr.bf16.gmra.mrb[0].mxu0 %v1749
        %v1785 = vpop.f32.mrb[0].mxu0
        %v1786 = vadd.f32 0.0, %v1785
        %v1787 = vpop.f32.mrb[0].mxu0
        %v1788 = vpop.f32.mrb[0].mxu0
        %v1789 = vadd.f32 0.0, %v1788
        %v1790 = vpop.f32.mrb[0].mxu0
        %1791 = vdwg.mxu0
        %v1792 = vpack.c.bf16 %v1789, %v1786
        %v1793 = vpack.c.bf16 %v1397, %v1393
        %v1794 = vpack.c.bf16 %v1483, %v1479
        %v1795 = vpack.c.bf16 %v1569, %v1565
        %1796 = vmatprep.subr.bf16.mxu0 0
        %1797 = vmatpush1.bf16.xpose.msra.mxu0 %v1794
        %1798 = vmatprep.subr.bf16.mxu0 0
        %1799 = vmatpush1.bf16.xpose.msra.mxu0 0
        %1800 = vmatprep.subr.bf16.mxu0 0
        %1801 = vmatpush1.bf16.xpose.msra.mxu0 0
        %1802 = vmatprep.subr.bf16.mxu0 0
        %1803 = vmatpush1.bf16.xpose.msra.mxu0 0
        %1804 = vmatprep.subr.bf16.mxu0 0
        %1805 = vmatpush1.bf16.xpose.msra.mxu0 0
        %1806 = vmatprep.subr.bf16.mxu0 0
        %1807 = vmatpush1.bf16.xpose.msra.mxu0 0
        %1808 = vmatprep.subr.bf16.mxu0 0
        %1809 = vmatpush1.bf16.xpose.msra.mxu0 0
        %1810 = vmatprep.subr.bf16.mxu0 0
        %1811 = vmatpush1.bf16.xpose.msra.mxu0 0
        %1812 = vmatprep.subr.bf16.mxu0 0
        %1813 = vmatpush1.bf16.xpose.msra.mxu0 0
        %1814 = vmatprep.subr.bf16.mxu0 0
        %1815 = vmatpush1.bf16.xpose.msra.mxu0 0
        %1816 = vmatprep.subr.bf16.mxu0 0
        %1817 = vmatpush1.bf16.xpose.msra.mxu0 0
        %1818 = vmatprep.subr.bf16.mxu0 0
        %1819 = vmatpush1.bf16.xpose.msra.mxu0 0
        %1820 = vmatprep.subr.bf16.mxu0 0
        %1821 = vmatpush1.bf16.xpose.msra.mxu0 0
        %1822 = vmatprep.subr.bf16.mxu0 0
        %1823 = vmatpush1.bf16.xpose.msra.mxu0 0
        %1824 = vmatprep.subr.bf16.mxu0 0
        %1825 = vmatpush1.bf16.xpose.msra.mxu0 0
        %1826 = vmatprep.subr.bf16.mxu0 0
        %1827 = vmatpush1.bf16.xpose.msra.mxu0 0
        %1828 = vmatprep.mubr.bf16.mxu0 0
        %1829 = vmatmul.mubr.bf16.gmra.mrb[0].mxu0 %v1793
        %v1830 = vpop.f32.mrb[0].mxu0
        %v1831 = vadd.f32 0.0, %v1830
        %v1832 = vpop.f32.mrb[0].mxu0
        %v1833 = vpop.f32.mrb[0].mxu0
        %v1834 = vadd.f32 0.0, %v1833
        %v1835 = vpop.f32.mrb[0].mxu0
        %1836 = vdwg.mxu0
        %v1837 = vmul.f32 %v1831, 0.14433756
        %v1838 = vmul.f32 %v1834, 0.14433756
        %v1839 = vsel %vm1724, %v1837, -inf
        %1840 = vmax.xlane.f32.xlu0 %v1839
        %v1841 = vpop.xlane.xlu0 %1840
        %v1842 = vsel %vm1724, %v1838, -inf
        %1843 = vmax.xlane.f32.xlu0 %v1842
        %v1844 = vpop.xlane.xlu0 %1843
        %v1845 = vsub.f32 %v1837, %v1841
        %v1846 = vsub.f32 %v1838, %v1844
        %v1847 = vmul.f32 %v1845, 1.442695
        %v1848 = vpow.pop %v1847
        %v1849 = vmul.f32 %v1846, 1.442695
        %v1850 = vpow.pop %v1849
        %v1851 = vsel %vm1724, %v1848, 0.0
        %1852 = vadd.xlane.f32.xlu0 %v1851
        %v1853 = vpop.xlane.xlu0 %1852
        %v1854 = vsel %vm1724, %v1850, 0.0
        %1855 = vadd.xlane.f32.xlu0 %v1854
        %v1856 = vpop.xlane.xlu0 %1855
        %v1857 = vrcp.pop %v1853
        %v1858 = vrcp.pop %v1856
        %v1859 = vmul.f32 %v1848, %v1857
        %v1860 = vmul.f32 %v1850, %v1858
        %v1861 = vpack.c.bf16 %v1860, %v1859
        %v1863 = vsel %vm1724, %v1861, 0
        %1865 = vmatprep.subr.bf16.mxu0 0
        %1866 = vmatpush1.bf16.msra.mxu0 %v1795
        %1867 = vmatprep.subr.bf16.mxu0 0
        %1868 = vmatpush1.bf16.msra.mxu0 0
        %1869 = vmatprep.subr.bf16.mxu0 0
        %1870 = vmatpush1.bf16.msra.mxu0 0
        %1871 = vmatprep.subr.bf16.mxu0 0
        %1872 = vmatpush1.bf16.msra.mxu0 0
        %1873 = vmatprep.subr.bf16.mxu0 0
        %1874 = vmatpush1.bf16.msra.mxu0 0
        %1875 = vmatprep.subr.bf16.mxu0 0
        %1876 = vmatpush1.bf16.msra.mxu0 0
        %1877 = vmatprep.subr.bf16.mxu0 0
        %1878 = vmatpush1.bf16.msra.mxu0 0
        %1879 = vmatprep.subr.bf16.mxu0 0
        %1880 = vmatpush1.bf16.msra.mxu0 0
        %1881 = vmatprep.subr.bf16.mxu0 0
        %1882 = vmatpush1.bf16.msra.mxu0 0
        %1883 = vmatprep.subr.bf16.mxu0 0
        %1884 = vmatpush1.bf16.msra.mxu0 0
        %1885 = vmatprep.subr.bf16.mxu0 0
        %1886 = vmatpush1.bf16.msra.mxu0 0
        %1887 = vmatprep.subr.bf16.mxu0 0
        %1888 = vmatpush1.bf16.msra.mxu0 0
        %1889 = vmatprep.subr.bf16.mxu0 0
        %1890 = vmatpush1.bf16.msra.mxu0 0
        %1891 = vmatprep.subr.bf16.mxu0 0
        %1892 = vmatpush1.bf16.msra.mxu0 0
        %1893 = vmatprep.subr.bf16.mxu0 0
        %1894 = vmatpush1.bf16.msra.mxu0 0
        %1895 = vmatprep.subr.bf16.mxu0 0
        %1896 = vmatpush1.bf16.msra.mxu0 0
        %1897 = vmatprep.mubr.bf16.mxu0 0
        %1898 = vmatmul.mubr.bf16.gmra.mrb[0].mxu0 %v1863
        %v1899 = vpop.f32.mrb[0].mxu0
        %v1900 = vadd.f32 0.0, %v1899
        %v1901 = vpop.f32.mrb[0].mxu0
        %v1902 = vpop.f32.mrb[0].mxu0
        %v1903 = vadd.f32 0.0, %v1902
        %v1904 = vpop.f32.mrb[0].mxu0
        %1905 = vdwg.mxu0
        %v1906 = vpack.c.bf16 %v1903, %v1900
        %v1923 = vunpack.c.l.b16 %v1630
        %v1924 = vunpack.c.h.b16 %v1630
        %v1925 = vunpack.c.l.b16 %v1631
        %v1926 = vunpack.c.h.b16 %v1631
        %v1927 = vunpack.c.l.b16 %v1632
        %v1928 = vunpack.c.h.b16 %v1632
        %v1929 = vunpack.c.l.b16 %v1633
        %v1930 = vunpack.c.h.b16 %v1633
        %v1931 = vunpack.c.l.b16 %v1634
        %v1932 = vunpack.c.h.b16 %v1634
        %v1933 = vunpack.c.l.b16 %v1635
        %v1934 = vunpack.c.h.b16 %v1635
        %v1935 = vunpack.c.l.b16 %v1636
        %v1936 = vunpack.c.h.b16 %v1636
        %v1937 = vunpack.c.l.b16 %v1637
        %v1938 = vunpack.c.h.b16 %v1637
        %v1939 = vunpack.c.l.b16 %v1638
        %v1940 = vunpack.c.h.b16 %v1638
        %v1941 = vunpack.c.l.b16 %v1639
        %v1942 = vunpack.c.h.b16 %v1639
        %v1943 = vunpack.c.l.b16 %v1640
        %v1944 = vunpack.c.h.b16 %v1640
        %v1945 = vunpack.c.l.b16 %v1641
        %v1946 = vunpack.c.h.b16 %v1641
        %v1947 = vunpack.c.l.b16 %v1642
        %v1948 = vunpack.c.h.b16 %v1642
        %v1949 = vunpack.c.l.b16 %v1643
        %v1950 = vunpack.c.h.b16 %v1643
        %v1951 = vunpack.c.l.b16 %v1644
        %v1952 = vunpack.c.h.b16 %v1644
        %v1953 = vunpack.c.l.b16 %v1645
        %v1954 = vunpack.c.h.b16 %v1645
        %v1955 = vpack.c.b16 %v1925, %v1923
        %v1956 = vpack.c.b16 %v1926, %v1924
        %v1957 = vpack.c.b16 %v1929, %v1927
        %v1958 = vpack.c.b16 %v1930, %v1928
        %v1959 = vpack.c.b16 %v1933, %v1931
        %v1960 = vpack.c.b16 %v1934, %v1932
        %v1961 = vpack.c.b16 %v1937, %v1935
        %v1962 = vpack.c.b16 %v1938, %v1936
        %v1963 = vpack.c.b16 %v1941, %v1939
        %v1964 = vpack.c.b16 %v1942, %v1940
        %v1965 = vpack.c.b16 %v1945, %v1943
        %v1966 = vpack.c.b16 %v1946, %v1944
        %v1967 = vpack.c.b16 %v1949, %v1947
        %v1968 = vpack.c.b16 %v1950, %v1948
        %v1969 = vpack.c.b16 %v1953, %v1951
        %v1970 = vpack.c.b16 %v1954, %v1952
        %1987 = vmatprep.subr.bf16.mxu0 %v1956
        %1988 = vmatpush1.bf16.msra.mxu0 %v1955
        %1989 = vmatprep.subr.bf16.mxu0 %v1958
        %1990 = vmatpush1.bf16.msra.mxu0 %v1957
        %1991 = vmatprep.subr.bf16.mxu0 %v1960
        %1992 = vmatpush1.bf16.msra.mxu0 %v1959
        %1993 = vmatprep.subr.bf16.mxu0 %v1962
        %1994 = vmatpush1.bf16.msra.mxu0 %v1961
        %1995 = vmatprep.subr.bf16.mxu0 %v1964
        %1996 = vmatpush1.bf16.msra.mxu0 %v1963
        %1997 = vmatprep.subr.bf16.mxu0 %v1966
        %1998 = vmatpush1.bf16.msra.mxu0 %v1965
        %1999 = vmatprep.subr.bf16.mxu0 %v1968
        %2000 = vmatpush1.bf16.msra.mxu0 %v1967
        %2001 = vmatprep.subr.bf16.mxu0 %v1970
        %2002 = vmatpush1.bf16.msra.mxu0 %v1969
        %2003 = vmatprep.subr.bf16.mxu0 0
        %2004 = vmatpush1.bf16.msra.mxu0 0
        %2005 = vmatprep.subr.bf16.mxu0 0
        %2006 = vmatpush1.bf16.msra.mxu0 0
        %2007 = vmatprep.subr.bf16.mxu0 0
        %2008 = vmatpush1.bf16.msra.mxu0 0
        %2009 = vmatprep.subr.bf16.mxu0 0
        %2010 = vmatpush1.bf16.msra.mxu0 0
        %2011 = vmatprep.subr.bf16.mxu0 0
        %2012 = vmatpush1.bf16.msra.mxu0 0
        %2013 = vmatprep.subr.bf16.mxu0 0
        %2014 = vmatpush1.bf16.msra.mxu0 0
        %2015 = vmatprep.subr.bf16.mxu0 0
        %2016 = vmatpush1.bf16.msra.mxu0 0
        %2017 = vmatprep.subr.bf16.mxu0 0
        %2018 = vmatpush1.bf16.msra.mxu0 0
        %2019 = vmatprep.mubr.bf16.mxu0 0
        %2020 = vmatmul.mubr.bf16.gmra.mrb[0].mxu0 %v1906
        %v2021 = vpop.f32.mrb[0].mxu0
        %v2022 = vadd.f32 0.0, %v2021
        %v2023 = vpop.f32.mrb[0].mxu0
        %v2024 = vadd.f32 0.0, %v2023
        %v2025 = vpop.f32.mrb[0].mxu0
        %v2026 = vadd.f32 0.0, %v2025
        %v2027 = vpop.f32.mrb[0].mxu0
        %v2028 = vadd.f32 0.0, %v2027
        %2029 = vdwg.mxu0
        %v2046 = vunpack.c.l.b16 %v1614
        %v2047 = vunpack.c.h.b16 %v1614
        %v2048 = vunpack.c.l.b16 %v1615
        %v2049 = vunpack.c.h.b16 %v1615
        %v2050 = vunpack.c.l.b16 %v1616
        %v2051 = vunpack.c.h.b16 %v1616
        %v2052 = vunpack.c.l.b16 %v1617
        %v2053 = vunpack.c.h.b16 %v1617
        %v2054 = vunpack.c.l.b16 %v1618
        %v2055 = vunpack.c.h.b16 %v1618
        %v2056 = vunpack.c.l.b16 %v1619
        %v2057 = vunpack.c.h.b16 %v1619
        %v2058 = vunpack.c.l.b16 %v1620
        %v2059 = vunpack.c.h.b16 %v1620
        %v2060 = vunpack.c.l.b16 %v1621
        %v2061 = vunpack.c.h.b16 %v1621
        %v2062 = vunpack.c.l.b16 %v1622
        %v2063 = vunpack.c.h.b16 %v1622
        %v2064 = vunpack.c.l.b16 %v1623
        %v2065 = vunpack.c.h.b16 %v1623
        %v2066 = vunpack.c.l.b16 %v1624
        %v2067 = vunpack.c.h.b16 %v1624
        %v2068 = vunpack.c.l.b16 %v1625
        %v2069 = vunpack.c.h.b16 %v1625
        %v2070 = vunpack.c.l.b16 %v1626
        %v2071 = vunpack.c.h.b16 %v1626
        %v2072 = vunpack.c.l.b16 %v1627
        %v2073 = vunpack.c.h.b16 %v1627
        %v2074 = vunpack.c.l.b16 %v1628
        %v2075 = vunpack.c.h.b16 %v1628
        %v2076 = vunpack.c.l.b16 %v1629
        %v2077 = vunpack.c.h.b16 %v1629
        %v2078 = vpack.c.b16 %v2048, %v2046
        %v2079 = vpack.c.b16 %v2049, %v2047
        %v2080 = vpack.c.b16 %v2052, %v2050
        %v2081 = vpack.c.b16 %v2053, %v2051
        %v2082 = vpack.c.b16 %v2056, %v2054
        %v2083 = vpack.c.b16 %v2057, %v2055
        %v2084 = vpack.c.b16 %v2060, %v2058
        %v2085 = vpack.c.b16 %v2061, %v2059
        %v2086 = vpack.c.b16 %v2064, %v2062
        %v2087 = vpack.c.b16 %v2065, %v2063
        %v2088 = vpack.c.b16 %v2068, %v2066
        %v2089 = vpack.c.b16 %v2069, %v2067
        %v2090 = vpack.c.b16 %v2072, %v2070
        %v2091 = vpack.c.b16 %v2073, %v2071
        %v2092 = vpack.c.b16 %v2076, %v2074
        %v2093 = vpack.c.b16 %v2077, %v2075
        %2110 = vmatprep.subr.bf16.mxu0 %v2079
        %2111 = vmatpush1.bf16.msra.mxu0 %v2078
        %2112 = vmatprep.subr.bf16.mxu0 %v2081
        %2113 = vmatpush1.bf16.msra.mxu0 %v2080
        %2114 = vmatprep.subr.bf16.mxu0 %v2083
        %2115 = vmatpush1.bf16.msra.mxu0 %v2082
        %2116 = vmatprep.subr.bf16.mxu0 %v2085
        %2117 = vmatpush1.bf16.msra.mxu0 %v2084
        %2118 = vmatprep.subr.bf16.mxu0 %v2087
        %2119 = vmatpush1.bf16.msra.mxu0 %v2086
        %2120 = vmatprep.subr.bf16.mxu0 %v2089
        %2121 = vmatpush1.bf16.msra.mxu0 %v2088
        %2122 = vmatprep.subr.bf16.mxu0 %v2091
        %2123 = vmatpush1.bf16.msra.mxu0 %v2090
        %2124 = vmatprep.subr.bf16.mxu0 %v2093
        %2125 = vmatpush1.bf16.msra.mxu0 %v2092
        %2126 = vmatprep.subr.bf16.mxu0 0
        %2127 = vmatpush1.bf16.msra.mxu0 0
        %2128 = vmatprep.subr.bf16.mxu0 0
        %2129 = vmatpush1.bf16.msra.mxu0 0
        %2130 = vmatprep.subr.bf16.mxu0 0
        %2131 = vmatpush1.bf16.msra.mxu0 0
        %2132 = vmatprep.subr.bf16.mxu0 0
        %2133 = vmatpush1.bf16.msra.mxu0 0
        %2134 = vmatprep.subr.bf16.mxu0 0
        %2135 = vmatpush1.bf16.msra.mxu0 0
        %2136 = vmatprep.subr.bf16.mxu0 0
        %2137 = vmatpush1.bf16.msra.mxu0 0
        %2138 = vmatprep.subr.bf16.mxu0 0
        %2139 = vmatpush1.bf16.msra.mxu0 0
        %2140 = vmatprep.subr.bf16.mxu0 0
        %2141 = vmatpush1.bf16.msra.mxu0 0
        %2142 = vmatprep.mubr.bf16.mxu0 0
        %2143 = vmatmul.mubr.bf16.gmra.mrb[0].mxu0 %v1792
        %v2144 = vpop.f32.mrb[0].mxu0
        %v2145 = vadd.f32 %v2022, %v2144
        %v2146 = vpop.f32.mrb[0].mxu0
        %v2147 = vadd.f32 %v2024, %v2146
        %v2148 = vpop.f32.mrb[0].mxu0
        %v2149 = vadd.f32 %v2026, %v2148
        %v2150 = vpop.f32.mrb[0].mxu0
        %v2151 = vadd.f32 %v2028, %v2150
        %2152 = vdwg.mxu0
        %v2153 = vpack.c.bf16 %v1438, %v1434
        %v2154 = vpack.c.bf16 %v1524, %v1520
        %v2155 = vpack.c.bf16 %v1610, %v1606
        %2156 = vmatprep.subr.bf16.mxu0 0
        %2157 = vmatpush1.bf16.xpose.msra.mxu0 %v2154
        %2158 = vmatprep.subr.bf16.mxu0 0
        %2159 = vmatpush1.bf16.xpose.msra.mxu0 0
        %2160 = vmatprep.subr.bf16.mxu0 0
        %2161 = vmatpush1.bf16.xpose.msra.mxu0 0
        %2162 = vmatprep.subr.bf16.mxu0 0
        %2163 = vmatpush1.bf16.xpose.msra.mxu0 0
        %2164 = vmatprep.subr.bf16.mxu0 0
        %2165 = vmatpush1.bf16.xpose.msra.mxu0 0
        %2166 = vmatprep.subr.bf16.mxu0 0
        %2167 = vmatpush1.bf16.xpose.msra.mxu0 0
        %2168 = vmatprep.subr.bf16.mxu0 0
        %2169 = vmatpush1.bf16.xpose.msra.mxu0 0
        %2170 = vmatprep.subr.bf16.mxu0 0
        %2171 = vmatpush1.bf16.xpose.msra.mxu0 0
        %2172 = vmatprep.subr.bf16.mxu0 0
        %2173 = vmatpush1.bf16.xpose.msra.mxu0 0
        %2174 = vmatprep.subr.bf16.mxu0 0
        %2175 = vmatpush1.bf16.xpose.msra.mxu0 0
        %2176 = vmatprep.subr.bf16.mxu0 0
        %2177 = vmatpush1.bf16.xpose.msra.mxu0 0
        %2178 = vmatprep.subr.bf16.mxu0 0
        %2179 = vmatpush1.bf16.xpose.msra.mxu0 0
        %2180 = vmatprep.subr.bf16.mxu0 0
        %2181 = vmatpush1.bf16.xpose.msra.mxu0 0
        %2182 = vmatprep.subr.bf16.mxu0 0
        %2183 = vmatpush1.bf16.xpose.msra.mxu0 0
        %2184 = vmatprep.subr.bf16.mxu0 0
        %2185 = vmatpush1.bf16.xpose.msra.mxu0 0
        %2186 = vmatprep.subr.bf16.mxu0 0
        %2187 = vmatpush1.bf16.xpose.msra.mxu0 0
        %2188 = vmatprep.mubr.bf16.mxu0 0
        %2189 = vmatmul.mubr.bf16.gmra.mrb[0].mxu0 %v2153
        %v2190 = vpop.f32.mrb[0].mxu0
        %v2191 = vadd.f32 0.0, %v2190
        %v2192 = vpop.f32.mrb[0].mxu0
        %v2193 = vpop.f32.mrb[0].mxu0
        %v2194 = vadd.f32 0.0, %v2193
        %v2195 = vpop.f32.mrb[0].mxu0
        %2196 = vdwg.mxu0
        %v2197 = vmul.f32 %v2191, 0.14433756
        %v2198 = vmul.f32 %v2194, 0.14433756
        %v2199 = vsel %vm1724, %v2197, -inf
        %2200 = vmax.xlane.f32.xlu0 %v2199
        %v2201 = vpop.xlane.xlu0 %2200
        %v2202 = vsel %vm1724, %v2198, -inf
        %2203 = vmax.xlane.f32.xlu0 %v2202
        %v2204 = vpop.xlane.xlu0 %2203
        %v2205 = vsub.f32 %v2197, %v2201
        %v2206 = vsub.f32 %v2198, %v2204
        %v2207 = vmul.f32 %v2205, 1.442695
        %v2208 = vpow.pop %v2207
        %v2209 = vmul.f32 %v2206, 1.442695
        %v2210 = vpow.pop %v2209
        %v2211 = vsel %vm1724, %v2208, 0.0
        %2212 = vadd.xlane.f32.xlu0 %v2211
        %v2213 = vpop.xlane.xlu0 %2212
        %v2214 = vsel %vm1724, %v2210, 0.0
        %2215 = vadd.xlane.f32.xlu0 %v2214
        %v2216 = vpop.xlane.xlu0 %2215
        %v2217 = vrcp.pop %v2213
        %v2218 = vrcp.pop %v2216
        %v2219 = vmul.f32 %v2208, %v2217
        %v2220 = vmul.f32 %v2210, %v2218
        %v2221 = vpack.c.bf16 %v2220, %v2219
        %v2223 = vsel %vm1724, %v2221, 0
        %2225 = vmatprep.subr.bf16.mxu0 0
        %2226 = vmatpush1.bf16.msra.mxu0 %v2155
        %2227 = vmatprep.subr.bf16.mxu0 0
        %2228 = vmatpush1.bf16.msra.mxu0 0
        %2229 = vmatprep.subr.bf16.mxu0 0
        %2230 = vmatpush1.bf16.msra.mxu0 0
        %2231 = vmatprep.subr.bf16.mxu0 0
        %2232 = vmatpush1.bf16.msra.mxu0 0
        %2233 = vmatprep.subr.bf16.mxu0 0
        %2234 = vmatpush1.bf16.msra.mxu0 0
        %2235 = vmatprep.subr.bf16.mxu0 0
        %2236 = vmatpush1.bf16.msra.mxu0 0
        %2237 = vmatprep.subr.bf16.mxu0 0
        %2238 = vmatpush1.bf16.msra.mxu0 0
        %2239 = vmatprep.subr.bf16.mxu0 0
        %2240 = vmatpush1.bf16.msra.mxu0 0
        %2241 = vmatprep.subr.bf16.mxu0 0
        %2242 = vmatpush1.bf16.msra.mxu0 0
        %2243 = vmatprep.subr.bf16.mxu0 0
        %2244 = vmatpush1.bf16.msra.mxu0 0
        %2245 = vmatprep.subr.bf16.mxu0 0
        %2246 = vmatpush1.bf16.msra.mxu0 0
        %2247 = vmatprep.subr.bf16.mxu0 0
        %2248 = vmatpush1.bf16.msra.mxu0 0
        %2249 = vmatprep.subr.bf16.mxu0 0
        %2250 = vmatpush1.bf16.msra.mxu0 0
        %2251 = vmatprep.subr.bf16.mxu0 0
        %2252 = vmatpush1.bf16.msra.mxu0 0
        %2253 = vmatprep.subr.bf16.mxu0 0
        %2254 = vmatpush1.bf16.msra.mxu0 0
        %2255 = vmatprep.subr.bf16.mxu0 0
        %2256 = vmatpush1.bf16.msra.mxu0 0
        %2257 = vmatprep.mubr.bf16.mxu0 0
        %2258 = vmatmul.mubr.bf16.gmra.mrb[0].mxu0 %v2223
        %v2259 = vpop.f32.mrb[0].mxu0
        %v2260 = vadd.f32 0.0, %v2259
        %v2261 = vpop.f32.mrb[0].mxu0
        %v2262 = vpop.f32.mrb[0].mxu0
        %v2263 = vadd.f32 0.0, %v2262
        %v2264 = vpop.f32.mrb[0].mxu0
        %2265 = vdwg.mxu0
        %v2266 = vpack.c.bf16 %v2263, %v2260
        %v2283 = vunpack.c.l.b16 %v1646
        %v2284 = vunpack.c.h.b16 %v1646
        %v2285 = vunpack.c.l.b16 %v1647
        %v2286 = vunpack.c.h.b16 %v1647
        %v2287 = vunpack.c.l.b16 %v1648
        %v2288 = vunpack.c.h.b16 %v1648
        %v2289 = vunpack.c.l.b16 %v1649
        %v2290 = vunpack.c.h.b16 %v1649
        %v2291 = vunpack.c.l.b16 %v1650
        %v2292 = vunpack.c.h.b16 %v1650
        %v2293 = vunpack.c.l.b16 %v1651
        %v2294 = vunpack.c.h.b16 %v1651
        %v2295 = vunpack.c.l.b16 %v1652
        %v2296 = vunpack.c.h.b16 %v1652
        %v2297 = vunpack.c.l.b16 %v1653
        %v2298 = vunpack.c.h.b16 %v1653
        %v2299 = vunpack.c.l.b16 %v1654
        %v2300 = vunpack.c.h.b16 %v1654
        %v2301 = vunpack.c.l.b16 %v1655
        %v2302 = vunpack.c.h.b16 %v1655
        %v2303 = vunpack.c.l.b16 %v1656
        %v2304 = vunpack.c.h.b16 %v1656
        %v2305 = vunpack.c.l.b16 %v1657
        %v2306 = vunpack.c.h.b16 %v1657
        %v2307 = vunpack.c.l.b16 %v1658
        %v2308 = vunpack.c.h.b16 %v1658
        %v2309 = vunpack.c.l.b16 %v1659
        %v2310 = vunpack.c.h.b16 %v1659
        %v2311 = vunpack.c.l.b16 %v1660
        %v2312 = vunpack.c.h.b16 %v1660
        %v2313 = vunpack.c.l.b16 %v1661
        %v2314 = vunpack.c.h.b16 %v1661
        %v2315 = vpack.c.b16 %v2285, %v2283
        %v2316 = vpack.c.b16 %v2286, %v2284
        %v2317 = vpack.c.b16 %v2289, %v2287
        %v2318 = vpack.c.b16 %v2290, %v2288
        %v2319 = vpack.c.b16 %v2293, %v2291
        %v2320 = vpack.c.b16 %v2294, %v2292
        %v2321 = vpack.c.b16 %v2297, %v2295
        %v2322 = vpack.c.b16 %v2298, %v2296
        %v2323 = vpack.c.b16 %v2301, %v2299
        %v2324 = vpack.c.b16 %v2302, %v2300
        %v2325 = vpack.c.b16 %v2305, %v2303
        %v2326 = vpack.c.b16 %v2306, %v2304
        %v2327 = vpack.c.b16 %v2309, %v2307
        %v2328 = vpack.c.b16 %v2310, %v2308
        %v2329 = vpack.c.b16 %v2313, %v2311
        %v2330 = vpack.c.b16 %v2314, %v2312
        %2347 = vmatprep.subr.bf16.mxu0 %v2316
        %2348 = vmatpush1.bf16.msra.mxu0 %v2315
        %2349 = vmatprep.subr.bf16.mxu0 %v2318
        %2350 = vmatpush1.bf16.msra.mxu0 %v2317
        %2351 = vmatprep.subr.bf16.mxu0 %v2320
        %2352 = vmatpush1.bf16.msra.mxu0 %v2319
        %2353 = vmatprep.subr.bf16.mxu0 %v2322
        %2354 = vmatpush1.bf16.msra.mxu0 %v2321
        %2355 = vmatprep.subr.bf16.mxu0 %v2324
        %2356 = vmatpush1.bf16.msra.mxu0 %v2323
        %2357 = vmatprep.subr.bf16.mxu0 %v2326
        %2358 = vmatpush1.bf16.msra.mxu0 %v2325
        %2359 = vmatprep.subr.bf16.mxu0 %v2328
        %2360 = vmatpush1.bf16.msra.mxu0 %v2327
        %2361 = vmatprep.subr.bf16.mxu0 %v2330
        %2362 = vmatpush1.bf16.msra.mxu0 %v2329
        %2363 = vmatprep.subr.bf16.mxu0 0
        %2364 = vmatpush1.bf16.msra.mxu0 0
        %2365 = vmatprep.subr.bf16.mxu0 0
        %2366 = vmatpush1.bf16.msra.mxu0 0
        %2367 = vmatprep.subr.bf16.mxu0 0
        %2368 = vmatpush1.bf16.msra.mxu0 0
        %2369 = vmatprep.subr.bf16.mxu0 0
        %2370 = vmatpush1.bf16.msra.mxu0 0
        %2371 = vmatprep.subr.bf16.mxu0 0
        %2372 = vmatpush1.bf16.msra.mxu0 0
        %2373 = vmatprep.subr.bf16.mxu0 0
        %2374 = vmatpush1.bf16.msra.mxu0 0
        %2375 = vmatprep.subr.bf16.mxu0 0
        %2376 = vmatpush1.bf16.msra.mxu0 0
        %2377 = vmatprep.subr.bf16.mxu0 0
        %2378 = vmatpush1.bf16.msra.mxu0 0
        %2379 = vmatprep.mubr.bf16.mxu0 0
        %2380 = vmatmul.mubr.bf16.gmra.mrb[0].mxu0 %v2266
        %v2381 = vpop.f32.mrb[0].mxu0
        %v2382 = vadd.f32 0.0, %v2381
        %v2383 = vpop.f32.mrb[0].mxu0
        %v2384 = vadd.f32 0.0, %v2383
        %v2385 = vpop.f32.mrb[0].mxu0
        %v2386 = vadd.f32 0.0, %v2385
        %v2387 = vpop.f32.mrb[0].mxu0
        %v2388 = vadd.f32 0.0, %v2387
        %2389 = vdwg.mxu0
        %v2390 = vadd.f32 %v2145, %v2382
        %v2391 = vadd.f32 %v2147, %v2384
        %v2392 = vadd.f32 %v2149, %v2386
        %v2393 = vadd.f32 %v2151, %v2388
        %v2394 = vpack.c.bf16 %v1440, %v1436
        %v2395 = vpack.c.bf16 %v1526, %v1522
        %v2396 = vpack.c.bf16 %v1612, %v1608
        %2397 = vmatprep.subr.bf16.mxu0 0
        %2398 = vmatpush1.bf16.xpose.msra.mxu0 %v2395
        %2399 = vmatprep.subr.bf16.mxu0 0
        %2400 = vmatpush1.bf16.xpose.msra.mxu0 0
        %2401 = vmatprep.subr.bf16.mxu0 0
        %2402 = vmatpush1.bf16.xpose.msra.mxu0 0
        %2403 = vmatprep.subr.bf16.mxu0 0
        %2404 = vmatpush1.bf16.xpose.msra.mxu0 0
        %2405 = vmatprep.subr.bf16.mxu0 0
        %2406 = vmatpush1.bf16.xpose.msra.mxu0 0
        %2407 = vmatprep.subr.bf16.mxu0 0
        %2408 = vmatpush1.bf16.xpose.msra.mxu0 0
        %2409 = vmatprep.subr.bf16.mxu0 0
        %2410 = vmatpush1.bf16.xpose.msra.mxu0 0
        %2411 = vmatprep.subr.bf16.mxu0 0
        %2412 = vmatpush1.bf16.xpose.msra.mxu0 0
        %2413 = vmatprep.subr.bf16.mxu0 0
        %2414 = vmatpush1.bf16.xpose.msra.mxu0 0
        %2415 = vmatprep.subr.bf16.mxu0 0
        %2416 = vmatpush1.bf16.xpose.msra.mxu0 0
        %2417 = vmatprep.subr.bf16.mxu0 0
        %2418 = vmatpush1.bf16.xpose.msra.mxu0 0
        %2419 = vmatprep.subr.bf16.mxu0 0
        %2420 = vmatpush1.bf16.xpose.msra.mxu0 0
        %2421 = vmatprep.subr.bf16.mxu0 0
        %2422 = vmatpush1.bf16.xpose.msra.mxu0 0
        %2423 = vmatprep.subr.bf16.mxu0 0
        %2424 = vmatpush1.bf16.xpose.msra.mxu0 0
        %2425 = vmatprep.subr.bf16.mxu0 0
        %2426 = vmatpush1.bf16.xpose.msra.mxu0 0
        %2427 = vmatprep.subr.bf16.mxu0 0
        %2428 = vmatpush1.bf16.xpose.msra.mxu0 0
        %2429 = vmatprep.mubr.bf16.mxu0 0
        %2430 = vmatmul.mubr.bf16.gmra.mrb[0].mxu0 %v2394
        %v2431 = vpop.f32.mrb[0].mxu0
        %v2432 = vadd.f32 0.0, %v2431
        %v2433 = vpop.f32.mrb[0].mxu0
        %v2434 = vpop.f32.mrb[0].mxu0
        %v2435 = vadd.f32 0.0, %v2434
        %v2436 = vpop.f32.mrb[0].mxu0
        %2437 = vdwg.mxu0
        %v2438 = vmul.f32 %v2432, 0.14433756
        %v2439 = vmul.f32 %v2435, 0.14433756
        %v2440 = vsel %vm1724, %v2438, -inf
        %2441 = vmax.xlane.f32.xlu0 %v2440
        %v2442 = vpop.xlane.xlu0 %2441
        %v2443 = vsel %vm1724, %v2439, -inf
        %2444 = vmax.xlane.f32.xlu0 %v2443
        %v2445 = vpop.xlane.xlu0 %2444
        %v2446 = vsub.f32 %v2438, %v2442
        %v2447 = vsub.f32 %v2439, %v2445
        %v2448 = vmul.f32 %v2446, 1.442695
        %v2449 = vpow.pop %v2448
        %v2450 = vmul.f32 %v2447, 1.442695
        %v2451 = vpow.pop %v2450
        %v2452 = vsel %vm1724, %v2449, 0.0
        %2453 = vadd.xlane.f32.xlu0 %v2452
        %v2454 = vpop.xlane.xlu0 %2453
        %v2455 = vsel %vm1724, %v2451, 0.0
        %2456 = vadd.xlane.f32.xlu0 %v2455
        %v2457 = vpop.xlane.xlu0 %2456
        %v2458 = vrcp.pop %v2454
        %v2459 = vrcp.pop %v2457
        %v2460 = vmul.f32 %v2449, %v2458
        %v2461 = vmul.f32 %v2451, %v2459
        %v2462 = vpack.c.bf16 %v2461, %v2460
        %v2464 = vsel %vm1724, %v2462, 0
        %2466 = vmatprep.subr.bf16.mxu0 0
        %2467 = vmatpush1.bf16.msra.mxu0 %v2396
        %2468 = vmatprep.subr.bf16.mxu0 0
        %2469 = vmatpush1.bf16.msra.mxu0 0
        %2470 = vmatprep.subr.bf16.mxu0 0
        %2471 = vmatpush1.bf16.msra.mxu0 0
        %2472 = vmatprep.subr.bf16.mxu0 0
        %2473 = vmatpush1.bf16.msra.mxu0 0
        %2474 = vmatprep.subr.bf16.mxu0 0
        %2475 = vmatpush1.bf16.msra.mxu0 0
        %2476 = vmatprep.subr.bf16.mxu0 0
        %2477 = vmatpush1.bf16.msra.mxu0 0
        %2478 = vmatprep.subr.bf16.mxu0 0
        %2479 = vmatpush1.bf16.msra.mxu0 0
        %2480 = vmatprep.subr.bf16.mxu0 0
        %2481 = vmatpush1.bf16.msra.mxu0 0
        %2482 = vmatprep.subr.bf16.mxu0 0
        %2483 = vmatpush1.bf16.msra.mxu0 0
        %2484 = vmatprep.subr.bf16.mxu0 0
        %2485 = vmatpush1.bf16.msra.mxu0 0
        %2486 = vmatprep.subr.bf16.mxu0 0
        %2487 = vmatpush1.bf16.msra.mxu0 0
        %2488 = vmatprep.subr.bf16.mxu0 0
        %2489 = vmatpush1.bf16.msra.mxu0 0
        %2490 = vmatprep.subr.bf16.mxu0 0
        %2491 = vmatpush1.bf16.msra.mxu0 0
        %2492 = vmatprep.subr.bf16.mxu0 0
        %2493 = vmatpush1.bf16.msra.mxu0 0
        %2494 = vmatprep.subr.bf16.mxu0 0
        %2495 = vmatpush1.bf16.msra.mxu0 0
        %2496 = vmatprep.subr.bf16.mxu0 0
        %2497 = vmatpush1.bf16.msra.mxu0 0
        %2498 = vmatprep.mubr.bf16.mxu0 0
        %2499 = vmatmul.mubr.bf16.gmra.mrb[0].mxu0 %v2464
        %v2500 = vpop.f32.mrb[0].mxu0
        %v2501 = vadd.f32 0.0, %v2500
        %v2502 = vpop.f32.mrb[0].mxu0
        %v2503 = vpop.f32.mrb[0].mxu0
        %v2504 = vadd.f32 0.0, %v2503
        %v2505 = vpop.f32.mrb[0].mxu0
        %2506 = vdwg.mxu0
        %v2507 = vpack.c.bf16 %v2504, %v2501
        %v2524 = vunpack.c.l.b16 %v1662
        %v2525 = vunpack.c.h.b16 %v1662
        %v2526 = vunpack.c.l.b16 %v1663
        %v2527 = vunpack.c.h.b16 %v1663
        %v2528 = vunpack.c.l.b16 %v1664
        %v2529 = vunpack.c.h.b16 %v1664
        %v2530 = vunpack.c.l.b16 %v1665
        %v2531 = vunpack.c.h.b16 %v1665
        %v2532 = vunpack.c.l.b16 %v1666
        %v2533 = vunpack.c.h.b16 %v1666
        %v2534 = vunpack.c.l.b16 %v1667
        %v2535 = vunpack.c.h.b16 %v1667
        %v2536 = vunpack.c.l.b16 %v1668
        %v2537 = vunpack.c.h.b16 %v1668
        %v2538 = vunpack.c.l.b16 %v1669
        %v2539 = vunpack.c.h.b16 %v1669
        %v2540 = vunpack.c.l.b16 %v1670
        %v2541 = vunpack.c.h.b16 %v1670
        %v2542 = vunpack.c.l.b16 %v1671
        %v2543 = vunpack.c.h.b16 %v1671
        %v2544 = vunpack.c.l.b16 %v1672
        %v2545 = vunpack.c.h.b16 %v1672
        %v2546 = vunpack.c.l.b16 %v1673
        %v2547 = vunpack.c.h.b16 %v1673
        %v2548 = vunpack.c.l.b16 %v1674
        %v2549 = vunpack.c.h.b16 %v1674
        %v2550 = vunpack.c.l.b16 %v1675
        %v2551 = vunpack.c.h.b16 %v1675
        %v2552 = vunpack.c.l.b16 %v1676
        %v2553 = vunpack.c.h.b16 %v1676
        %v2554 = vunpack.c.l.b16 %v1677
        %v2555 = vunpack.c.h.b16 %v1677
        %v2556 = vpack.c.b16 %v2526, %v2524
        %v2557 = vpack.c.b16 %v2527, %v2525
        %v2558 = vpack.c.b16 %v2530, %v2528
        %v2559 = vpack.c.b16 %v2531, %v2529
        %v2560 = vpack.c.b16 %v2534, %v2532
        %v2561 = vpack.c.b16 %v2535, %v2533
        %v2562 = vpack.c.b16 %v2538, %v2536
        %v2563 = vpack.c.b16 %v2539, %v2537
        %v2564 = vpack.c.b16 %v2542, %v2540
        %v2565 = vpack.c.b16 %v2543, %v2541
        %v2566 = vpack.c.b16 %v2546, %v2544
        %v2567 = vpack.c.b16 %v2547, %v2545
        %v2568 = vpack.c.b16 %v2550, %v2548
        %v2569 = vpack.c.b16 %v2551, %v2549
        %v2570 = vpack.c.b16 %v2554, %v2552
        %v2571 = vpack.c.b16 %v2555, %v2553
        %2588 = vmatprep.subr.bf16.mxu0 %v2557
        %2589 = vmatpush1.bf16.msra.mxu0 %v2556
        %2590 = vmatprep.subr.bf16.mxu0 %v2559
        %2591 = vmatpush1.bf16.msra.mxu0 %v2558
        %2592 = vmatprep.subr.bf16.mxu0 %v2561
        %2593 = vmatpush1.bf16.msra.mxu0 %v2560
        %2594 = vmatprep.subr.bf16.mxu0 %v2563
        %2595 = vmatpush1.bf16.msra.mxu0 %v2562
        %2596 = vmatprep.subr.bf16.mxu0 %v2565
        %2597 = vmatpush1.bf16.msra.mxu0 %v2564
        %2598 = vmatprep.subr.bf16.mxu0 %v2567
        %2599 = vmatpush1.bf16.msra.mxu0 %v2566
        %2600 = vmatprep.subr.bf16.mxu0 %v2569
        %2601 = vmatpush1.bf16.msra.mxu0 %v2568
        %2602 = vmatprep.subr.bf16.mxu0 %v2571
        %2603 = vmatpush1.bf16.msra.mxu0 %v2570
        %2604 = vmatprep.subr.bf16.mxu0 0
        %2605 = vmatpush1.bf16.msra.mxu0 0
        %2606 = vmatprep.subr.bf16.mxu0 0
        %2607 = vmatpush1.bf16.msra.mxu0 0
        %2608 = vmatprep.subr.bf16.mxu0 0
        %2609 = vmatpush1.bf16.msra.mxu0 0
        %2610 = vmatprep.subr.bf16.mxu0 0
        %2611 = vmatpush1.bf16.msra.mxu0 0
        %2612 = vmatprep.subr.bf16.mxu0 0
        %2613 = vmatpush1.bf16.msra.mxu0 0
        %2614 = vmatprep.subr.bf16.mxu0 0
        %2615 = vmatpush1.bf16.msra.mxu0 0
        %2616 = vmatprep.subr.bf16.mxu0 0
        %2617 = vmatpush1.bf16.msra.mxu0 0
        %2618 = vmatprep.subr.bf16.mxu0 0
        %2619 = vmatpush1.bf16.msra.mxu0 0
        %2620 = vmatprep.mubr.bf16.mxu0 0
        %2621 = vmatmul.mubr.bf16.gmra.mrb[0].mxu0 %v2507
        %v2622 = vpop.f32.mrb[0].mxu0
        %v2623 = vadd.f32 0.0, %v2622
        %v2624 = vpop.f32.mrb[0].mxu0
        %v2625 = vadd.f32 0.0, %v2624
        %v2626 = vpop.f32.mrb[0].mxu0
        %v2627 = vadd.f32 0.0, %v2626
        %v2628 = vpop.f32.mrb[0].mxu0
        %v2629 = vadd.f32 0.0, %v2628
        %2630 = vdwg.mxu0
        %v2631 = vadd.f32 %v2390, %v2623
        %v2632 = vadd.f32 %v2391, %v2625
        %v2633 = vadd.f32 %v2392, %v2627
        %v2634 = vadd.f32 %v2393, %v2629
        %v2635 = vld [vmem:[%s5] sm:$0x3]
        %v2637 = vlaneseq
        %v2638 = vshrl.u32 %v2637, 7
        %v2639 = vsub.s32 0, %v2638
        %v2640 = vrot.slane %v2635, %v2639
        %v2641 = vlaneseq
        %v2642 = vshrl.u32 %v2641, 7
        %v2643 = vsub.s32 1, %v2642
        %v2644 = vrot.slane %v2635, %v2643
        %v2647 = vadd.f32 %v2631, %v2640
        %v2648 = vadd.f32 %v2632, %v2644
        %v2649 = vadd.f32 %v2633, %v2640
        %v2650 = vadd.f32 %v2634, %v2644
        %v2651 = vadd.f32 %v413, %v2647
        %v2652 = vadd.f32 %v414, %v2648
        %v2653 = vadd.f32 %v415, %v2649
        %v2654 = vadd.f32 %v416, %v2650
        %v2655 = vld [vmem:[%s6] sm:$0x3]
        %v2656 = vld [vmem:[%s7] sm:$0x3]
        %v2657 = vsel %vm419, %v2652, 0.0
        %v2658 = vadd.f32 %v2651, %v2657
        %2659 = vadd.xlane.f32.xlu0 %v2658
        %v2660 = vpop.xlane.xlu0 %2659
        %v2661 = vsel %vm419, %v2654, 0.0
        %v2662 = vadd.f32 %v2653, %v2661
        %2663 = vadd.xlane.f32.xlu0 %v2662
        %v2664 = vpop.xlane.xlu0 %2663
        %v2665 = vmul.f32 %v2660, %v428
        %v2666 = vmul.f32 %v2664, %v428
        %v2667 = vsub.f32 %v2651, %v2665
        %v2668 = vsub.f32 %v2652, %v2665
        %v2669 = vsub.f32 %v2653, %v2666
        %v2670 = vsub.f32 %v2654, %v2666
        %v2671 = vmul.f32 %v2667, %v2667
        %v2672 = vmul.f32 %v2668, %v2668
        %v2673 = vmul.f32 %v2669, %v2669
        %v2674 = vmul.f32 %v2670, %v2670
        %v2675 = vsel %vm419, %v2672, 0.0
        %v2676 = vadd.f32 %v2671, %v2675
        %2677 = vadd.xlane.f32.xlu0 %v2676
        %v2678 = vpop.xlane.xlu0 %2677
        %v2679 = vsel %vm419, %v2674, 0.0
        %v2680 = vadd.f32 %v2673, %v2679
        %2681 = vadd.xlane.f32.xlu0 %v2680
        %v2682 = vpop.xlane.xlu0 %2681
        %v2683 = vmul.f32 %v2678, %v428
        %v2684 = vmul.f32 %v2682, %v428
        %v2685 = vadd.f32 %v2683, 1e-05
        %v2686 = vadd.f32 %v2684, 1e-05
        %v2687 = vrsqrt.pop %v2685
        %v2688 = vrsqrt.pop %v2686
        %v2689 = vmul.f32 %v2667, %v2687
        %v2690 = vmul.f32 %v2668, %v2687
        %v2691 = vmul.f32 %v2669, %v2688
        %v2692 = vmul.f32 %v2670, %v2688
        %v2694 = vlaneseq
        %v2695 = vshrl.u32 %v2694, 7
        %v2696 = vsub.s32 0, %v2695
        %v2697 = vrot.slane %v2655, %v2696
        %v2698 = vlaneseq
        %v2699 = vshrl.u32 %v2698, 7
        %v2700 = vsub.s32 1, %v2699
        %v2701 = vrot.slane %v2655, %v2700
        %v2704 = vmul.f32 %v2689, %v2697
        %v2705 = vmul.f32 %v2690, %v2701
        %v2706 = vmul.f32 %v2691, %v2697
        %v2707 = vmul.f32 %v2692, %v2701
        %v2709 = vlaneseq
        %v2710 = vshrl.u32 %v2709, 7
        %v2711 = vsub.s32 0, %v2710
        %v2712 = vrot.slane %v2656, %v2711
        %v2713 = vlaneseq
        %v2714 = vshrl.u32 %v2713, 7
        %v2715 = vsub.s32 1, %v2714
        %v2716 = vrot.slane %v2656, %v2715
        %v2719 = vadd.f32 %v2704, %v2712
        %v2720 = vadd.f32 %v2705, %v2716
        %v2721 = vadd.f32 %v2706, %v2712
        %v2722 = vadd.f32 %v2707, %v2716
        %v2723 = vpack.c.bf16 %v2721, %v2719
        %v2724 = vpack.c.bf16 %v2722, %v2720
        %v2725 = vld [vmem:[%s8] sm:$0xff]
        %v2726 = vld [vmem:[%s8 + $0x8] sm:$0xff]
        %v2727 = vld [vmem:[%s8 + $0x10] sm:$0xff]
        %v2728 = vld [vmem:[%s8 + $0x18] sm:$0xff]
        %v2729 = vld [vmem:[%s8 + $0x20] sm:$0xff]
        %v2730 = vld [vmem:[%s8 + $0x28] sm:$0xff]
        %v2731 = vld [vmem:[%s8 + $0x30] sm:$0xff]
        %v2732 = vld [vmem:[%s8 + $0x38] sm:$0xff]
        %v2733 = vld [vmem:[%s8 + $0x40] sm:$0xff]
        %v2734 = vld [vmem:[%s8 + $0x48] sm:$0xff]
        %v2735 = vld [vmem:[%s8 + $0x50] sm:$0xff]
        %v2736 = vld [vmem:[%s8 + $0x58] sm:$0xff]
        %v2737 = vld [vmem:[%s8 + $0x60] sm:$0xff]
        %v2738 = vld [vmem:[%s8 + $0x68] sm:$0xff]
        %v2739 = vld [vmem:[%s8 + $0x70] sm:$0xff]
        %v2740 = vld [vmem:[%s8 + $0x78] sm:$0xff]
        %v2741 = vld [vmem:[%s8 + $0x80] sm:$0xff]
        %v2742 = vld [vmem:[%s8 + $0x88] sm:$0xff]
        %v2743 = vld [vmem:[%s8 + $0x90] sm:$0xff]
        %v2744 = vld [vmem:[%s8 + $0x98] sm:$0xff]
        %v2745 = vld [vmem:[%s8 + $0xa0] sm:$0xff]
        %v2746 = vld [vmem:[%s8 + $0xa8] sm:$0xff]
        %v2747 = vld [vmem:[%s8 + $0xb0] sm:$0xff]
        %v2748 = vld [vmem:[%s8 + $0xb8] sm:$0xff]
        %v2749 = vld [vmem:[%s8 + $0xc0] sm:$0xff]
        %v2750 = vld [vmem:[%s8 + $0xc8] sm:$0xff]
        %v2751 = vld [vmem:[%s8 + $0xd0] sm:$0xff]
        %v2752 = vld [vmem:[%s8 + $0xd8] sm:$0xff]
        %v2753 = vld [vmem:[%s8 + $0xe0] sm:$0xff]
        %v2754 = vld [vmem:[%s8 + $0xe8] sm:$0xff]
        %v2755 = vld [vmem:[%s8 + $0xf0] sm:$0xff]
        %v2756 = vld [vmem:[%s8 + $0xf8] sm:$0xff]
        %v2757 = vld [vmem:[%s8 + $0x100] sm:$0xff]
        %v2758 = vld [vmem:[%s8 + $0x108] sm:$0xff]
        %v2759 = vld [vmem:[%s8 + $0x110] sm:$0xff]
        %v2760 = vld [vmem:[%s8 + $0x118] sm:$0xff]
        %v2761 = vld [vmem:[%s8 + $0x120] sm:$0xff]
        %v2762 = vld [vmem:[%s8 + $0x128] sm:$0xff]
        %v2763 = vld [vmem:[%s8 + $0x130] sm:$0xff]
        %v2764 = vld [vmem:[%s8 + $0x138] sm:$0xff]
        %v2765 = vld [vmem:[%s8 + $0x140] sm:$0xff]
        %v2766 = vld [vmem:[%s8 + $0x148] sm:$0xff]
        %v2767 = vld [vmem:[%s8 + $0x150] sm:$0xff]
        %v2768 = vld [vmem:[%s8 + $0x158] sm:$0xff]
        %v2769 = vld [vmem:[%s8 + $0x160] sm:$0xff]
        %v2770 = vld [vmem:[%s8 + $0x168] sm:$0xff]
        %v2771 = vld [vmem:[%s8 + $0x170] sm:$0xff]
        %v2772 = vld [vmem:[%s8 + $0x178] sm:$0xff]
        %v2773 = vld [vmem:[%s8 + $0x180] sm:$0xff]
        %v2774 = vld [vmem:[%s8 + $0x188] sm:$0xff]
        %v2775 = vld [vmem:[%s8 + $0x190] sm:$0xff]
        %v2776 = vld [vmem:[%s8 + $0x198] sm:$0xff]
        %v2777 = vld [vmem:[%s8 + $0x1a0] sm:$0xff]
        %v2778 = vld [vmem:[%s8 + $0x1a8] sm:$0xff]
        %v2779 = vld [vmem:[%s8 + $0x1b0] sm:$0xff]
        %v2780 = vld [vmem:[%s8 + $0x1b8] sm:$0xff]
        %v2781 = vld [vmem:[%s8 + $0x1c0] sm:$0xff]
        %v2782 = vld [vmem:[%s8 + $0x1c8] sm:$0xff]
        %v2783 = vld [vmem:[%s8 + $0x1d0] sm:$0xff]
        %v2784 = vld [vmem:[%s8 + $0x1d8] sm:$0xff]
        %v2785 = vld [vmem:[%s8 + $0x1e0] sm:$0xff]
        %v2786 = vld [vmem:[%s8 + $0x1e8] sm:$0xff]
        %v2787 = vld [vmem:[%s8 + $0x1f0] sm:$0xff]
        %v2788 = vld [vmem:[%s8 + $0x1f8] sm:$0xff]
        %v2789 = vld [vmem:[%s8 + $0x200] sm:$0xff]
        %v2790 = vld [vmem:[%s8 + $0x208] sm:$0xff]
        %v2791 = vld [vmem:[%s8 + $0x210] sm:$0xff]
        %v2792 = vld [vmem:[%s8 + $0x218] sm:$0xff]
        %v2793 = vld [vmem:[%s8 + $0x220] sm:$0xff]
        %v2794 = vld [vmem:[%s8 + $0x228] sm:$0xff]
        %v2795 = vld [vmem:[%s8 + $0x230] sm:$0xff]
        %v2796 = vld [vmem:[%s8 + $0x238] sm:$0xff]
        %v2797 = vld [vmem:[%s9] sm:$0x3f]
        %v2799 = vlaneseq
        %v2800 = vshrl.u32 %v2799, 7
        %v2801 = vsub.s32 0, %v2800
        %v2802 = vrot.slane %v2797, %v2801
        %v2803 = vlaneseq
        %v2804 = vshrl.u32 %v2803, 7
        %v2805 = vsub.s32 1, %v2804
        %v2806 = vrot.slane %v2797, %v2805
        %v2807 = vlaneseq
        %v2808 = vshrl.u32 %v2807, 7
        %v2809 = vsub.s32 2, %v2808
        %v2810 = vrot.slane %v2797, %v2809
        %v2811 = vlaneseq
        %v2812 = vshrl.u32 %v2811, 7
        %v2813 = vsub.s32 3, %v2812
        %v2814 = vrot.slane %v2797, %v2813
        %v2815 = vlaneseq
        %v2816 = vshrl.u32 %v2815, 7
        %v2817 = vsub.s32 4, %v2816
        %v2818 = vrot.slane %v2797, %v2817
        %v2819 = vlaneseq
        %v2820 = vshrl.u32 %v2819, 7
        %v2821 = vsub.s32 5, %v2820
        %v2822 = vrot.slane %v2797, %v2821
        %v2901 = vunpack.c.l.b16 %v2725
        %v2902 = vunpack.c.h.b16 %v2725
        %v2903 = vunpack.c.l.b16 %v2726
        %v2904 = vunpack.c.h.b16 %v2726
        %v2905 = vunpack.c.l.b16 %v2727
        %v2906 = vunpack.c.h.b16 %v2727
        %v2907 = vunpack.c.l.b16 %v2728
        %v2908 = vunpack.c.h.b16 %v2728
        %v2909 = vunpack.c.l.b16 %v2729
        %v2910 = vunpack.c.h.b16 %v2729
        %v2911 = vunpack.c.l.b16 %v2730
        %v2912 = vunpack.c.h.b16 %v2730
        %v2913 = vunpack.c.l.b16 %v2731
        %v2914 = vunpack.c.h.b16 %v2731
        %v2915 = vunpack.c.l.b16 %v2732
        %v2916 = vunpack.c.h.b16 %v2732
        %v2917 = vunpack.c.l.b16 %v2733
        %v2918 = vunpack.c.h.b16 %v2733
        %v2919 = vunpack.c.l.b16 %v2734
        %v2920 = vunpack.c.h.b16 %v2734
        %v2921 = vunpack.c.l.b16 %v2735
        %v2922 = vunpack.c.h.b16 %v2735
        %v2923 = vunpack.c.l.b16 %v2736
        %v2924 = vunpack.c.h.b16 %v2736
        %v2925 = vunpack.c.l.b16 %v2737
        %v2926 = vunpack.c.h.b16 %v2737
        %v2927 = vunpack.c.l.b16 %v2738
        %v2928 = vunpack.c.h.b16 %v2738
        %v2929 = vunpack.c.l.b16 %v2739
        %v2930 = vunpack.c.h.b16 %v2739
        %v2931 = vunpack.c.l.b16 %v2740
        %v2932 = vunpack.c.h.b16 %v2740
        %v2933 = vunpack.c.l.b16 %v2741
        %v2934 = vunpack.c.h.b16 %v2741
        %v2935 = vunpack.c.l.b16 %v2742
        %v2936 = vunpack.c.h.b16 %v2742
        %v2937 = vunpack.c.l.b16 %v2743
        %v2938 = vunpack.c.h.b16 %v2743
        %v2939 = vunpack.c.l.b16 %v2744
        %v2940 = vunpack.c.h.b16 %v2744
        %v2941 = vunpack.c.l.b16 %v2745
        %v2942 = vunpack.c.h.b16 %v2745
        %v2943 = vunpack.c.l.b16 %v2746
        %v2944 = vunpack.c.h.b16 %v2746
        %v2945 = vunpack.c.l.b16 %v2747
        %v2946 = vunpack.c.h.b16 %v2747
        %v2947 = vunpack.c.l.b16 %v2748
        %v2948 = vunpack.c.h.b16 %v2748
        %v2949 = vunpack.c.l.b16 %v2749
        %v2950 = vunpack.c.h.b16 %v2749
        %v2951 = vunpack.c.l.b16 %v2750
        %v2952 = vunpack.c.h.b16 %v2750
        %v2953 = vunpack.c.l.b16 %v2751
        %v2954 = vunpack.c.h.b16 %v2751
        %v2955 = vunpack.c.l.b16 %v2752
        %v2956 = vunpack.c.h.b16 %v2752
        %v2957 = vunpack.c.l.b16 %v2753
        %v2958 = vunpack.c.h.b16 %v2753
        %v2959 = vunpack.c.l.b16 %v2754
        %v2960 = vunpack.c.h.b16 %v2754
        %v2961 = vunpack.c.l.b16 %v2755
        %v2962 = vunpack.c.h.b16 %v2755
        %v2963 = vunpack.c.l.b16 %v2756
        %v2964 = vunpack.c.h.b16 %v2756
        %v2965 = vunpack.c.l.b16 %v2757
        %v2966 = vunpack.c.h.b16 %v2757
        %v2967 = vunpack.c.l.b16 %v2758
        %v2968 = vunpack.c.h.b16 %v2758
        %v2969 = vunpack.c.l.b16 %v2759
        %v2970 = vunpack.c.h.b16 %v2759
        %v2971 = vunpack.c.l.b16 %v2760
        %v2972 = vunpack.c.h.b16 %v2760
        %v2973 = vunpack.c.l.b16 %v2761
        %v2974 = vunpack.c.h.b16 %v2761
        %v2975 = vunpack.c.l.b16 %v2762
        %v2976 = vunpack.c.h.b16 %v2762
        %v2977 = vunpack.c.l.b16 %v2763
        %v2978 = vunpack.c.h.b16 %v2763
        %v2979 = vunpack.c.l.b16 %v2764
        %v2980 = vunpack.c.h.b16 %v2764
        %v2981 = vunpack.c.l.b16 %v2765
        %v2982 = vunpack.c.h.b16 %v2765
        %v2983 = vunpack.c.l.b16 %v2766
        %v2984 = vunpack.c.h.b16 %v2766
        %v2985 = vunpack.c.l.b16 %v2767
        %v2986 = vunpack.c.h.b16 %v2767
        %v2987 = vunpack.c.l.b16 %v2768
        %v2988 = vunpack.c.h.b16 %v2768
        %v2989 = vunpack.c.l.b16 %v2769
        %v2990 = vunpack.c.h.b16 %v2769
        %v2991 = vunpack.c.l.b16 %v2770
        %v2992 = vunpack.c.h.b16 %v2770
        %v2993 = vunpack.c.l.b16 %v2771
        %v2994 = vunpack.c.h.b16 %v2771
        %v2995 = vunpack.c.l.b16 %v2772
        %v2996 = vunpack.c.h.b16 %v2772
        %v2997 = vunpack.c.l.b16 %v2773
        %v2998 = vunpack.c.h.b16 %v2773
        %v2999 = vunpack.c.l.b16 %v2774
        %v3000 = vunpack.c.h.b16 %v2774
        %v3001 = vunpack.c.l.b16 %v2775
        %v3002 = vunpack.c.h.b16 %v2775
        %v3003 = vunpack.c.l.b16 %v2776
        %v3004 = vunpack.c.h.b16 %v2776
        %v3005 = vunpack.c.l.b16 %v2777
        %v3006 = vunpack.c.h.b16 %v2777
        %v3007 = vunpack.c.l.b16 %v2778
        %v3008 = vunpack.c.h.b16 %v2778
        %v3009 = vunpack.c.l.b16 %v2779
        %v3010 = vunpack.c.h.b16 %v2779
        %v3011 = vunpack.c.l.b16 %v2780
        %v3012 = vunpack.c.h.b16 %v2780
        %v3013 = vunpack.c.l.b16 %v2781
        %v3014 = vunpack.c.h.b16 %v2781
        %v3015 = vunpack.c.l.b16 %v2782
        %v3016 = vunpack.c.h.b16 %v2782
        %v3017 = vunpack.c.l.b16 %v2783
        %v3018 = vunpack.c.h.b16 %v2783
        %v3019 = vunpack.c.l.b16 %v2784
        %v3020 = vunpack.c.h.b16 %v2784
        %v3021 = vunpack.c.l.b16 %v2785
        %v3022 = vunpack.c.h.b16 %v2785
        %v3023 = vunpack.c.l.b16 %v2786
        %v3024 = vunpack.c.h.b16 %v2786
        %v3025 = vunpack.c.l.b16 %v2787
        %v3026 = vunpack.c.h.b16 %v2787
        %v3027 = vunpack.c.l.b16 %v2788
        %v3028 = vunpack.c.h.b16 %v2788
        %v3029 = vunpack.c.l.b16 %v2789
        %v3030 = vunpack.c.h.b16 %v2789
        %v3031 = vunpack.c.l.b16 %v2790
        %v3032 = vunpack.c.h.b16 %v2790
        %v3033 = vunpack.c.l.b16 %v2791
        %v3034 = vunpack.c.h.b16 %v2791
        %v3035 = vunpack.c.l.b16 %v2792
        %v3036 = vunpack.c.h.b16 %v2792
        %v3037 = vunpack.c.l.b16 %v2793
        %v3038 = vunpack.c.h.b16 %v2793
        %v3039 = vunpack.c.l.b16 %v2794
        %v3040 = vunpack.c.h.b16 %v2794
        %v3041 = vunpack.c.l.b16 %v2795
        %v3042 = vunpack.c.h.b16 %v2795
        %v3043 = vunpack.c.l.b16 %v2796
        %v3044 = vunpack.c.h.b16 %v2796
        %v3045 = vpack.c.b16 %v2907, %v2901
        %v3046 = vpack.c.b16 %v2908, %v2902
        %v3047 = vpack.c.b16 %v2909, %v2903
        %v3048 = vpack.c.b16 %v2910, %v2904
        %v3049 = vpack.c.b16 %v2911, %v2905
        %v3050 = vpack.c.b16 %v2912, %v2906
        %v3051 = vpack.c.b16 %v2919, %v2913
        %v3052 = vpack.c.b16 %v2920, %v2914
        %v3053 = vpack.c.b16 %v2921, %v2915
        %v3054 = vpack.c.b16 %v2922, %v2916
        %v3055 = vpack.c.b16 %v2923, %v2917
        %v3056 = vpack.c.b16 %v2924, %v2918
        %v3057 = vpack.c.b16 %v2931, %v2925
        %v3058 = vpack.c.b16 %v2932, %v2926
        %v3059 = vpack.c.b16 %v2933, %v2927
        %v3060 = vpack.c.b16 %v2934, %v2928
        %v3061 = vpack.c.b16 %v2935, %v2929
        %v3062 = vpack.c.b16 %v2936, %v2930
        %v3063 = vpack.c.b16 %v2943, %v2937
        %v3064 = vpack.c.b16 %v2944, %v2938
        %v3065 = vpack.c.b16 %v2945, %v2939
        %v3066 = vpack.c.b16 %v2946, %v2940
        %v3067 = vpack.c.b16 %v2947, %v2941
        %v3068 = vpack.c.b16 %v2948, %v2942
        %v3069 = vpack.c.b16 %v2955, %v2949
        %v3070 = vpack.c.b16 %v2956, %v2950
        %v3071 = vpack.c.b16 %v2957, %v2951
        %v3072 = vpack.c.b16 %v2958, %v2952
        %v3073 = vpack.c.b16 %v2959, %v2953
        %v3074 = vpack.c.b16 %v2960, %v2954
        %v3075 = vpack.c.b16 %v2967, %v2961
        %v3076 = vpack.c.b16 %v2968, %v2962
        %v3077 = vpack.c.b16 %v2969, %v2963
        %v3078 = vpack.c.b16 %v2970, %v2964
        %v3079 = vpack.c.b16 %v2971, %v2965
        %v3080 = vpack.c.b16 %v2972, %v2966
        %v3081 = vpack.c.b16 %v2979, %v2973
        %v3082 = vpack.c.b16 %v2980, %v2974
        %v3083 = vpack.c.b16 %v2981, %v2975
        %v3084 = vpack.c.b16 %v2982, %v2976
        %v3085 = vpack.c.b16 %v2983, %v2977
        %v3086 = vpack.c.b16 %v2984, %v2978
        %v3087 = vpack.c.b16 %v2991, %v2985
        %v3088 = vpack.c.b16 %v2992, %v2986
        %v3089 = vpack.c.b16 %v2993, %v2987
        %v3090 = vpack.c.b16 %v2994, %v2988
        %v3091 = vpack.c.b16 %v2995, %v2989
        %v3092 = vpack.c.b16 %v2996, %v2990
        %v3093 = vpack.c.b16 %v3003, %v2997
        %v3094 = vpack.c.b16 %v3004, %v2998
        %v3095 = vpack.c.b16 %v3005, %v2999
        %v3096 = vpack.c.b16 %v3006, %v3000
        %v3097 = vpack.c.b16 %v3007, %v3001
        %v3098 = vpack.c.b16 %v3008, %v3002
        %v3099 = vpack.c.b16 %v3015, %v3009
        %v3100 = vpack.c.b16 %v3016, %v3010
        %v3101 = vpack.c.b16 %v3017, %v3011
        %v3102 = vpack.c.b16 %v3018, %v3012
        %v3103 = vpack.c.b16 %v3019, %v3013
        %v3104 = vpack.c.b16 %v3020, %v3014
        %v3105 = vpack.c.b16 %v3027, %v3021
        %v3106 = vpack.c.b16 %v3028, %v3022
        %v3107 = vpack.c.b16 %v3029, %v3023
        %v3108 = vpack.c.b16 %v3030, %v3024
        %v3109 = vpack.c.b16 %v3031, %v3025
        %v3110 = vpack.c.b16 %v3032, %v3026
        %v3111 = vpack.c.b16 %v3039, %v3033
        %v3112 = vpack.c.b16 %v3040, %v3034
        %v3113 = vpack.c.b16 %v3041, %v3035
        %v3114 = vpack.c.b16 %v3042, %v3036
        %v3115 = vpack.c.b16 %v3043, %v3037
        %v3116 = vpack.c.b16 %v3044, %v3038
        %v3190 = vsel %vm419, %v2724, 0
        %3192 = vmatprep.subr.bf16.mxu0 %v3046
        %3193 = vmatpush1.bf16.msra.mxu0 %v3045
        %3194 = vmatprep.subr.bf16.mxu0 %v3052
        %3195 = vmatpush1.bf16.msra.mxu0 %v3051
        %3196 = vmatprep.subr.bf16.mxu0 %v3058
        %3197 = vmatpush1.bf16.msra.mxu0 %v3057
        %3198 = vmatprep.subr.bf16.mxu0 %v3064
        %3199 = vmatpush1.bf16.msra.mxu0 %v3063
        %3200 = vmatprep.subr.bf16.mxu0 %v3070
        %3201 = vmatpush1.bf16.msra.mxu0 %v3069
        %3202 = vmatprep.subr.bf16.mxu0 %v3076
        %3203 = vmatpush1.bf16.msra.mxu0 %v3075
        %3204 = vmatprep.subr.bf16.mxu0 %v3082
        %3205 = vmatpush1.bf16.msra.mxu0 %v3081
        %3206 = vmatprep.subr.bf16.mxu0 %v3088
        %3207 = vmatpush1.bf16.msra.mxu0 %v3087
        %3208 = vmatprep.subr.bf16.mxu0 %v3094
        %3209 = vmatpush1.bf16.msra.mxu0 %v3093
        %3210 = vmatprep.subr.bf16.mxu0 %v3100
        %3211 = vmatpush1.bf16.msra.mxu0 %v3099
        %3212 = vmatprep.subr.bf16.mxu0 %v3106
        %3213 = vmatpush1.bf16.msra.mxu0 %v3105
        %3214 = vmatprep.subr.bf16.mxu0 %v3112
        %3215 = vmatpush1.bf16.msra.mxu0 %v3111
        %3216 = vmatprep.subr.bf16.mxu0 0
        %3217 = vmatpush1.bf16.msra.mxu0 0
        %3218 = vmatprep.subr.bf16.mxu0 0
        %3219 = vmatpush1.bf16.msra.mxu0 0
        %3220 = vmatprep.subr.bf16.mxu0 0
        %3221 = vmatpush1.bf16.msra.mxu0 0
        %3222 = vmatprep.subr.bf16.mxu0 0
        %3223 = vmatpush1.bf16.msra.mxu0 0
        %3224 = vmatprep.mubr.bf16.mxu0 %v3190
        %3225 = vmatmul.mubr.bf16.gmra.mrb[0].mxu0 %v2723
        %v3226 = vpop.f32.mrb[0].mxu0
        %v3227 = vadd.f32 %v2802, %v3226
        %v3228 = vpop.f32.mrb[0].mxu0
        %v3229 = vadd.f32 %v2806, %v3228
        %v3230 = vpop.f32.mrb[0].mxu0
        %v3231 = vadd.f32 %v2802, %v3230
        %v3232 = vpop.f32.mrb[0].mxu0
        %v3233 = vadd.f32 %v2806, %v3232
        %3234 = vdwg.mxu0
        %3235 = vmatprep.subr.bf16.mxu0 %v3048
        %3236 = vmatpush1.bf16.msra.mxu0 %v3047
        %3237 = vmatprep.subr.bf16.mxu0 %v3054
        %3238 = vmatpush1.bf16.msra.mxu0 %v3053
        %3239 = vmatprep.subr.bf16.mxu0 %v3060
        %3240 = vmatpush1.bf16.msra.mxu0 %v3059
        %3241 = vmatprep.subr.bf16.mxu0 %v3066
        %3242 = vmatpush1.bf16.msra.mxu0 %v3065
        %3243 = vmatprep.subr.bf16.mxu0 %v3072
        %3244 = vmatpush1.bf16.msra.mxu0 %v3071
        %3245 = vmatprep.subr.bf16.mxu0 %v3078
        %3246 = vmatpush1.bf16.msra.mxu0 %v3077
        %3247 = vmatprep.subr.bf16.mxu0 %v3084
        %3248 = vmatpush1.bf16.msra.mxu0 %v3083
        %3249 = vmatprep.subr.bf16.mxu0 %v3090
        %3250 = vmatpush1.bf16.msra.mxu0 %v3089
        %3251 = vmatprep.subr.bf16.mxu0 %v3096
        %3252 = vmatpush1.bf16.msra.mxu0 %v3095
        %3253 = vmatprep.subr.bf16.mxu0 %v3102
        %3254 = vmatpush1.bf16.msra.mxu0 %v3101
        %3255 = vmatprep.subr.bf16.mxu0 %v3108
        %3256 = vmatpush1.bf16.msra.mxu0 %v3107
        %3257 = vmatprep.subr.bf16.mxu0 %v3114
        %3258 = vmatpush1.bf16.msra.mxu0 %v3113
        %3259 = vmatprep.subr.bf16.mxu0 0
        %3260 = vmatpush1.bf16.msra.mxu0 0
        %3261 = vmatprep.subr.bf16.mxu0 0
        %3262 = vmatpush1.bf16.msra.mxu0 0
        %3263 = vmatprep.subr.bf16.mxu0 0
        %3264 = vmatpush1.bf16.msra.mxu0 0
        %3265 = vmatprep.subr.bf16.mxu0 0
        %3266 = vmatpush1.bf16.msra.mxu0 0
        %3267 = vmatprep.mubr.bf16.mxu0 %v3190
        %3268 = vmatmul.mubr.bf16.gmra.mrb[0].mxu0 %v2723
        %v3269 = vpop.f32.mrb[0].mxu0
        %v3270 = vadd.f32 %v2810, %v3269
        %v3271 = vpop.f32.mrb[0].mxu0
        %v3272 = vadd.f32 %v2814, %v3271
        %v3273 = vpop.f32.mrb[0].mxu0
        %v3274 = vadd.f32 %v2810, %v3273
        %v3275 = vpop.f32.mrb[0].mxu0
        %v3276 = vadd.f32 %v2814, %v3275
        %3277 = vdwg.mxu0
        %3278 = vmatprep.subr.bf16.mxu0 %v3050
        %3279 = vmatpush1.bf16.msra.mxu0 %v3049
        %3280 = vmatprep.subr.bf16.mxu0 %v3056
        %3281 = vmatpush1.bf16.msra.mxu0 %v3055
        %3282 = vmatprep.subr.bf16.mxu0 %v3062
        %3283 = vmatpush1.bf16.msra.mxu0 %v3061
        %3284 = vmatprep.subr.bf16.mxu0 %v3068
        %3285 = vmatpush1.bf16.msra.mxu0 %v3067
        %3286 = vmatprep.subr.bf16.mxu0 %v3074
        %3287 = vmatpush1.bf16.msra.mxu0 %v3073
        %3288 = vmatprep.subr.bf16.mxu0 %v3080
        %3289 = vmatpush1.bf16.msra.mxu0 %v3079
        %3290 = vmatprep.subr.bf16.mxu0 %v3086
        %3291 = vmatpush1.bf16.msra.mxu0 %v3085
        %3292 = vmatprep.subr.bf16.mxu0 %v3092
        %3293 = vmatpush1.bf16.msra.mxu0 %v3091
        %3294 = vmatprep.subr.bf16.mxu0 %v3098
        %3295 = vmatpush1.bf16.msra.mxu0 %v3097
        %3296 = vmatprep.subr.bf16.mxu0 %v3104
        %3297 = vmatpush1.bf16.msra.mxu0 %v3103
        %3298 = vmatprep.subr.bf16.mxu0 %v3110
        %3299 = vmatpush1.bf16.msra.mxu0 %v3109
        %3300 = vmatprep.subr.bf16.mxu0 %v3116
        %3301 = vmatpush1.bf16.msra.mxu0 %v3115
        %3302 = vmatprep.subr.bf16.mxu0 0
        %3303 = vmatpush1.bf16.msra.mxu0 0
        %3304 = vmatprep.subr.bf16.mxu0 0
        %3305 = vmatpush1.bf16.msra.mxu0 0
        %3306 = vmatprep.subr.bf16.mxu0 0
        %3307 = vmatpush1.bf16.msra.mxu0 0
        %3308 = vmatprep.subr.bf16.mxu0 0
        %3309 = vmatpush1.bf16.msra.mxu0 0
        %3310 = vmatprep.mubr.bf16.mxu0 %v3190
        %3311 = vmatmul.mubr.bf16.gmra.mrb[0].mxu0 %v2723
        %v3312 = vpop.f32.mrb[0].mxu0
        %v3313 = vadd.f32 %v2818, %v3312
        %v3314 = vpop.f32.mrb[0].mxu0
        %v3315 = vadd.f32 %v2822, %v3314
        %v3316 = vpop.f32.mrb[0].mxu0
        %v3317 = vadd.f32 %v2818, %v3316
        %v3318 = vpop.f32.mrb[0].mxu0
        %v3319 = vadd.f32 %v2822, %v3318
        %3320 = vdwg.mxu0
        %v3321 = vmul.f32 %v3227, 0.5
        %v3322 = vmul.f32 %v3229, 0.5
        %v3323 = vmul.f32 %v3270, 0.5
        %v3324 = vmul.f32 %v3272, 0.5
        %v3325 = vmul.f32 %v3313, 0.5
        %v3326 = vmul.f32 %v3315, 0.5
        %v3327 = vmul.f32 %v3231, 0.5
        %v3328 = vmul.f32 %v3233, 0.5
        %v3329 = vmul.f32 %v3274, 0.5
        %v3330 = vmul.f32 %v3276, 0.5
        %v3331 = vmul.f32 %v3317, 0.5
        %v3332 = vmul.f32 %v3319, 0.5
        %v3333 = vmul.f32 %v3227, 0.70710677
        %v3334 = vmul.f32 %v3229, 0.70710677
        %v3335 = vmul.f32 %v3270, 0.70710677
        %v3336 = vmul.f32 %v3272, 0.70710677
        %v3337 = vmul.f32 %v3313, 0.70710677
        %v3338 = vmul.f32 %v3315, 0.70710677
        %v3339 = vmul.f32 %v3231, 0.70710677
        %v3340 = vmul.f32 %v3233, 0.70710677
        %v3341 = vmul.f32 %v3274, 0.70710677
        %v3342 = vmul.f32 %v3276, 0.70710677
        %v3343 = vmul.f32 %v3317, 0.70710677
        %v3344 = vmul.f32 %v3319, 0.70710677
        %v3345 = verf.f32.pop %v3333
        %v3346 = verf.f32.pop %v3334
        %v3347 = verf.f32.pop %v3335
        %v3348 = verf.f32.pop %v3336
        %v3349 = verf.f32.pop %v3337
        %v3350 = verf.f32.pop %v3338
        %v3351 = verf.f32.pop %v3339
        %v3352 = verf.f32.pop %v3340
        %v3353 = verf.f32.pop %v3341
        %v3354 = verf.f32.pop %v3342
        %v3355 = verf.f32.pop %v3343
        %v3356 = verf.f32.pop %v3344
        %v3357 = vadd.f32 %v3345, 1.0
        %v3358 = vadd.f32 %v3346, 1.0
        %v3359 = vadd.f32 %v3347, 1.0
        %v3360 = vadd.f32 %v3348, 1.0
        %v3361 = vadd.f32 %v3349, 1.0
        %v3362 = vadd.f32 %v3350, 1.0
        %v3363 = vadd.f32 %v3351, 1.0
        %v3364 = vadd.f32 %v3352, 1.0
        %v3365 = vadd.f32 %v3353, 1.0
        %v3366 = vadd.f32 %v3354, 1.0
        %v3367 = vadd.f32 %v3355, 1.0
        %v3368 = vadd.f32 %v3356, 1.0
        %v3369 = vmul.f32 %v3321, %v3357
        %v3370 = vmul.f32 %v3322, %v3358
        %v3371 = vmul.f32 %v3323, %v3359
        %v3372 = vmul.f32 %v3324, %v3360
        %v3373 = vmul.f32 %v3325, %v3361
        %v3374 = vmul.f32 %v3326, %v3362
        %v3375 = vmul.f32 %v3327, %v3363
        %v3376 = vmul.f32 %v3328, %v3364
        %v3377 = vmul.f32 %v3329, %v3365
        %v3378 = vmul.f32 %v3330, %v3366
        %v3379 = vmul.f32 %v3331, %v3367
        %v3380 = vmul.f32 %v3332, %v3368
        %v3381 = vpack.c.bf16 %v3375, %v3369
        %v3382 = vpack.c.bf16 %v3376, %v3370
        %v3383 = vpack.c.bf16 %v3377, %v3371
        %v3384 = vpack.c.bf16 %v3378, %v3372
        %v3385 = vpack.c.bf16 %v3379, %v3373
        %v3386 = vpack.c.bf16 %v3380, %v3374
        %v3387 = vld [vmem:[%s10] sm:$0xff]
        %v3388 = vld [vmem:[%s10 + $0x8] sm:$0xff]
        %v3389 = vld [vmem:[%s10 + $0x10] sm:$0xff]
        %v3390 = vld [vmem:[%s10 + $0x18] sm:$0xff]
        %v3391 = vld [vmem:[%s10 + $0x20] sm:$0xff]
        %v3392 = vld [vmem:[%s10 + $0x28] sm:$0xff]
        %v3393 = vld [vmem:[%s10 + $0x30] sm:$0xff]
        %v3394 = vld [vmem:[%s10 + $0x38] sm:$0xff]
        %v3395 = vld [vmem:[%s10 + $0x40] sm:$0xff]
        %v3396 = vld [vmem:[%s10 + $0x48] sm:$0xff]
        %v3397 = vld [vmem:[%s10 + $0x50] sm:$0xff]
        %v3398 = vld [vmem:[%s10 + $0x58] sm:$0xff]
        %v3399 = vld [vmem:[%s10 + $0x60] sm:$0xff]
        %v3400 = vld [vmem:[%s10 + $0x68] sm:$0xff]
        %v3401 = vld [vmem:[%s10 + $0x70] sm:$0xff]
        %v3402 = vld [vmem:[%s10 + $0x78] sm:$0xff]
        %v3403 = vld [vmem:[%s10 + $0x80] sm:$0xff]
        %v3404 = vld [vmem:[%s10 + $0x88] sm:$0xff]
        %v3405 = vld [vmem:[%s10 + $0x90] sm:$0xff]
        %v3406 = vld [vmem:[%s10 + $0x98] sm:$0xff]
        %v3407 = vld [vmem:[%s10 + $0xa0] sm:$0xff]
        %v3408 = vld [vmem:[%s10 + $0xa8] sm:$0xff]
        %v3409 = vld [vmem:[%s10 + $0xb0] sm:$0xff]
        %v3410 = vld [vmem:[%s10 + $0xb8] sm:$0xff]
        %v3411 = vld [vmem:[%s10 + $0xc0] sm:$0xff]
        %v3412 = vld [vmem:[%s10 + $0xc8] sm:$0xff]
        %v3413 = vld [vmem:[%s10 + $0xd0] sm:$0xff]
        %v3414 = vld [vmem:[%s10 + $0xd8] sm:$0xff]
        %v3415 = vld [vmem:[%s10 + $0xe0] sm:$0xff]
        %v3416 = vld [vmem:[%s10 + $0xe8] sm:$0xff]
        %v3417 = vld [vmem:[%s10 + $0xf0] sm:$0xff]
        %v3418 = vld [vmem:[%s10 + $0xf8] sm:$0xff]
        %v3419 = vld [vmem:[%s10 + $0x100] sm:$0xff]
        %v3420 = vld [vmem:[%s10 + $0x108] sm:$0xff]
        %v3421 = vld [vmem:[%s10 + $0x110] sm:$0xff]
        %v3422 = vld [vmem:[%s10 + $0x118] sm:$0xff]
        %v3423 = vld [vmem:[%s10 + $0x120] sm:$0xff]
        %v3424 = vld [vmem:[%s10 + $0x128] sm:$0xff]
        %v3425 = vld [vmem:[%s10 + $0x130] sm:$0xff]
        %v3426 = vld [vmem:[%s10 + $0x138] sm:$0xff]
        %v3427 = vld [vmem:[%s10 + $0x140] sm:$0xff]
        %v3428 = vld [vmem:[%s10 + $0x148] sm:$0xff]
        %v3429 = vld [vmem:[%s10 + $0x150] sm:$0xff]
        %v3430 = vld [vmem:[%s10 + $0x158] sm:$0xff]
        %v3431 = vld [vmem:[%s10 + $0x160] sm:$0xff]
        %v3432 = vld [vmem:[%s10 + $0x168] sm:$0xff]
        %v3433 = vld [vmem:[%s10 + $0x170] sm:$0xff]
        %v3434 = vld [vmem:[%s10 + $0x178] sm:$0xff]
        %v3435 = vld [vmem:[%s10 + $0x180] sm:$0xff]
        %v3436 = vld [vmem:[%s10 + $0x188] sm:$0xff]
        %v3437 = vld [vmem:[%s10 + $0x190] sm:$0xff]
        %v3438 = vld [vmem:[%s10 + $0x198] sm:$0xff]
        %v3439 = vld [vmem:[%s10 + $0x1a0] sm:$0xff]
        %v3440 = vld [vmem:[%s10 + $0x1a8] sm:$0xff]
        %v3441 = vld [vmem:[%s10 + $0x1b0] sm:$0xff]
        %v3442 = vld [vmem:[%s10 + $0x1b8] sm:$0xff]
        %v3443 = vld [vmem:[%s10 + $0x1c0] sm:$0xff]
        %v3444 = vld [vmem:[%s10 + $0x1c8] sm:$0xff]
        %v3445 = vld [vmem:[%s10 + $0x1d0] sm:$0xff]
        %v3446 = vld [vmem:[%s10 + $0x1d8] sm:$0xff]
        %v3447 = vld [vmem:[%s10 + $0x1e0] sm:$0xff]
        %v3448 = vld [vmem:[%s10 + $0x1e8] sm:$0xff]
        %v3449 = vld [vmem:[%s10 + $0x1f0] sm:$0xff]
        %v3450 = vld [vmem:[%s10 + $0x1f8] sm:$0xff]
        %v3451 = vld [vmem:[%s10 + $0x200] sm:$0xff]
        %v3452 = vld [vmem:[%s10 + $0x208] sm:$0xff]
        %v3453 = vld [vmem:[%s10 + $0x210] sm:$0xff]
        %v3454 = vld [vmem:[%s10 + $0x218] sm:$0xff]
        %v3455 = vld [vmem:[%s10 + $0x220] sm:$0xff]
        %v3456 = vld [vmem:[%s10 + $0x228] sm:$0xff]
        %v3457 = vld [vmem:[%s10 + $0x230] sm:$0xff]
        %v3458 = vld [vmem:[%s10 + $0x238] sm:$0xff]
        %v3459 = vld [vmem:[%s10 + $0x240] sm:$0xff]
        %v3460 = vld [vmem:[%s10 + $0x248] sm:$0xff]
        %v3461 = vld [vmem:[%s10 + $0x250] sm:$0xff]
        %v3462 = vld [vmem:[%s10 + $0x258] sm:$0xff]
        %v3463 = vld [vmem:[%s10 + $0x260] sm:$0xff]
        %v3464 = vld [vmem:[%s10 + $0x268] sm:$0xff]
        %v3465 = vld [vmem:[%s10 + $0x270] sm:$0xff]
        %v3466 = vld [vmem:[%s10 + $0x278] sm:$0xff]
        %v3467 = vld [vmem:[%s10 + $0x280] sm:$0xff]
        %v3468 = vld [vmem:[%s10 + $0x288] sm:$0xff]
        %v3469 = vld [vmem:[%s10 + $0x290] sm:$0xff]
        %v3470 = vld [vmem:[%s10 + $0x298] sm:$0xff]
        %v3471 = vld [vmem:[%s10 + $0x2a0] sm:$0xff]
        %v3472 = vld [vmem:[%s10 + $0x2a8] sm:$0xff]
        %v3473 = vld [vmem:[%s10 + $0x2b0] sm:$0xff]
        %v3474 = vld [vmem:[%s10 + $0x2b8] sm:$0xff]
        %v3475 = vld [vmem:[%s10 + $0x2c0] sm:$0xff]
        %v3476 = vld [vmem:[%s10 + $0x2c8] sm:$0xff]
        %v3477 = vld [vmem:[%s10 + $0x2d0] sm:$0xff]
        %v3478 = vld [vmem:[%s10 + $0x2d8] sm:$0xff]
        %v3479 = vld [vmem:[%s10 + $0x2e0] sm:$0xff]
        %v3480 = vld [vmem:[%s10 + $0x2e8] sm:$0xff]
        %v3481 = vld [vmem:[%s10 + $0x2f0] sm:$0xff]
        %v3482 = vld [vmem:[%s10 + $0x2f8] sm:$0xff]
        %v3483 = vld [vmem:[%s11] sm:$0x3]
        %v3485 = vlaneseq
        %v3486 = vshrl.u32 %v3485, 7
        %v3487 = vsub.s32 0, %v3486
        %v3488 = vrot.slane %v3483, %v3487
        %v3489 = vlaneseq
        %v3490 = vshrl.u32 %v3489, 7
        %v3491 = vsub.s32 1, %v3490
        %v3492 = vrot.slane %v3483, %v3491
        %v3591 = vunpack.c.l.b16 %v3387
        %v3592 = vunpack.c.h.b16 %v3387
        %v3593 = vunpack.c.l.b16 %v3388
        %v3594 = vunpack.c.h.b16 %v3388
        %v3595 = vunpack.c.l.b16 %v3389
        %v3596 = vunpack.c.h.b16 %v3389
        %v3597 = vunpack.c.l.b16 %v3390
        %v3598 = vunpack.c.h.b16 %v3390
        %v3599 = vunpack.c.l.b16 %v3391
        %v3600 = vunpack.c.h.b16 %v3391
        %v3601 = vunpack.c.l.b16 %v3392
        %v3602 = vunpack.c.h.b16 %v3392
        %v3603 = vunpack.c.l.b16 %v3393
        %v3604 = vunpack.c.h.b16 %v3393
        %v3605 = vunpack.c.l.b16 %v3394
        %v3606 = vunpack.c.h.b16 %v3394
        %v3607 = vunpack.c.l.b16 %v3395
        %v3608 = vunpack.c.h.b16 %v3395
        %v3609 = vunpack.c.l.b16 %v3396
        %v3610 = vunpack.c.h.b16 %v3396
        %v3611 = vunpack.c.l.b16 %v3397
        %v3612 = vunpack.c.h.b16 %v3397
        %v3613 = vunpack.c.l.b16 %v3398
        %v3614 = vunpack.c.h.b16 %v3398
        %v3615 = vunpack.c.l.b16 %v3399
        %v3616 = vunpack.c.h.b16 %v3399
        %v3617 = vunpack.c.l.b16 %v3400
        %v3618 = vunpack.c.h.b16 %v3400
        %v3619 = vunpack.c.l.b16 %v3401
        %v3620 = vunpack.c.h.b16 %v3401
        %v3621 = vunpack.c.l.b16 %v3402
        %v3622 = vunpack.c.h.b16 %v3402
        %v3623 = vunpack.c.l.b16 %v3403
        %v3624 = vunpack.c.h.b16 %v3403
        %v3625 = vunpack.c.l.b16 %v3404
        %v3626 = vunpack.c.h.b16 %v3404
        %v3627 = vunpack.c.l.b16 %v3405
        %v3628 = vunpack.c.h.b16 %v3405
        %v3629 = vunpack.c.l.b16 %v3406
        %v3630 = vunpack.c.h.b16 %v3406
        %v3631 = vunpack.c.l.b16 %v3407
        %v3632 = vunpack.c.h.b16 %v3407
        %v3633 = vunpack.c.l.b16 %v3408
        %v3634 = vunpack.c.h.b16 %v3408
        %v3635 = vunpack.c.l.b16 %v3409
        %v3636 = vunpack.c.h.b16 %v3409
        %v3637 = vunpack.c.l.b16 %v3410
        %v3638 = vunpack.c.h.b16 %v3410
        %v3639 = vunpack.c.l.b16 %v3411
        %v3640 = vunpack.c.h.b16 %v3411
        %v3641 = vunpack.c.l.b16 %v3412
        %v3642 = vunpack.c.h.b16 %v3412
        %v3643 = vunpack.c.l.b16 %v3413
        %v3644 = vunpack.c.h.b16 %v3413
        %v3645 = vunpack.c.l.b16 %v3414
        %v3646 = vunpack.c.h.b16 %v3414
        %v3647 = vunpack.c.l.b16 %v3415
        %v3648 = vunpack.c.h.b16 %v3415
        %v3649 = vunpack.c.l.b16 %v3416
        %v3650 = vunpack.c.h.b16 %v3416
        %v3651 = vunpack.c.l.b16 %v3417
        %v3652 = vunpack.c.h.b16 %v3417
        %v3653 = vunpack.c.l.b16 %v3418
        %v3654 = vunpack.c.h.b16 %v3418
        %v3655 = vunpack.c.l.b16 %v3419
        %v3656 = vunpack.c.h.b16 %v3419
        %v3657 = vunpack.c.l.b16 %v3420
        %v3658 = vunpack.c.h.b16 %v3420
        %v3659 = vunpack.c.l.b16 %v3421
        %v3660 = vunpack.c.h.b16 %v3421
        %v3661 = vunpack.c.l.b16 %v3422
        %v3662 = vunpack.c.h.b16 %v3422
        %v3663 = vunpack.c.l.b16 %v3423
        %v3664 = vunpack.c.h.b16 %v3423
        %v3665 = vunpack.c.l.b16 %v3424
        %v3666 = vunpack.c.h.b16 %v3424
        %v3667 = vunpack.c.l.b16 %v3425
        %v3668 = vunpack.c.h.b16 %v3425
        %v3669 = vunpack.c.l.b16 %v3426
        %v3670 = vunpack.c.h.b16 %v3426
        %v3671 = vunpack.c.l.b16 %v3427
        %v3672 = vunpack.c.h.b16 %v3427
        %v3673 = vunpack.c.l.b16 %v3428
        %v3674 = vunpack.c.h.b16 %v3428
        %v3675 = vunpack.c.l.b16 %v3429
        %v3676 = vunpack.c.h.b16 %v3429
        %v3677 = vunpack.c.l.b16 %v3430
        %v3678 = vunpack.c.h.b16 %v3430
        %v3679 = vunpack.c.l.b16 %v3431
        %v3680 = vunpack.c.h.b16 %v3431
        %v3681 = vunpack.c.l.b16 %v3432
        %v3682 = vunpack.c.h.b16 %v3432
        %v3683 = vunpack.c.l.b16 %v3433
        %v3684 = vunpack.c.h.b16 %v3433
        %v3685 = vunpack.c.l.b16 %v3434
        %v3686 = vunpack.c.h.b16 %v3434
        %v3687 = vunpack.c.l.b16 %v3435
        %v3688 = vunpack.c.h.b16 %v3435
        %v3689 = vunpack.c.l.b16 %v3436
        %v3690 = vunpack.c.h.b16 %v3436
        %v3691 = vunpack.c.l.b16 %v3437
        %v3692 = vunpack.c.h.b16 %v3437
        %v3693 = vunpack.c.l.b16 %v3438
        %v3694 = vunpack.c.h.b16 %v3438
        %v3695 = vunpack.c.l.b16 %v3439
        %v3696 = vunpack.c.h.b16 %v3439
        %v3697 = vunpack.c.l.b16 %v3440
        %v3698 = vunpack.c.h.b16 %v3440
        %v3699 = vunpack.c.l.b16 %v3441
        %v3700 = vunpack.c.h.b16 %v3441
        %v3701 = vunpack.c.l.b16 %v3442
        %v3702 = vunpack.c.h.b16 %v3442
        %v3703 = vunpack.c.l.b16 %v3443
        %v3704 = vunpack.c.h.b16 %v3443
        %v3705 = vunpack.c.l.b16 %v3444
        %v3706 = vunpack.c.h.b16 %v3444
        %v3707 = vunpack.c.l.b16 %v3445
        %v3708 = vunpack.c.h.b16 %v3445
        %v3709 = vunpack.c.l.b16 %v3446
        %v3710 = vunpack.c.h.b16 %v3446
        %v3711 = vunpack.c.l.b16 %v3447
        %v3712 = vunpack.c.h.b16 %v3447
        %v3713 = vunpack.c.l.b16 %v3448
        %v3714 = vunpack.c.h.b16 %v3448
        %v3715 = vunpack.c.l.b16 %v3449
        %v3716 = vunpack.c.h.b16 %v3449
        %v3717 = vunpack.c.l.b16 %v3450
        %v3718 = vunpack.c.h.b16 %v3450
        %v3719 = vunpack.c.l.b16 %v3451
        %v3720 = vunpack.c.h.b16 %v3451
        %v3721 = vunpack.c.l.b16 %v3452
        %v3722 = vunpack.c.h.b16 %v3452
        %v3723 = vunpack.c.l.b16 %v3453
        %v3724 = vunpack.c.h.b16 %v3453
        %v3725 = vunpack.c.l.b16 %v3454
        %v3726 = vunpack.c.h.b16 %v3454
        %v3727 = vunpack.c.l.b16 %v3455
        %v3728 = vunpack.c.h.b16 %v3455
        %v3729 = vunpack.c.l.b16 %v3456
        %v3730 = vunpack.c.h.b16 %v3456
        %v3731 = vunpack.c.l.b16 %v3457
        %v3732 = vunpack.c.h.b16 %v3457
        %v3733 = vunpack.c.l.b16 %v3458
        %v3734 = vunpack.c.h.b16 %v3458
        %v3735 = vunpack.c.l.b16 %v3459
        %v3736 = vunpack.c.h.b16 %v3459
        %v3737 = vunpack.c.l.b16 %v3460
        %v3738 = vunpack.c.h.b16 %v3460
        %v3739 = vunpack.c.l.b16 %v3461
        %v3740 = vunpack.c.h.b16 %v3461
        %v3741 = vunpack.c.l.b16 %v3462
        %v3742 = vunpack.c.h.b16 %v3462
        %v3743 = vunpack.c.l.b16 %v3463
        %v3744 = vunpack.c.h.b16 %v3463
        %v3745 = vunpack.c.l.b16 %v3464
        %v3746 = vunpack.c.h.b16 %v3464
        %v3747 = vunpack.c.l.b16 %v3465
        %v3748 = vunpack.c.h.b16 %v3465
        %v3749 = vunpack.c.l.b16 %v3466
        %v3750 = vunpack.c.h.b16 %v3466
        %v3751 = vunpack.c.l.b16 %v3467
        %v3752 = vunpack.c.h.b16 %v3467
        %v3753 = vunpack.c.l.b16 %v3468
        %v3754 = vunpack.c.h.b16 %v3468
        %v3755 = vunpack.c.l.b16 %v3469
        %v3756 = vunpack.c.h.b16 %v3469
        %v3757 = vunpack.c.l.b16 %v3470
        %v3758 = vunpack.c.h.b16 %v3470
        %v3759 = vunpack.c.l.b16 %v3471
        %v3760 = vunpack.c.h.b16 %v3471
        %v3761 = vunpack.c.l.b16 %v3472
        %v3762 = vunpack.c.h.b16 %v3472
        %v3763 = vunpack.c.l.b16 %v3473
        %v3764 = vunpack.c.h.b16 %v3473
        %v3765 = vunpack.c.l.b16 %v3474
        %v3766 = vunpack.c.h.b16 %v3474
        %v3767 = vunpack.c.l.b16 %v3475
        %v3768 = vunpack.c.h.b16 %v3475
        %v3769 = vunpack.c.l.b16 %v3476
        %v3770 = vunpack.c.h.b16 %v3476
        %v3771 = vunpack.c.l.b16 %v3477
        %v3772 = vunpack.c.h.b16 %v3477
        %v3773 = vunpack.c.l.b16 %v3478
        %v3774 = vunpack.c.h.b16 %v3478
        %v3775 = vunpack.c.l.b16 %v3479
        %v3776 = vunpack.c.h.b16 %v3479
        %v3777 = vunpack.c.l.b16 %v3480
        %v3778 = vunpack.c.h.b16 %v3480
        %v3779 = vunpack.c.l.b16 %v3481
        %v3780 = vunpack.c.h.b16 %v3481
        %v3781 = vunpack.c.l.b16 %v3482
        %v3782 = vunpack.c.h.b16 %v3482
        %v3783 = vpack.c.b16 %v3593, %v3591
        %v3784 = vpack.c.b16 %v3594, %v3592
        %v3785 = vpack.c.b16 %v3597, %v3595
        %v3786 = vpack.c.b16 %v3598, %v3596
        %v3787 = vpack.c.b16 %v3601, %v3599
        %v3788 = vpack.c.b16 %v3602, %v3600
        %v3789 = vpack.c.b16 %v3605, %v3603
        %v3790 = vpack.c.b16 %v3606, %v3604
        %v3791 = vpack.c.b16 %v3609, %v3607
        %v3792 = vpack.c.b16 %v3610, %v3608
        %v3793 = vpack.c.b16 %v3613, %v3611
        %v3794 = vpack.c.b16 %v3614, %v3612
        %v3795 = vpack.c.b16 %v3617, %v3615
        %v3796 = vpack.c.b16 %v3618, %v3616
        %v3797 = vpack.c.b16 %v3621, %v3619
        %v3798 = vpack.c.b16 %v3622, %v3620
        %v3799 = vpack.c.b16 %v3625, %v3623
        %v3800 = vpack.c.b16 %v3626, %v3624
        %v3801 = vpack.c.b16 %v3629, %v3627
        %v3802 = vpack.c.b16 %v3630, %v3628
        %v3803 = vpack.c.b16 %v3633, %v3631
        %v3804 = vpack.c.b16 %v3634, %v3632
        %v3805 = vpack.c.b16 %v3637, %v3635
        %v3806 = vpack.c.b16 %v3638, %v3636
        %v3807 = vpack.c.b16 %v3641, %v3639
        %v3808 = vpack.c.b16 %v3642, %v3640
        %v3809 = vpack.c.b16 %v3645, %v3643
        %v3810 = vpack.c.b16 %v3646, %v3644
        %v3811 = vpack.c.b16 %v3649, %v3647
        %v3812 = vpack.c.b16 %v3650, %v3648
        %v3813 = vpack.c.b16 %v3653, %v3651
        %v3814 = vpack.c.b16 %v3654, %v3652
        %v3815 = vpack.c.b16 %v3657, %v3655
        %v3816 = vpack.c.b16 %v3658, %v3656
        %v3817 = vpack.c.b16 %v3661, %v3659
        %v3818 = vpack.c.b16 %v3662, %v3660
        %v3819 = vpack.c.b16 %v3665, %v3663
        %v3820 = vpack.c.b16 %v3666, %v3664
        %v3821 = vpack.c.b16 %v3669, %v3667
        %v3822 = vpack.c.b16 %v3670, %v3668
        %v3823 = vpack.c.b16 %v3673, %v3671
        %v3824 = vpack.c.b16 %v3674, %v3672
        %v3825 = vpack.c.b16 %v3677, %v3675
        %v3826 = vpack.c.b16 %v3678, %v3676
        %v3827 = vpack.c.b16 %v3681, %v3679
        %v3828 = vpack.c.b16 %v3682, %v3680
        %v3829 = vpack.c.b16 %v3685, %v3683
        %v3830 = vpack.c.b16 %v3686, %v3684
        %v3831 = vpack.c.b16 %v3689, %v3687
        %v3832 = vpack.c.b16 %v3690, %v3688
        %v3833 = vpack.c.b16 %v3693, %v3691
        %v3834 = vpack.c.b16 %v3694, %v3692
        %v3835 = vpack.c.b16 %v3697, %v3695
        %v3836 = vpack.c.b16 %v3698, %v3696
        %v3837 = vpack.c.b16 %v3701, %v3699
        %v3838 = vpack.c.b16 %v3702, %v3700
        %v3839 = vpack.c.b16 %v3705, %v3703
        %v3840 = vpack.c.b16 %v3706, %v3704
        %v3841 = vpack.c.b16 %v3709, %v3707
        %v3842 = vpack.c.b16 %v3710, %v3708
        %v3843 = vpack.c.b16 %v3713, %v3711
        %v3844 = vpack.c.b16 %v3714, %v3712
        %v3845 = vpack.c.b16 %v3717, %v3715
        %v3846 = vpack.c.b16 %v3718, %v3716
        %v3847 = vpack.c.b16 %v3721, %v3719
        %v3848 = vpack.c.b16 %v3722, %v3720
        %v3849 = vpack.c.b16 %v3725, %v3723
        %v3850 = vpack.c.b16 %v3726, %v3724
        %v3851 = vpack.c.b16 %v3729, %v3727
        %v3852 = vpack.c.b16 %v3730, %v3728
        %v3853 = vpack.c.b16 %v3733, %v3731
        %v3854 = vpack.c.b16 %v3734, %v3732
        %v3855 = vpack.c.b16 %v3737, %v3735
        %v3856 = vpack.c.b16 %v3738, %v3736
        %v3857 = vpack.c.b16 %v3741, %v3739
        %v3858 = vpack.c.b16 %v3742, %v3740
        %v3859 = vpack.c.b16 %v3745, %v3743
        %v3860 = vpack.c.b16 %v3746, %v3744
        %v3861 = vpack.c.b16 %v3749, %v3747
        %v3862 = vpack.c.b16 %v3750, %v3748
        %v3863 = vpack.c.b16 %v3753, %v3751
        %v3864 = vpack.c.b16 %v3754, %v3752
        %v3865 = vpack.c.b16 %v3757, %v3755
        %v3866 = vpack.c.b16 %v3758, %v3756
        %v3867 = vpack.c.b16 %v3761, %v3759
        %v3868 = vpack.c.b16 %v3762, %v3760
        %v3869 = vpack.c.b16 %v3765, %v3763
        %v3870 = vpack.c.b16 %v3766, %v3764
        %v3871 = vpack.c.b16 %v3769, %v3767
        %v3872 = vpack.c.b16 %v3770, %v3768
        %v3873 = vpack.c.b16 %v3773, %v3771
        %v3874 = vpack.c.b16 %v3774, %v3772
        %v3875 = vpack.c.b16 %v3777, %v3775
        %v3876 = vpack.c.b16 %v3778, %v3776
        %v3877 = vpack.c.b16 %v3781, %v3779
        %v3878 = vpack.c.b16 %v3782, %v3780
        %3975 = vmatprep.subr.bf16.mxu0 %v3784
        %3976 = vmatpush1.bf16.msra.mxu0 %v3783
        %3977 = vmatprep.subr.bf16.mxu0 %v3786
        %3978 = vmatpush1.bf16.msra.mxu0 %v3785
        %3979 = vmatprep.subr.bf16.mxu0 %v3788
        %3980 = vmatpush1.bf16.msra.mxu0 %v3787
        %3981 = vmatprep.subr.bf16.mxu0 %v3790
        %3982 = vmatpush1.bf16.msra.mxu0 %v3789
        %3983 = vmatprep.subr.bf16.mxu0 %v3792
        %3984 = vmatpush1.bf16.msra.mxu0 %v3791
        %3985 = vmatprep.subr.bf16.mxu0 %v3794
        %3986 = vmatpush1.bf16.msra.mxu0 %v3793
        %3987 = vmatprep.subr.bf16.mxu0 %v3796
        %3988 = vmatpush1.bf16.msra.mxu0 %v3795
        %3989 = vmatprep.subr.bf16.mxu0 %v3798
        %3990 = vmatpush1.bf16.msra.mxu0 %v3797
        %3991 = vmatprep.subr.bf16.mxu0 %v3800
        %3992 = vmatpush1.bf16.msra.mxu0 %v3799
        %3993 = vmatprep.subr.bf16.mxu0 %v3802
        %3994 = vmatpush1.bf16.msra.mxu0 %v3801
        %3995 = vmatprep.subr.bf16.mxu0 %v3804
        %3996 = vmatpush1.bf16.msra.mxu0 %v3803
        %3997 = vmatprep.subr.bf16.mxu0 %v3806
        %3998 = vmatpush1.bf16.msra.mxu0 %v3805
        %3999 = vmatprep.subr.bf16.mxu0 %v3808
        %4000 = vmatpush1.bf16.msra.mxu0 %v3807
        %4001 = vmatprep.subr.bf16.mxu0 %v3810
        %4002 = vmatpush1.bf16.msra.mxu0 %v3809
        %4003 = vmatprep.subr.bf16.mxu0 %v3812
        %4004 = vmatpush1.bf16.msra.mxu0 %v3811
        %4005 = vmatprep.subr.bf16.mxu0 %v3814
        %4006 = vmatpush1.bf16.msra.mxu0 %v3813
        %4007 = vmatprep.mubr.bf16.mxu0 %v3382
        %4008 = vmatmul.mubr.bf16.gmra.mrb[0].mxu0 %v3381
        %v4009 = vpop.f32.mrb[0].mxu0
        %v4010 = vadd.f32 %v3488, %v4009
        %v4011 = vpop.f32.mrb[0].mxu0
        %v4012 = vadd.f32 %v3492, %v4011
        %v4013 = vpop.f32.mrb[0].mxu0
        %v4014 = vadd.f32 %v3488, %v4013
        %v4015 = vpop.f32.mrb[0].mxu0
        %v4016 = vadd.f32 %v3492, %v4015
        %4017 = vdwg.mxu0
        %4018 = vmatprep.subr.bf16.mxu0 %v3816
        %4019 = vmatpush1.bf16.msra.mxu0 %v3815
        %4020 = vmatprep.subr.bf16.mxu0 %v3818
        %4021 = vmatpush1.bf16.msra.mxu0 %v3817
        %4022 = vmatprep.subr.bf16.mxu0 %v3820
        %4023 = vmatpush1.bf16.msra.mxu0 %v3819
        %4024 = vmatprep.subr.bf16.mxu0 %v3822
        %4025 = vmatpush1.bf16.msra.mxu0 %v3821
        %4026 = vmatprep.subr.bf16.mxu0 %v3824
        %4027 = vmatpush1.bf16.msra.mxu0 %v3823
        %4028 = vmatprep.subr.bf16.mxu0 %v3826
        %4029 = vmatpush1.bf16.msra.mxu0 %v3825
        %4030 = vmatprep.subr.bf16.mxu0 %v3828
        %4031 = vmatpush1.bf16.msra.mxu0 %v3827
        %4032 = vmatprep.subr.bf16.mxu0 %v3830
        %4033 = vmatpush1.bf16.msra.mxu0 %v3829
        %4034 = vmatprep.subr.bf16.mxu0 %v3832
        %4035 = vmatpush1.bf16.msra.mxu0 %v3831
        %4036 = vmatprep.subr.bf16.mxu0 %v3834
        %4037 = vmatpush1.bf16.msra.mxu0 %v3833
        %4038 = vmatprep.subr.bf16.mxu0 %v3836
        %4039 = vmatpush1.bf16.msra.mxu0 %v3835
        %4040 = vmatprep.subr.bf16.mxu0 %v3838
        %4041 = vmatpush1.bf16.msra.mxu0 %v3837
        %4042 = vmatprep.subr.bf16.mxu0 %v3840
        %4043 = vmatpush1.bf16.msra.mxu0 %v3839
        %4044 = vmatprep.subr.bf16.mxu0 %v3842
        %4045 = vmatpush1.bf16.msra.mxu0 %v3841
        %4046 = vmatprep.subr.bf16.mxu0 %v3844
        %4047 = vmatpush1.bf16.msra.mxu0 %v3843
        %4048 = vmatprep.subr.bf16.mxu0 %v3846
        %4049 = vmatpush1.bf16.msra.mxu0 %v3845
        %4050 = vmatprep.mubr.bf16.mxu0 %v3384
        %4051 = vmatmul.mubr.bf16.gmra.mrb[0].mxu0 %v3383
        %v4052 = vpop.f32.mrb[0].mxu0
        %v4053 = vadd.f32 %v4010, %v4052
        %v4054 = vpop.f32.mrb[0].mxu0
        %v4055 = vadd.f32 %v4012, %v4054
        %v4056 = vpop.f32.mrb[0].mxu0
        %v4057 = vadd.f32 %v4014, %v4056
        %v4058 = vpop.f32.mrb[0].mxu0
        %v4059 = vadd.f32 %v4016, %v4058
        %4060 = vdwg.mxu0
        %4061 = vmatprep.subr.bf16.mxu0 %v3848
        %4062 = vmatpush1.bf16.msra.mxu0 %v3847
        %4063 = vmatprep.subr.bf16.mxu0 %v3850
        %4064 = vmatpush1.bf16.msra.mxu0 %v3849
        %4065 = vmatprep.subr.bf16.mxu0 %v3852
        %4066 = vmatpush1.bf16.msra.mxu0 %v3851
        %4067 = vmatprep.subr.bf16.mxu0 %v3854
        %4068 = vmatpush1.bf16.msra.mxu0 %v3853
        %4069 = vmatprep.subr.bf16.mxu0 %v3856
        %4070 = vmatpush1.bf16.msra.mxu0 %v3855
        %4071 = vmatprep.subr.bf16.mxu0 %v3858
        %4072 = vmatpush1.bf16.msra.mxu0 %v3857
        %4073 = vmatprep.subr.bf16.mxu0 %v3860
        %4074 = vmatpush1.bf16.msra.mxu0 %v3859
        %4075 = vmatprep.subr.bf16.mxu0 %v3862
        %4076 = vmatpush1.bf16.msra.mxu0 %v3861
        %4077 = vmatprep.subr.bf16.mxu0 %v3864
        %4078 = vmatpush1.bf16.msra.mxu0 %v3863
        %4079 = vmatprep.subr.bf16.mxu0 %v3866
        %4080 = vmatpush1.bf16.msra.mxu0 %v3865
        %4081 = vmatprep.subr.bf16.mxu0 %v3868
        %4082 = vmatpush1.bf16.msra.mxu0 %v3867
        %4083 = vmatprep.subr.bf16.mxu0 %v3870
        %4084 = vmatpush1.bf16.msra.mxu0 %v3869
        %4085 = vmatprep.subr.bf16.mxu0 %v3872
        %4086 = vmatpush1.bf16.msra.mxu0 %v3871
        %4087 = vmatprep.subr.bf16.mxu0 %v3874
        %4088 = vmatpush1.bf16.msra.mxu0 %v3873
        %4089 = vmatprep.subr.bf16.mxu0 %v3876
        %4090 = vmatpush1.bf16.msra.mxu0 %v3875
        %4091 = vmatprep.subr.bf16.mxu0 %v3878
        %4092 = vmatpush1.bf16.msra.mxu0 %v3877
        %4093 = vmatprep.mubr.bf16.mxu0 %v3386
        %4094 = vmatmul.mubr.bf16.gmra.mrb[0].mxu0 %v3385
        %v4095 = vpop.f32.mrb[0].mxu0
        %v4096 = vadd.f32 %v4053, %v4095
        %v4097 = vpop.f32.mrb[0].mxu0
        %v4098 = vadd.f32 %v4055, %v4097
        %v4099 = vpop.f32.mrb[0].mxu0
        %v4100 = vadd.f32 %v4057, %v4099
        %v4101 = vpop.f32.mrb[0].mxu0
        %v4102 = vadd.f32 %v4059, %v4101
        %4103 = vdwg.mxu0
        %v4104 = vadd.f32 %v2651, %v4096
        %v4105 = vadd.f32 %v2652, %v4098
        %v4106 = vadd.f32 %v2653, %v4100
        %v4107 = vadd.f32 %v2654, %v4102
        %4108 = vst [vmem:[%s406] sm:$0xff] %v4104
        %4109 = vst.msk [vmem:[%s406 + $0x8] sm:$0xff] %vm419, %v4105
        %4110 = vst [vmem:[%s406 + $0x10] sm:$0xff] %v4106
        %4111 = vst.msk [vmem:[%s406 + $0x18] sm:$0xff] %vm419, %v4107
        %s4112 = sand.u32 %s291, 1
        %s4113 = scalar_lea.sflag [#allocation3], %s4112
        %s4114 = sand.u32 %s291, 1
        %s4115 = smul.addr %s4114, 32
        %s4116 = scalar_lea.vmem [#allocation2], %s4115
        // Predicated region
        $region69: #{transformer_block_forward.1} parent=67 // pred_check
          %p4117 = pneg %p301
        $region70: #{transformer_block_forward.1} parent=67 // pred_check_branch
          %4119 = sbr.rel (%p4117) target = $region72
        $region71: #{transformer_block_forward.1} parent=67 // pred_region
          %s4121 = ssub.s32 512, 512
          %4122 = vsyncadd %s4113, %s4121
          %s4123 = smul.addr %s26, 4
          %s4124 = smul.addr %s4123, 128
          %s4125 = scalar_lea.hbm %s12, %s4124
          %s4126 = sshll.u32 %s4116, 4
          %s4127 = int_to_ptr.vmem [resolvable:$true] %s4126
          %4132 = dma.vmem_to_hbm [thread:$0]  %s4127, 512, %s4125, %s4113, 256, 256, 16
        $region72: #{transformer_block_forward.1} parent=67 // pred_fallthru
          _
      $region68: #{transformer_block_forward.1} parent=5 // pred_fallthru
        _
      %p4133 = scmp.le.s32.totalorder 2, %s21
      // Predicated region
      $region73: #{transformer_block_forward.1} parent=5 // pred_check
        %p4134 = pneg %p4133
      $region74: #{transformer_block_forward.1} parent=5 // pred_check_branch
        %4136 = sbr.rel (%p4134) target = $region76
      $region75: #{transformer_block_forward.1} parent=5 // pred_region
        %s4137 = ssub.s32 %s21, 2
        // Predicated region
        $region77: #{transformer_block_forward.1} parent=75 // pred_check
          %p4138 = pneg %p307
        $region78: #{transformer_block_forward.1} parent=75 // pred_check_branch
          %4140 = sbr.rel (%p4138) target = $region80
        $region79: #{transformer_block_forward.1} parent=75 // pred_region
          %s4141 = sand.u32 %s292, 1
          %s4142 = scalar_lea.sflag [#allocation3], %s4141
          %s4143 = sand.u32 %s292, 1
          %s4144 = smul.addr %s4143, 32
          %s4145 = scalar_lea.vmem [#allocation2], %s4144
          %4146 = dma.done %s4142, 512
        $region80: #{transformer_block_forward.1} parent=75 // pred_fallthru
          _
      $region76: #{transformer_block_forward.1} parent=5 // pred_fallthru
        _
    $region6: #{transformer_block_forward.1} parent=1 // loop_footer
      %s25 = sadd.s32 1, %s21
    $region7: #{transformer_block_forward.1} parent=1 // loop_footer_branch
      %20 = sbr.rel target = $region3
    $region8: #{transformer_block_forward.1} parent=1 // loop_exit
      _
    %4147 = vsyncpa [#allocation3], 1
    %s4148 = scalar_lea.sflag [#allocation3], 1
    %4149 = vsyncpa %s4148, 1

</llo_original>
